<compile_context>
chip_gen: v7x
topology: tpu7x:2x2x1
jax: 0.10.0
libtpu: 0.0.40
codegen_flags: <defaults>
</compile_context>

<pallas_src>
import functools

import jax
import jax.numpy as jnp
from jax import lax
from jax.experimental import pallas as pl
from jax.experimental.pallas import tpu as pltpu


# ------------------------------ kernel factory -------------------------------
def make_resnet_block_kernel(C, H, W, dilation, matmul_dtype):
    HW = H * W
    eps = 1e-5
    inv_hw = 1.0 / HW

    def reflect_pad_hw(t, p):
        """PyTorch ReflectionPad2d(p): (C, h, w) -> (C, h+2p, w+2p)."""
        if p == 0:
            return t
        h, w = t.shape[1], t.shape[2]
        top = [t[:, j:j + 1, :] for j in range(p, 0, -1)]           # rows p..1
        bot = [t[:, h - 2 - j:h - 1 - j, :] for j in range(p)]      # rows h-2..h-1-p
        t = jnp.concatenate(top + [t] + bot, axis=1)                # (C, h+2p, w)
        left = [t[:, :, j:j + 1] for j in range(p, 0, -1)]
        right = [t[:, :, w - 2 - j:w - 1 - j] for j in range(p)]
        return jnp.concatenate(left + [t] + right, axis=2)          # (C, h+2p, w+2p)

    def conv3x3(img, w_ref, dil):
        """img: (C, H, W); w_ref: (9, Cout, Cin) tap-major -> (Cout, HW) f32."""
        xp = reflect_pad_hw(img, dil)                               # (C, H+2dil, W+2dil)
        acc = jnp.zeros((C, HW), jnp.float32)
        for ky in range(3):
            for kx in range(3):
                tap = xp[:, ky * dil:ky * dil + H, kx * dil:kx * dil + W]
                tap2d = tap.reshape(C, HW).astype(matmul_dtype)     # (Cin, HW)
                w_tap = w_ref[ky * 3 + kx].astype(matmul_dtype)     # (Cout, Cin)
                acc = acc + jnp.dot(w_tap, tap2d,
                                    preferred_element_type=jnp.float32)
        return acc

    def instance_norm(a):
        """a: (C, HW) f32; per-channel stats over the spatial (lane) axis."""
        mu = jnp.sum(a, axis=1, keepdims=True) * inv_hw
        centered = a - mu
        var = jnp.sum(centered * centered, axis=1, keepdims=True) * inv_hw
        return centered * lax.rsqrt(var + eps)

    def kernel(x_ref, w1_ref, w2_ref, out_ref):
        # x_ref: (1, C, H, W); w*_ref: (9, C, C); out_ref: (1, C, H*W).
        x_img = x_ref[0]                                            # (C, H, W)

        # conv1: 3x3, dilation d, in-kernel reflection pad(d), no bias
        y = instance_norm(conv3x3(x_img, w1_ref, dilation))
        y = jnp.maximum(y, 0.0)                                     # ReLU

        # conv2: 3x3, dilation 1, in-kernel reflection pad(1), no bias
        z = instance_norm(conv3x3(y.reshape(C, H, W), w2_ref, 1))

        # residual add + lane-dense store
        out_ref[0] = (x_img.reshape(C, HW) + z).astype(out_ref.dtype)

    return kernel


# --------------------------------- wrapper -----------------------------------
def _vmem_limit_bytes():
    """~3/4 of physical VMEM: ~48 MiB on v7x (64 MiB), ~96 MiB on v5e/v6e."""
    try:
        cap = int(pltpu.get_tpu_info().vmem_capacity_bytes)
        return (cap * 3) // 4
    except Exception:
        return 48 * 1024 * 1024


@functools.partial(jax.jit, static_argnames=("dilation",))
def resnet_block(x, w1, b1, w2, b2, dilation=1):
    """x: (N, C, H, W) float32. w*: (C, C, 3, 3). Returns (N, C, H, W).

    b1/b2 are accepted for API parity with nn.Conv2d(bias=True) but are
    mathematically exact no-ops: InstanceNorm2d(affine=False) subtracts the
    per-channel mean, cancelling any per-channel constant bias.
    """
    del b1, b2
    N, C, H, W = x.shape
    if dilation >= H or dilation >= W or H < 2 or W < 2:
        raise ValueError("ReflectionPad2d requires pad < spatial size (>= 2)")
    HW = H * W
    matmul_dtype = jnp.float32   # TODO(synk): bf16 on v6e/v7x if tolerance allows

    # Tap-major weights: (Cout, Cin, 3, 3) -> (9, Cout, Cin), tap = ky*3 + kx.
    w1_t = jnp.transpose(w1, (2, 3, 0, 1)).reshape(9, C, C).astype(jnp.float32)
    w2_t = jnp.transpose(w2, (2, 3, 0, 1)).reshape(9, C, C).astype(jnp.float32)

    kernel = make_resnet_block_kernel(C, H, W, dilation, matmul_dtype)

    out_flat = pl.pallas_call(
        kernel,
        out_shape=jax.ShapeDtypeStruct((N, C, HW), jnp.float32),
        grid_spec=pltpu.PrefetchScalarGridSpec(
            num_scalar_prefetch=0,
            grid=(N,),                                   # one sample per step
            in_specs=[
                pl.BlockSpec((1, C, H, W), lambda n: (n, 0, 0, 0)),
                pl.BlockSpec((9, C, C), lambda n: (0, 0, 0)),   # grid-invariant
                pl.BlockSpec((9, C, C), lambda n: (0, 0, 0)),   # grid-invariant
            ],
            out_specs=pl.BlockSpec((1, C, HW), lambda n: (n, 0, 0)),
        ),
        compiler_params=pltpu.CompilerParams(
            dimension_semantics=("parallel",),
            vmem_limit_bytes=_vmem_limit_bytes(),
        ),
    )(x, w1_t, w2_t)

    return out_flat.reshape(N, C, H, W)


# ---------------- pure-JAX reference (for correctness check) -----------------
def _instance_norm_ref(y, eps=1e-5):
    mu = jnp.mean(y, axis=(2, 3), keepdims=True)
    var = jnp.mean((y - mu) ** 2, axis=(2, 3), keepdims=True)
    return (y - mu) / jnp.sqrt(var + eps)


def resnet_block_ref(x, w1, b1, w2, b2, dilation=1):
    d = dilation
    dn = ("NCHW", "OIHW", "NCHW")
    xp = jnp.pad(x, ((0, 0), (0, 0), (d, d), (d, d)), mode="reflect")
    y = lax.conv_general_dilated(xp, w1, (1, 1), "VALID",
                                 rhs_dilation=(d, d), dimension_numbers=dn)
    y = y + b1[None, :, None, None]
    y = jnp.maximum(_instance_norm_ref(y), 0.0)
    yp = jnp.pad(y, ((0, 0), (0, 0), (1, 1), (1, 1)), mode="reflect")
    z = lax.conv_general_dilated(yp, w2, (1, 1), "VALID", dimension_numbers=dn)
    z = z + b2[None, :, None, None]
    z = _instance_norm_ref(z)
    return x + z


if __name__ == "__main__":
    # Small shapes consistent with ResnetBlock(dim=4): x is NCHW (2, 4, 16, 16).
    N, C, H, W = 2, 4, 16, 16
    dilation = 1

    key = jax.random.PRNGKey(0)
    kx, kw1, kb1, kw2, kb2 = jax.random.split(key, 5)
    x = jax.random.normal(kx, (N, C, H, W), jnp.float32)
    w1 = jax.random.normal(kw1, (C, C, 3, 3), jnp.float32) * 0.1
    b1 = jax.random.normal(kb1, (C,), jnp.float32) * 0.1
    w2 = jax.random.normal(kw2, (C, C, 3, 3), jnp.float32) * 0.1
    b2 = jax.random.normal(kb2, (C,), jnp.float32) * 0.1

    out = resnet_block(x, w1, b1, w2, b2, dilation=dilation)
    out = jax.block_until_ready(out)

    ref = resnet_block_ref(x, w1, b1, w2, b2, dilation=dilation)
    ref = jax.block_until_ready(ref)

    err = float(jnp.max(jnp.abs(out - ref)))
    assert out.shape == x.shape and out.dtype == x.dtype
    assert err < 1e-3, f"max abs error {err}"
    print("KERNEL_OK")
</pallas_src>

<mosaic_0001>
module attributes {stable_mosaic.version = 11 : i64} {
  func.func @kernel(%arg0: i32, %arg1: memref<1x4x16x16xf32, #tpu.memory_space<vmem>>, %arg2: memref<9x4x4xf32, #tpu.memory_space<vmem>>, %arg3: memref<9x4x4xf32, #tpu.memory_space<vmem>>, %arg4: memref<1x4x256xf32, #tpu.memory_space<vmem>>) attributes {dimension_semantics = [#tpu.dimension_semantics<parallel>], iteration_bounds = array<i64: 2>, scalar_prefetch = 0 : i64, scratch_operands = 0 : i64, tpu.core_type = #tpu.core_type<tc>, window_params = [{transform_indices = @transform_0, window_bounds = array<i64: 1, 4, 16, 16>}, {pipeline_mode = #tpu.pipeline_mode<synchronous>, transform_indices = @transform_1, window_bounds = array<i64: 9, 4, 4>}, {pipeline_mode = #tpu.pipeline_mode<synchronous>, transform_indices = @transform_2, window_bounds = array<i64: 9, 4, 4>}, {transform_indices = @transform_3, window_bounds = array<i64: 1, 4, 256>}]} {
    %c0 = arith.constant 0 : index
    %c0_0 = arith.constant 0 : index
    %c0_1 = arith.constant 0 : index
    %c0_2 = arith.constant 0 : index
    %0 = vector.load %arg1[%c0, %c0_0, %c0_1, %c0_2] : memref<1x4x16x16xf32, #tpu.memory_space<vmem>>, vector<1x4x16x16xf32>
    %1 = vector.shape_cast %0 : vector<1x4x16x16xf32> to vector<4x16x16xf32>
    %2 = vector.extract_strided_slice %1 {offsets = [0, 1, 0], sizes = [4, 1, 16], strides = [1, 1, 1]} : vector<4x16x16xf32> to vector<4x1x16xf32>
    %3 = vector.extract_strided_slice %1 {offsets = [0, 14, 0], sizes = [4, 1, 16], strides = [1, 1, 1]} : vector<4x16x16xf32> to vector<4x1x16xf32>
    %4 = tpu.concatenate %2, %1, %3 in 1 : vector<4x1x16xf32>, vector<4x16x16xf32>, vector<4x1x16xf32> -> vector<4x18x16xf32>
    %5 = vector.extract_strided_slice %4 {offsets = [0, 0, 1], sizes = [4, 18, 1], strides = [1, 1, 1]} : vector<4x18x16xf32> to vector<4x18x1xf32>
    %6 = vector.extract_strided_slice %4 {offsets = [0, 0, 14], sizes = [4, 18, 1], strides = [1, 1, 1]} : vector<4x18x16xf32> to vector<4x18x1xf32>
    %7 = tpu.concatenate %5, %4, %6 in 2 : vector<4x18x1xf32>, vector<4x18x16xf32>, vector<4x18x1xf32> -> vector<4x18x18xf32>
    %cst = arith.constant 0.000000e+00 : f32
    %8 = vector.broadcast %cst : f32 to vector<4x256xf32>
    %9 = vector.extract_strided_slice %7 {offsets = [0, 0, 0], sizes = [4, 16, 16], strides = [1, 1, 1]} : vector<4x18x18xf32> to vector<4x16x16xf32>
    %10 = vector.shape_cast %9 : vector<4x16x16xf32> to vector<4x256xf32>
    %c0_3 = arith.constant 0 : index
    %c0_4 = arith.constant 0 : index
    %c0_5 = arith.constant 0 : index
    %11 = vector.load %arg2[%c0_3, %c0_4, %c0_5] : memref<9x4x4xf32, #tpu.memory_space<vmem>>, vector<1x4x4xf32>
    %12 = vector.shape_cast %11 : vector<1x4x4xf32> to vector<4x4xf32>
    %cst_6 = arith.constant dense<0.000000e+00> : vector<4x256xf32>
    %13 = tpu.matmul %12, %10, %cst_6 {dimension_numbers = #tpu.dot_dimension_numbers<[1], [0], [0], [1], [0, 0, 1, 1], [], []>} : vector<4x4xf32>, vector<4x256xf32>, vector<4x256xf32> -> vector<4x256xf32>
    %14 = arith.addf %8, %13 : vector<4x256xf32>
    %15 = vector.extract_strided_slice %7 {offsets = [0, 0, 1], sizes = [4, 16, 16], strides = [1, 1, 1]} : vector<4x18x18xf32> to vector<4x16x16xf32>
    %16 = vector.shape_cast %15 : vector<4x16x16xf32> to vector<4x256xf32>
    %c1 = arith.constant 1 : index
    %c0_7 = arith.constant 0 : index
    %c0_8 = arith.constant 0 : index
    %17 = vector.load %arg2[%c1, %c0_7, %c0_8] : memref<9x4x4xf32, #tpu.memory_space<vmem>>, vector<1x4x4xf32>
    %18 = vector.shape_cast %17 : vector<1x4x4xf32> to vector<4x4xf32>
    %cst_9 = arith.constant dense<0.000000e+00> : vector<4x256xf32>
    %19 = tpu.matmul %18, %16, %cst_9 {dimension_numbers = #tpu.dot_dimension_numbers<[1], [0], [0], [1], [0, 0, 1, 1], [], []>} : vector<4x4xf32>, vector<4x256xf32>, vector<4x256xf32> -> vector<4x256xf32>
    %20 = arith.addf %14, %19 : vector<4x256xf32>
    %21 = vector.extract_strided_slice %7 {offsets = [0, 0, 2], sizes = [4, 16, 16], strides = [1, 1, 1]} : vector<4x18x18xf32> to vector<4x16x16xf32>
    %22 = vector.shape_cast %21 : vector<4x16x16xf32> to vector<4x256xf32>
    %c2 = arith.constant 2 : index
    %c0_10 = arith.constant 0 : index
    %c0_11 = arith.constant 0 : index
    %23 = vector.load %arg2[%c2, %c0_10, %c0_11] : memref<9x4x4xf32, #tpu.memory_space<vmem>>, vector<1x4x4xf32>
    %24 = vector.shape_cast %23 : vector<1x4x4xf32> to vector<4x4xf32>
    %cst_12 = arith.constant dense<0.000000e+00> : vector<4x256xf32>
    %25 = tpu.matmul %24, %22, %cst_12 {dimension_numbers = #tpu.dot_dimension_numbers<[1], [0], [0], [1], [0, 0, 1, 1], [], []>} : vector<4x4xf32>, vector<4x256xf32>, vector<4x256xf32> -> vector<4x256xf32>
    %26 = arith.addf %20, %25 : vector<4x256xf32>
    %27 = vector.extract_strided_slice %7 {offsets = [0, 1, 0], sizes = [4, 16, 16], strides = [1, 1, 1]} : vector<4x18x18xf32> to vector<4x16x16xf32>
    %28 = vector.shape_cast %27 : vector<4x16x16xf32> to vector<4x256xf32>
    %c3 = arith.constant 3 : index
    %c0_13 = arith.constant 0 : index
    %c0_14 = arith.constant 0 : index
    %29 = vector.load %arg2[%c3, %c0_13, %c0_14] : memref<9x4x4xf32, #tpu.memory_space<vmem>>, vector<1x4x4xf32>
    %30 = vector.shape_cast %29 : vector<1x4x4xf32> to vector<4x4xf32>
    %cst_15 = arith.constant dense<0.000000e+00> : vector<4x256xf32>
    %31 = tpu.matmul %30, %28, %cst_15 {dimension_numbers = #tpu.dot_dimension_numbers<[1], [0], [0], [1], [0, 0, 1, 1], [], []>} : vector<4x4xf32>, vector<4x256xf32>, vector<4x256xf32> -> vector<4x256xf32>
    %32 = arith.addf %26, %31 : vector<4x256xf32>
    %33 = vector.extract_strided_slice %7 {offsets = [0, 1, 1], sizes = [4, 16, 16], strides = [1, 1, 1]} : vector<4x18x18xf32> to vector<4x16x16xf32>
    %34 = vector.shape_cast %33 : vector<4x16x16xf32> to vector<4x256xf32>
    %c4 = arith.constant 4 : index
    %c0_16 = arith.constant 0 : index
    %c0_17 = arith.constant 0 : index
    %35 = vector.load %arg2[%c4, %c0_16, %c0_17] : memref<9x4x4xf32, #tpu.memory_space<vmem>>, vector<1x4x4xf32>
    %36 = vector.shape_cast %35 : vector<1x4x4xf32> to vector<4x4xf32>
    %cst_18 = arith.constant dense<0.000000e+00> : vector<4x256xf32>
    %37 = tpu.matmul %36, %34, %cst_18 {dimension_numbers = #tpu.dot_dimension_numbers<[1], [0], [0], [1], [0, 0, 1, 1], [], []>} : vector<4x4xf32>, vector<4x256xf32>, vector<4x256xf32> -> vector<4x256xf32>
    %38 = arith.addf %32, %37 : vector<4x256xf32>
    %39 = vector.extract_strided_slice %7 {offsets = [0, 1, 2], sizes = [4, 16, 16], strides = [1, 1, 1]} : vector<4x18x18xf32> to vector<4x16x16xf32>
    %40 = vector.shape_cast %39 : vector<4x16x16xf32> to vector<4x256xf32>
    %c5 = arith.constant 5 : index
    %c0_19 = arith.constant 0 : index
    %c0_20 = arith.constant 0 : index
    %41 = vector.load %arg2[%c5, %c0_19, %c0_20] : memref<9x4x4xf32, #tpu.memory_space<vmem>>, vector<1x4x4xf32>
    %42 = vector.shape_cast %41 : vector<1x4x4xf32> to vector<4x4xf32>
    %cst_21 = arith.constant dense<0.000000e+00> : vector<4x256xf32>
    %43 = tpu.matmul %42, %40, %cst_21 {dimension_numbers = #tpu.dot_dimension_numbers<[1], [0], [0], [1], [0, 0, 1, 1], [], []>} : vector<4x4xf32>, vector<4x256xf32>, vector<4x256xf32> -> vector<4x256xf32>
    %44 = arith.addf %38, %43 : vector<4x256xf32>
    %45 = vector.extract_strided_slice %7 {offsets = [0, 2, 0], sizes = [4, 16, 16], strides = [1, 1, 1]} : vector<4x18x18xf32> to vector<4x16x16xf32>
    %46 = vector.shape_cast %45 : vector<4x16x16xf32> to vector<4x256xf32>
    %c6 = arith.constant 6 : index
    %c0_22 = arith.constant 0 : index
    %c0_23 = arith.constant 0 : index
    %47 = vector.load %arg2[%c6, %c0_22, %c0_23] : memref<9x4x4xf32, #tpu.memory_space<vmem>>, vector<1x4x4xf32>
    %48 = vector.shape_cast %47 : vector<1x4x4xf32> to vector<4x4xf32>
    %cst_24 = arith.constant dense<0.000000e+00> : vector<4x256xf32>
    %49 = tpu.matmul %48, %46, %cst_24 {dimension_numbers = #tpu.dot_dimension_numbers<[1], [0], [0], [1], [0, 0, 1, 1], [], []>} : vector<4x4xf32>, vector<4x256xf32>, vector<4x256xf32> -> vector<4x256xf32>
    %50 = arith.addf %44, %49 : vector<4x256xf32>
    %51 = vector.extract_strided_slice %7 {offsets = [0, 2, 1], sizes = [4, 16, 16], strides = [1, 1, 1]} : vector<4x18x18xf32> to vector<4x16x16xf32>
    %52 = vector.shape_cast %51 : vector<4x16x16xf32> to vector<4x256xf32>
    %c7 = arith.constant 7 : index
    %c0_25 = arith.constant 0 : index
    %c0_26 = arith.constant 0 : index
    %53 = vector.load %arg2[%c7, %c0_25, %c0_26] : memref<9x4x4xf32, #tpu.memory_space<vmem>>, vector<1x4x4xf32>
    %54 = vector.shape_cast %53 : vector<1x4x4xf32> to vector<4x4xf32>
    %cst_27 = arith.constant dense<0.000000e+00> : vector<4x256xf32>
    %55 = tpu.matmul %54, %52, %cst_27 {dimension_numbers = #tpu.dot_dimension_numbers<[1], [0], [0], [1], [0, 0, 1, 1], [], []>} : vector<4x4xf32>, vector<4x256xf32>, vector<4x256xf32> -> vector<4x256xf32>
    %56 = arith.addf %50, %55 : vector<4x256xf32>
    %57 = vector.extract_strided_slice %7 {offsets = [0, 2, 2], sizes = [4, 16, 16], strides = [1, 1, 1]} : vector<4x18x18xf32> to vector<4x16x16xf32>
    %58 = vector.shape_cast %57 : vector<4x16x16xf32> to vector<4x256xf32>
    %c8 = arith.constant 8 : index
    %c0_28 = arith.constant 0 : index
    %c0_29 = arith.constant 0 : index
    %59 = vector.load %arg2[%c8, %c0_28, %c0_29] : memref<9x4x4xf32, #tpu.memory_space<vmem>>, vector<1x4x4xf32>
    %60 = vector.shape_cast %59 : vector<1x4x4xf32> to vector<4x4xf32>
    %cst_30 = arith.constant dense<0.000000e+00> : vector<4x256xf32>
    %61 = tpu.matmul %60, %58, %cst_30 {dimension_numbers = #tpu.dot_dimension_numbers<[1], [0], [0], [1], [0, 0, 1, 1], [], []>} : vector<4x4xf32>, vector<4x256xf32>, vector<4x256xf32> -> vector<4x256xf32>
    %62 = arith.addf %56, %61 : vector<4x256xf32>
    %cst_31 = arith.constant dense<0.000000e+00> : vector<4xf32>
    %63 = vector.multi_reduction <add>, %62, %cst_31 [1] : vector<4x256xf32> to vector<4xf32>
    %64 = vector.shape_cast %63 : vector<4xf32> to vector<4x1xf32>
    %cst_32 = arith.constant 3.906250e-03 : f32
    %65 = vector.broadcast %cst_32 : f32 to vector<4x1xf32>
    %66 = arith.mulf %64, %65 : vector<4x1xf32>
    %67 = vector.broadcast %66 : vector<4x1xf32> to vector<4x256xf32>
    %68 = arith.subf %62, %67 : vector<4x256xf32>
    %69 = arith.mulf %68, %68 : vector<4x256xf32>
    %cst_33 = arith.constant dense<0.000000e+00> : vector<4xf32>
    %70 = vector.multi_reduction <add>, %69, %cst_33 [1] : vector<4x256xf32> to vector<4xf32>
    %71 = vector.shape_cast %70 : vector<4xf32> to vector<4x1xf32>
    %cst_34 = arith.constant 3.906250e-03 : f32
    %72 = vector.broadcast %cst_34 : f32 to vector<4x1xf32>
    %73 = arith.mulf %71, %72 : vector<4x1xf32>
    %cst_35 = arith.constant 9.99999974E-6 : f32
    %74 = vector.broadcast %cst_35 : f32 to vector<4x1xf32>
    %75 = arith.addf %73, %74 : vector<4x1xf32>
    %76 = math.rsqrt %75 : vector<4x1xf32>
    %77 = vector.broadcast %76 : vector<4x1xf32> to vector<4x256xf32>
    %78 = arith.mulf %68, %77 : vector<4x256xf32>
    %cst_36 = arith.constant 0.000000e+00 : f32
    %79 = vector.broadcast %cst_36 : f32 to vector<4x256xf32>
    %80 = arith.maximumf %78, %79 : vector<4x256xf32>
    %81 = vector.shape_cast %80 : vector<4x256xf32> to vector<4x16x16xf32>
    %82 = vector.extract_strided_slice %81 {offsets = [0, 1, 0], sizes = [4, 1, 16], strides = [1, 1, 1]} : vector<4x16x16xf32> to vector<4x1x16xf32>
    %83 = vector.extract_strided_slice %81 {offsets = [0, 14, 0], sizes = [4, 1, 16], strides = [1, 1, 1]} : vector<4x16x16xf32> to vector<4x1x16xf32>
    %84 = tpu.concatenate %82, %81, %83 in 1 : vector<4x1x16xf32>, vector<4x16x16xf32>, vector<4x1x16xf32> -> vector<4x18x16xf32>
    %85 = vector.extract_strided_slice %84 {offsets = [0, 0, 1], sizes = [4, 18, 1], strides = [1, 1, 1]} : vector<4x18x16xf32> to vector<4x18x1xf32>
    %86 = vector.extract_strided_slice %84 {offsets = [0, 0, 14], sizes = [4, 18, 1], strides = [1, 1, 1]} : vector<4x18x16xf32> to vector<4x18x1xf32>
    %87 = tpu.concatenate %85, %84, %86 in 2 : vector<4x18x1xf32>, vector<4x18x16xf32>, vector<4x18x1xf32> -> vector<4x18x18xf32>
    %cst_37 = arith.constant 0.000000e+00 : f32
    %88 = vector.broadcast %cst_37 : f32 to vector<4x256xf32>
    %89 = vector.extract_strided_slice %87 {offsets = [0, 0, 0], sizes = [4, 16, 16], strides = [1, 1, 1]} : vector<4x18x18xf32> to vector<4x16x16xf32>
    %90 = vector.shape_cast %89 : vector<4x16x16xf32> to vector<4x256xf32>
    %c0_38 = arith.constant 0 : index
    %c0_39 = arith.constant 0 : index
    %c0_40 = arith.constant 0 : index
    %91 = vector.load %arg3[%c0_38, %c0_39, %c0_40] : memref<9x4x4xf32, #tpu.memory_space<vmem>>, vector<1x4x4xf32>
    %92 = vector.shape_cast %91 : vector<1x4x4xf32> to vector<4x4xf32>
    %cst_41 = arith.constant dense<0.000000e+00> : vector<4x256xf32>
    %93 = tpu.matmul %92, %90, %cst_41 {dimension_numbers = #tpu.dot_dimension_numbers<[1], [0], [0], [1], [0, 0, 1, 1], [], []>} : vector<4x4xf32>, vector<4x256xf32>, vector<4x256xf32> -> vector<4x256xf32>
    %94 = arith.addf %88, %93 : vector<4x256xf32>
    %95 = vector.extract_strided_slice %87 {offsets = [0, 0, 1], sizes = [4, 16, 16], strides = [1, 1, 1]} : vector<4x18x18xf32> to vector<4x16x16xf32>
    %96 = vector.shape_cast %95 : vector<4x16x16xf32> to vector<4x256xf32>
    %c1_42 = arith.constant 1 : index
    %c0_43 = arith.constant 0 : index
    %c0_44 = arith.constant 0 : index
    %97 = vector.load %arg3[%c1_42, %c0_43, %c0_44] : memref<9x4x4xf32, #tpu.memory_space<vmem>>, vector<1x4x4xf32>
    %98 = vector.shape_cast %97 : vector<1x4x4xf32> to vector<4x4xf32>
    %cst_45 = arith.constant dense<0.000000e+00> : vector<4x256xf32>
    %99 = tpu.matmul %98, %96, %cst_45 {dimension_numbers = #tpu.dot_dimension_numbers<[1], [0], [0], [1], [0, 0, 1, 1], [], []>} : vector<4x4xf32>, vector<4x256xf32>, vector<4x256xf32> -> vector<4x256xf32>
    %100 = arith.addf %94, %99 : vector<4x256xf32>
    %101 = vector.extract_strided_slice %87 {offsets = [0, 0, 2], sizes = [4, 16, 16], strides = [1, 1, 1]} : vector<4x18x18xf32> to vector<4x16x16xf32>
    %102 = vector.shape_cast %101 : vector<4x16x16xf32> to vector<4x256xf32>
    %c2_46 = arith.constant 2 : index
    %c0_47 = arith.constant 0 : index
    %c0_48 = arith.constant 0 : index
    %103 = vector.load %arg3[%c2_46, %c0_47, %c0_48] : memref<9x4x4xf32, #tpu.memory_space<vmem>>, vector<1x4x4xf32>
    %104 = vector.shape_cast %103 : vector<1x4x4xf32> to vector<4x4xf32>
    %cst_49 = arith.constant dense<0.000000e+00> : vector<4x256xf32>
    %105 = tpu.matmul %104, %102, %cst_49 {dimension_numbers = #tpu.dot_dimension_numbers<[1], [0], [0], [1], [0, 0, 1, 1], [], []>} : vector<4x4xf32>, vector<4x256xf32>, vector<4x256xf32> -> vector<4x256xf32>
    %106 = arith.addf %100, %105 : vector<4x256xf32>
    %107 = vector.extract_strided_slice %87 {offsets = [0, 1, 0], sizes = [4, 16, 16], strides = [1, 1, 1]} : vector<4x18x18xf32> to vector<4x16x16xf32>
    %108 = vector.shape_cast %107 : vector<4x16x16xf32> to vector<4x256xf32>
    %c3_50 = arith.constant 3 : index
    %c0_51 = arith.constant 0 : index
    %c0_52 = arith.constant 0 : index
    %109 = vector.load %arg3[%c3_50, %c0_51, %c0_52] : memref<9x4x4xf32, #tpu.memory_space<vmem>>, vector<1x4x4xf32>
    %110 = vector.shape_cast %109 : vector<1x4x4xf32> to vector<4x4xf32>
    %cst_53 = arith.constant dense<0.000000e+00> : vector<4x256xf32>
    %111 = tpu.matmul %110, %108, %cst_53 {dimension_numbers = #tpu.dot_dimension_numbers<[1], [0], [0], [1], [0, 0, 1, 1], [], []>} : vector<4x4xf32>, vector<4x256xf32>, vector<4x256xf32> -> vector<4x256xf32>
    %112 = arith.addf %106, %111 : vector<4x256xf32>
    %113 = vector.extract_strided_slice %87 {offsets = [0, 1, 1], sizes = [4, 16, 16], strides = [1, 1, 1]} : vector<4x18x18xf32> to vector<4x16x16xf32>
    %114 = vector.shape_cast %113 : vector<4x16x16xf32> to vector<4x256xf32>
    %c4_54 = arith.constant 4 : index
    %c0_55 = arith.constant 0 : index
    %c0_56 = arith.constant 0 : index
    %115 = vector.load %arg3[%c4_54, %c0_55, %c0_56] : memref<9x4x4xf32, #tpu.memory_space<vmem>>, vector<1x4x4xf32>
    %116 = vector.shape_cast %115 : vector<1x4x4xf32> to vector<4x4xf32>
    %cst_57 = arith.constant dense<0.000000e+00> : vector<4x256xf32>
    %117 = tpu.matmul %116, %114, %cst_57 {dimension_numbers = #tpu.dot_dimension_numbers<[1], [0], [0], [1], [0, 0, 1, 1], [], []>} : vector<4x4xf32>, vector<4x256xf32>, vector<4x256xf32> -> vector<4x256xf32>
    %118 = arith.addf %112, %117 : vector<4x256xf32>
    %119 = vector.extract_strided_slice %87 {offsets = [0, 1, 2], sizes = [4, 16, 16], strides = [1, 1, 1]} : vector<4x18x18xf32> to vector<4x16x16xf32>
    %120 = vector.shape_cast %119 : vector<4x16x16xf32> to vector<4x256xf32>
    %c5_58 = arith.constant 5 : index
    %c0_59 = arith.constant 0 : index
    %c0_60 = arith.constant 0 : index
    %121 = vector.load %arg3[%c5_58, %c0_59, %c0_60] : memref<9x4x4xf32, #tpu.memory_space<vmem>>, vector<1x4x4xf32>
    %122 = vector.shape_cast %121 : vector<1x4x4xf32> to vector<4x4xf32>
    %cst_61 = arith.constant dense<0.000000e+00> : vector<4x256xf32>
    %123 = tpu.matmul %122, %120, %cst_61 {dimension_numbers = #tpu.dot_dimension_numbers<[1], [0], [0], [1], [0, 0, 1, 1], [], []>} : vector<4x4xf32>, vector<4x256xf32>, vector<4x256xf32> -> vector<4x256xf32>
    %124 = arith.addf %118, %123 : vector<4x256xf32>
    %125 = vector.extract_strided_slice %87 {offsets = [0, 2, 0], sizes = [4, 16, 16], strides = [1, 1, 1]} : vector<4x18x18xf32> to vector<4x16x16xf32>
    %126 = vector.shape_cast %125 : vector<4x16x16xf32> to vector<4x256xf32>
    %c6_62 = arith.constant 6 : index
    %c0_63 = arith.constant 0 : index
    %c0_64 = arith.constant 0 : index
    %127 = vector.load %arg3[%c6_62, %c0_63, %c0_64] : memref<9x4x4xf32, #tpu.memory_space<vmem>>, vector<1x4x4xf32>
    %128 = vector.shape_cast %127 : vector<1x4x4xf32> to vector<4x4xf32>
    %cst_65 = arith.constant dense<0.000000e+00> : vector<4x256xf32>
    %129 = tpu.matmul %128, %126, %cst_65 {dimension_numbers = #tpu.dot_dimension_numbers<[1], [0], [0], [1], [0, 0, 1, 1], [], []>} : vector<4x4xf32>, vector<4x256xf32>, vector<4x256xf32> -> vector<4x256xf32>
    %130 = arith.addf %124, %129 : vector<4x256xf32>
    %131 = vector.extract_strided_slice %87 {offsets = [0, 2, 1], sizes = [4, 16, 16], strides = [1, 1, 1]} : vector<4x18x18xf32> to vector<4x16x16xf32>
    %132 = vector.shape_cast %131 : vector<4x16x16xf32> to vector<4x256xf32>
    %c7_66 = arith.constant 7 : index
    %c0_67 = arith.constant 0 : index
    %c0_68 = arith.constant 0 : index
    %133 = vector.load %arg3[%c7_66, %c0_67, %c0_68] : memref<9x4x4xf32, #tpu.memory_space<vmem>>, vector<1x4x4xf32>
    %134 = vector.shape_cast %133 : vector<1x4x4xf32> to vector<4x4xf32>
    %cst_69 = arith.constant dense<0.000000e+00> : vector<4x256xf32>
    %135 = tpu.matmul %134, %132, %cst_69 {dimension_numbers = #tpu.dot_dimension_numbers<[1], [0], [0], [1], [0, 0, 1, 1], [], []>} : vector<4x4xf32>, vector<4x256xf32>, vector<4x256xf32> -> vector<4x256xf32>
    %136 = arith.addf %130, %135 : vector<4x256xf32>
    %137 = vector.extract_strided_slice %87 {offsets = [0, 2, 2], sizes = [4, 16, 16], strides = [1, 1, 1]} : vector<4x18x18xf32> to vector<4x16x16xf32>
    %138 = vector.shape_cast %137 : vector<4x16x16xf32> to vector<4x256xf32>
    %c8_70 = arith.constant 8 : index
    %c0_71 = arith.constant 0 : index
    %c0_72 = arith.constant 0 : index
    %139 = vector.load %arg3[%c8_70, %c0_71, %c0_72] : memref<9x4x4xf32, #tpu.memory_space<vmem>>, vector<1x4x4xf32>
    %140 = vector.shape_cast %139 : vector<1x4x4xf32> to vector<4x4xf32>
    %cst_73 = arith.constant dense<0.000000e+00> : vector<4x256xf32>
    %141 = tpu.matmul %140, %138, %cst_73 {dimension_numbers = #tpu.dot_dimension_numbers<[1], [0], [0], [1], [0, 0, 1, 1], [], []>} : vector<4x4xf32>, vector<4x256xf32>, vector<4x256xf32> -> vector<4x256xf32>
    %142 = arith.addf %136, %141 : vector<4x256xf32>
    %cst_74 = arith.constant dense<0.000000e+00> : vector<4xf32>
    %143 = vector.multi_reduction <add>, %142, %cst_74 [1] : vector<4x256xf32> to vector<4xf32>
    %144 = vector.shape_cast %143 : vector<4xf32> to vector<4x1xf32>
    %cst_75 = arith.constant 3.906250e-03 : f32
    %145 = vector.broadcast %cst_75 : f32 to vector<4x1xf32>
    %146 = arith.mulf %144, %145 : vector<4x1xf32>
    %147 = vector.broadcast %146 : vector<4x1xf32> to vector<4x256xf32>
    %148 = arith.subf %142, %147 : vector<4x256xf32>
    %149 = arith.mulf %148, %148 : vector<4x256xf32>
    %cst_76 = arith.constant dense<0.000000e+00> : vector<4xf32>
    %150 = vector.multi_reduction <add>, %149, %cst_76 [1] : vector<4x256xf32> to vector<4xf32>
    %151 = vector.shape_cast %150 : vector<4xf32> to vector<4x1xf32>
    %cst_77 = arith.constant 3.906250e-03 : f32
    %152 = vector.broadcast %cst_77 : f32 to vector<4x1xf32>
    %153 = arith.mulf %151, %152 : vector<4x1xf32>
    %cst_78 = arith.constant 9.99999974E-6 : f32
    %154 = vector.broadcast %cst_78 : f32 to vector<4x1xf32>
    %155 = arith.addf %153, %154 : vector<4x1xf32>
    %156 = math.rsqrt %155 : vector<4x1xf32>
    %157 = vector.broadcast %156 : vector<4x1xf32> to vector<4x256xf32>
    %158 = arith.mulf %148, %157 : vector<4x256xf32>
    %159 = vector.shape_cast %1 : vector<4x16x16xf32> to vector<4x256xf32>
    %160 = arith.addf %159, %158 : vector<4x256xf32>
    %c0_79 = arith.constant 0 : index
    %c0_80 = arith.constant 0 : index
    %c0_81 = arith.constant 0 : index
    %161 = vector.load %arg4[%c0_79, %c0_80, %c0_81] : memref<1x4x256xf32, #tpu.memory_space<vmem>>, vector<1x4x256xf32>
    %162 = vector.shape_cast %161 : vector<1x4x256xf32> to vector<4x256xf32>
    %163 = vector.shape_cast %160 : vector<4x256xf32> to vector<1x4x256xf32>
    tpu.vector_store %arg4[%c0_79, %c0_80, %c0_81], %163 {strides = array<i32>} : memref<1x4x256xf32, #tpu.memory_space<vmem>>, vector<1x4x256xf32>,
    return
  }
  func.func @transform_0(%arg0: i32) -> (i32, i32, i32, i32) {
    %c0_i32 = arith.constant 0 : i32
    %c0_i32_0 = arith.constant 0 : i32
    %c0_i32_1 = arith.constant 0 : i32
    %c0_i32_2 = arith.constant 0 : i32
    return %arg0, %c0_i32, %c0_i32_0, %c0_i32_1 : i32, i32, i32, i32
  }
  func.func @transform_1(%arg0: i32) -> (i32, i32, i32) {
    %c0_i32 = arith.constant 0 : i32
    %c0_i32_0 = arith.constant 0 : i32
    %c0_i32_1 = arith.constant 0 : i32
    %c0_i32_2 = arith.constant 0 : i32
    return %c0_i32, %c0_i32_0, %c0_i32_1 : i32, i32, i32
  }
  func.func @transform_2(%arg0: i32) -> (i32, i32, i32) {
    %c0_i32 = arith.constant 0 : i32
    %c0_i32_0 = arith.constant 0 : i32
    %c0_i32_1 = arith.constant 0 : i32
    %c0_i32_2 = arith.constant 0 : i32
    return %c0_i32, %c0_i32_0, %c0_i32_1 : i32, i32, i32
  }
  func.func @transform_3(%arg0: i32) -> (i32, i32, i32) {
    %c0_i32 = arith.constant 0 : i32
    %c0_i32_0 = arith.constant 0 : i32
    %c0_i32_1 = arith.constant 0 : i32
    return %arg0, %c0_i32, %c0_i32_0 : i32, i32, i32
  }
}

</mosaic_0001>

<llo_original>
// kernel: resnet_block.1
$region0: #{resnet_block.1}
  #allocation0 [shape = 'u32[]', space=smem, size = 0x4, offset = 0x4, fixed_abs, tag = 'smem constant byte address 0x4 - core index']
  #allocation1 [shape = 'u32[144,128]{1,0:T(1,128)}', space=vmem, size = 0x12000, scoped, tag = 'internal scratch']
  %s0 = inlined_call_operand.hbm [shape: f32[2,4,16,16], index: 0, kind: input, shape index: {}]
  %s1 = inlined_call_operand.hbm [shape: f32[9,4,4], index: 1, kind: input, shape index: {}]
  %s2 = inlined_call_operand.hbm [shape: f32[9,4,4], index: 2, kind: input, shape index: {}]
  %s3 = inlined_call_operand.vmem [shape: f32[2,4,256], index: 3, kind: output, shape index: {}]
  %s4 = sld [smem:[#allocation0]]
  $region57: #{resnet_block.1} parent=0
    _
  %s6 = ssub.s32 1, %s4
  %s7 = scalar_select 0, %s6, %s4
  $region1: #{resnet_block.1} parent=0
    #allocation2 [shape = 'u8[65536]{0}', space=vmem, size = 0x10000, scoped, tag = 'input window, operand 0']
    #allocation3 [shape = 's32[2]{0}', space=sflag, size = 0x8, scoped, tag = 'scoped memory for resnet_block.1']
    #allocation4 [shape = 'u8[18432]{0}', space=vmem, size = 0x4800, scoped, tag = 'input window, operand 1, single buffered']
    #allocation5 [shape = 's32[1]{0}', space=sflag, size = 0x4, scoped, tag = 'scoped memory for resnet_block.1']
    #allocation6 [shape = 'u8[18432]{0}', space=vmem, size = 0x4800, scoped, tag = 'input window, operand 2, single buffered']
    %8 = vsyncpa [#allocation3], 0
    %s9 = scalar_lea.sflag [#allocation3], 1
    %10 = vsyncpa %s9, 0
    %11 = vsyncpa [#allocation5], 0
    loop: start=0, step=1, limit=4
    $region2: #{resnet_block.1} parent=1 // loop_pre_header
      _
    $region3: #{resnet_block.1} parent=1 // loop_header
      %s13 = sphi 0, %s17
      %p14 = scmp.ge.s32.totalorder %s13, 4
      %s23 = sphi 0, %s25
      %s26 = sphi 0, %s23
      %s27 = sphi 0, %s26
      %s43 = sphi 0, %s27
      %s47 = sphi 0, %s47
      %s49 = sphi 0, %s47
      %s50 = sphi 0, %s49
      %s64 = sphi 0, %s50
      %s68 = sphi 0, %s68
      %s70 = sphi 0, %s68
      %s71 = sphi 0, %s70
      %s85 = sphi 0, %s71
      %s91 = sphi 0, %s93
      %s94 = sphi 0, %s91
      %s95 = sphi 0, %s94
      %s111 = sphi 0, %s95
    $region4: #{resnet_block.1} parent=1 // loop_header_branch
      %16 = sbr.rel (%p14) target = $region8
    $region5: #{resnet_block.1} parent=1 // loop_body
      %s18 = ssub.s32 %s13, 1
      %s19 = ssub.s32 %s13, 2
      %s20 = sadd.s32 %s13, 1
      %s21 = ssub.s32 %s13, %s20
      %p22 = scmp.eq.s32.totalorder %s21, 0
      %s24 = sadd.s32 %s23, 1
      %s25 = scalar_select %p22, %s23, %s24
      %p28 = pneg %p22
      %p29 = scmp.eq.s32.totalorder %s13, 1
      %p30 = por %p28, %p29
      %p31 = scmp.ne.s32.totalorder %s23, %s26
      %p32 = scmp.eq.s32.totalorder %s13, 0
      %p33 = por %p31, %p32
      %p34 = scmp.ne.s32.totalorder %s23, %s26
      %p35 = scmp.eq.s32.totalorder %s18, 1
      %p36 = por %p34, %p35
      %p37 = scmp.ne.s32.totalorder %s26, %s27
      %p38 = scmp.eq.s32.totalorder %s18, 0
      %p39 = por %p37, %p38
      %p40 = scmp.ne.s32.totalorder %s26, %s27
      %p41 = scmp.eq.s32.totalorder %s19, 1
      %p42 = por %p40, %p41
      %p44 = scmp.ne.s32.totalorder %s27, %s43
      %p45 = scmp.eq.s32.totalorder %s19, 0
      %p46 = por %p44, %p45
      %s48 = sadd.s32 %s47, 1
      %p51 = scmp.eq.s32.totalorder %s13, 1
      %p52 = scmp.ne.s32.totalorder %s47, %s49
      %p53 = scmp.eq.s32.totalorder %s13, 0
      %p54 = por %p52, %p53
      %p55 = scmp.ne.s32.totalorder %s47, %s49
      %p56 = scmp.eq.s32.totalorder %s18, 1
      %p57 = por %p55, %p56
      %p58 = scmp.ne.s32.totalorder %s49, %s50
      %p59 = scmp.eq.s32.totalorder %s18, 0
      %p60 = por %p58, %p59
      %p61 = scmp.ne.s32.totalorder %s49, %s50
      %p62 = scmp.eq.s32.totalorder %s19, 1
      %p63 = por %p61, %p62
      %p65 = scmp.ne.s32.totalorder %s50, %s64
      %p66 = scmp.eq.s32.totalorder %s19, 0
      %p67 = por %p65, %p66
      %s69 = sadd.s32 %s68, 1
      %p72 = scmp.eq.s32.totalorder %s13, 1
      %p73 = scmp.ne.s32.totalorder %s68, %s70
      %p74 = scmp.eq.s32.totalorder %s13, 0
      %p75 = por %p73, %p74
      %p76 = scmp.ne.s32.totalorder %s68, %s70
      %p77 = scmp.eq.s32.totalorder %s18, 1
      %p78 = por %p76, %p77
      %p79 = scmp.ne.s32.totalorder %s70, %s71
      %p80 = scmp.eq.s32.totalorder %s18, 0
      %p81 = por %p79, %p80
      %p82 = scmp.ne.s32.totalorder %s70, %s71
      %p83 = scmp.eq.s32.totalorder %s19, 1
      %p84 = por %p82, %p83
      %p86 = scmp.ne.s32.totalorder %s71, %s85
      %p87 = scmp.eq.s32.totalorder %s19, 0
      %p88 = por %p86, %p87
      %s89 = ssub.s32 %s13, %s20
      %p90 = scmp.eq.s32.totalorder %s89, 0
      %s92 = sadd.s32 %s91, 1
      %s93 = scalar_select %p90, %s91, %s92
      %p96 = pneg %p90
      %p97 = scmp.eq.s32.totalorder %s13, 1
      %p98 = por %p96, %p97
      %p99 = scmp.ne.s32.totalorder %s91, %s94
      %p100 = scmp.eq.s32.totalorder %s13, 0
      %p101 = por %p99, %p100
      %p102 = scmp.ne.s32.totalorder %s91, %s94
      %p103 = scmp.eq.s32.totalorder %s18, 1
      %p104 = por %p102, %p103
      %p105 = scmp.ne.s32.totalorder %s94, %s95
      %p106 = scmp.eq.s32.totalorder %s18, 0
      %p107 = por %p105, %p106
      %p108 = scmp.ne.s32.totalorder %s94, %s95
      %p109 = scmp.eq.s32.totalorder %s19, 1
      %p110 = por %p108, %p109
      %p112 = scmp.ne.s32.totalorder %s95, %s111
      %p113 = scmp.eq.s32.totalorder %s19, 0
      %p114 = por %p112, %p113
      %p115 = scmp.le.s32.totalorder 1, %s13
      %p116 = scmp.lt.s32.totalorder %s13, 3
      %p117 = pnand %p115, %p116
      %p118 = pneg %p117
      // Predicated region
      $region9: #{resnet_block.1} parent=5 // pred_check
        _
      $region10: #{resnet_block.1} parent=5 // pred_check_branch
        %120 = sbr.rel (%p117) target = $region12
      $region11: #{resnet_block.1} parent=5 // pred_region
        %s121 = ssub.s32 %s13, 1
        // Predicated region
        $region13: #{resnet_block.1} parent=11 // pred_check
          %p122 = pneg %p60
        $region14: #{resnet_block.1} parent=11 // pred_check_branch
          %124 = sbr.rel (%p122) target = $region16
        $region15: #{resnet_block.1} parent=11 // pred_region
          %s126 = ssub.s32 576, 576
          %127 = vsyncadd [#allocation5], %s126
          %s128 = sshll.u32 [#allocation4], 4
          %s129 = int_to_ptr.vmem [resolvable:$true] %s128
          %134 = dma.hbm_to_vmem [thread:$0]  %s1, 576, %s129, [#allocation5], 64, 64, 4
        $region16: #{resnet_block.1} parent=11 // pred_fallthru
          _
        // Predicated region
        $region17: #{resnet_block.1} parent=11 // pred_check
          %p135 = pneg %p81
        $region18: #{resnet_block.1} parent=11 // pred_check_branch
          %137 = sbr.rel (%p135) target = $region20
        $region19: #{resnet_block.1} parent=11 // pred_region
          %s139 = ssub.s32 576, 576
          %140 = vsyncadd [#allocation5], %s139
          %s141 = sshll.u32 [#allocation6], 4
          %s142 = int_to_ptr.vmem [resolvable:$true] %s141
          %147 = dma.hbm_to_vmem [thread:$0]  %s2, 576, %s142, [#allocation5], 64, 64, 4
        $region20: #{resnet_block.1} parent=11 // pred_fallthru
          _
      $region12: #{resnet_block.1} parent=5 // pred_fallthru
        _
      %p148 = scmp.lt.s32.totalorder %s13, 2
      // Predicated region
      $region21: #{resnet_block.1} parent=5 // pred_check
        %p149 = pneg %p148
      $region22: #{resnet_block.1} parent=5 // pred_check_branch
        %151 = sbr.rel (%p149) target = $region24
      $region23: #{resnet_block.1} parent=5 // pred_region
        // Predicated region
        $region25: #{resnet_block.1} parent=23 // pred_check
          %p152 = pneg %p33
        $region26: #{resnet_block.1} parent=23 // pred_check_branch
          %154 = sbr.rel (%p152) target = $region28
        $region27: #{resnet_block.1} parent=23 // pred_region
          %s155 = sand.u32 %s23, 1
          %s156 = scalar_lea.sflag [#allocation3], %s155
          %s157 = sand.u32 %s23, 1
          %s158 = smul.addr %s157, 64
          %s159 = scalar_lea.vmem [#allocation2], %s158
          %s161 = ssub.s32 1024, 1024
          %162 = vsyncadd %s156, %s161
          %s163 = smul.addr %s13, 8
          %s164 = smul.addr %s163, 128
          %s165 = scalar_lea.hbm %s0, %s164
          %s166 = sshll.u32 %s159, 4
          %s167 = int_to_ptr.vmem [resolvable:$true] %s166
          %172 = dma.hbm_to_vmem [thread:$0]  %s165, 1024, %s167, %s156, 128, 128, 8
        $region28: #{resnet_block.1} parent=23 // pred_fallthru
          _
      $region24: #{resnet_block.1} parent=5 // pred_fallthru
        _
      %p173 = scmp.le.s32.totalorder 1, %s13
      %p174 = scmp.lt.s32.totalorder %s13, 3
      %p175 = pnand %p173, %p174
      %p176 = pneg %p175
      // Predicated region
      $region29: #{resnet_block.1} parent=5 // pred_check
        _
      $region30: #{resnet_block.1} parent=5 // pred_check_branch
        %178 = sbr.rel (%p175) target = $region32
      $region31: #{resnet_block.1} parent=5 // pred_region
        %s179 = ssub.s32 %s13, 1
        %s180 = sand.u32 %s26, 1
        %s181 = scalar_lea.sflag [#allocation3], %s180
        %s182 = sand.u32 %s26, 1
        %s183 = smul.addr %s182, 64
        %s184 = scalar_lea.vmem [#allocation2], %s183
        // Predicated region
        $region33: #{resnet_block.1} parent=31 // pred_check
          %p185 = pneg %p39
        $region34: #{resnet_block.1} parent=31 // pred_check_branch
          %187 = sbr.rel (%p185) target = $region36
        $region35: #{resnet_block.1} parent=31 // pred_region
          %188 = dma.done %s181, 1024
        $region36: #{resnet_block.1} parent=31 // pred_fallthru
          _
        // Predicated region
        $region37: #{resnet_block.1} parent=31 // pred_check
          %p189 = pneg %p60
        $region38: #{resnet_block.1} parent=31 // pred_check_branch
          %191 = sbr.rel (%p189) target = $region40
        $region39: #{resnet_block.1} parent=31 // pred_region
          %192 = dma.done [#allocation5], 576
        $region40: #{resnet_block.1} parent=31 // pred_fallthru
          _
        // Predicated region
        $region41: #{resnet_block.1} parent=31 // pred_check
          %p193 = pneg %p81
        $region42: #{resnet_block.1} parent=31 // pred_check_branch
          %195 = sbr.rel (%p193) target = $region44
        $region43: #{resnet_block.1} parent=31 // pred_region
          %196 = dma.done [#allocation5], 576
        $region44: #{resnet_block.1} parent=31 // pred_fallthru
          _
        %s197 = sand.u32 %s26, 1
        %s198 = scalar_lea.sflag [#allocation3], %s197
        %s199 = sand.u32 %s26, 1
        %s200 = smul.addr %s199, 64
        %s201 = scalar_lea.vmem [#allocation2], %s200
        %p202 = pneg %p39
        %p203 = pneg %p36
        %p204 = pneg %p60
        %p205 = pneg %p57
        %p206 = pneg %p81
        %p207 = pneg %p78
        %p208 = pneg %p107
        %p209 = pneg %p104
        %p210 = scmp.lt.s32.totalorder %s18, 1
        %s211 = scalar_select %p210, %s18, 1
        %s212 = smul.addr %s211, 2
        %s213 = smul.addr %s212, 4
        %s214 = scalar_lea.vmem %s3, %s213
        %p215 = scmp.lt.s32.totalorder %s18, 1
        %s216 = scalar_select %p215, %s18, 1
        %s217 = smul.addr %s216, 2
        %s218 = smul.addr %s217, 4
        %s219 = scalar_lea.vmem %s3, %s218
        %v220 = vld [vmem:[%s184] sm:$0xff]
        %v221 = vld [vmem:[%s184 + $0x8] sm:$0xff]
        %v222 = vld [vmem:[%s184 + $0x10] sm:$0xff]
        %v223 = vld [vmem:[%s184 + $0x18] sm:$0xff]
        %v224 = vld [vmem:[%s184 + $0x20] sm:$0xff]
        %v225 = vld [vmem:[%s184 + $0x28] sm:$0xff]
        %v226 = vld [vmem:[%s184 + $0x30] sm:$0xff]
        %v227 = vld [vmem:[%s184 + $0x38] sm:$0xff]
        %v232 = vrot.slane %v220, 1
        %v233 = vrot.slane %v222, 1
        %v234 = vrot.slane %v224, 1
        %v235 = vrot.slane %v226, 1
        %vm244 = vcmask 1040384
        %v245 = vrot.slane %v220, 7
        %v246 = vrot.slane %v221, 7
        %v247 = vsel %vm244, %v245, %v246
        %v248 = vrot.slane %v222, 7
        %v249 = vrot.slane %v223, 7
        %v250 = vsel %vm244, %v248, %v249
        %v251 = vrot.slane %v224, 7
        %v252 = vrot.slane %v225, 7
        %v253 = vsel %vm244, %v251, %v252
        %v254 = vrot.slane %v226, 7
        %v255 = vrot.slane %v227, 7
        %v256 = vsel %vm244, %v254, %v255
        %v265 = vrot.slane %v221, 5
        %v266 = vrot.slane %v223, 5
        %v267 = vrot.slane %v225, 5
        %v268 = vrot.slane %v227, 5
        %v273 = vsel %vm244, %v232, %v245
        %v274 = vsel %vm244, %v233, %v248
        %v275 = vsel %vm244, %v234, %v251
        %v276 = vsel %vm244, %v235, %v254
        %v277 = vsel %vm244, %v246, %v265
        %v278 = vsel %vm244, %v249, %v266
        %v279 = vsel %vm244, %v252, %v267
        %v280 = vsel %vm244, %v255, %v268
        %289 = vrot.lane.b32.xlu0 %v273, 127
        %v290 = vpop.permute.xlu0 %289
        %291 = vrot.lane.b32.xlu0 %v247, 127
        %v292 = vpop.permute.xlu0 %291
        %293 = vrot.lane.b32.xlu0 %v277, 127
        %v294 = vpop.permute.xlu0 %293
        %295 = vrot.lane.b32.xlu0 %v274, 127
        %v296 = vpop.permute.xlu0 %295
        %297 = vrot.lane.b32.xlu0 %v250, 127
        %v298 = vpop.permute.xlu0 %297
        %299 = vrot.lane.b32.xlu0 %v278, 127
        %v300 = vpop.permute.xlu0 %299
        %301 = vrot.lane.b32.xlu0 %v275, 127
        %v302 = vpop.permute.xlu0 %301
        %303 = vrot.lane.b32.xlu0 %v253, 127
        %v304 = vpop.permute.xlu0 %303
        %305 = vrot.lane.b32.xlu0 %v279, 127
        %v306 = vpop.permute.xlu0 %305
        %307 = vrot.lane.b32.xlu0 %v276, 127
        %v308 = vpop.permute.xlu0 %307
        %309 = vrot.lane.b32.xlu0 %v256, 127
        %v310 = vpop.permute.xlu0 %309
        %311 = vrot.lane.b32.xlu0 %v280, 127
        %v312 = vpop.permute.xlu0 %311
        %325 = vrot.lane.b32.xlu0 %v273, 1
        %v326 = vpop.permute.xlu0 %325
        %327 = vrot.lane.b32.xlu0 %v247, 1
        %v328 = vpop.permute.xlu0 %327
        %329 = vrot.lane.b32.xlu0 %v277, 1
        %v330 = vpop.permute.xlu0 %329
        %331 = vrot.lane.b32.xlu0 %v274, 1
        %v332 = vpop.permute.xlu0 %331
        %333 = vrot.lane.b32.xlu0 %v250, 1
        %v334 = vpop.permute.xlu0 %333
        %335 = vrot.lane.b32.xlu0 %v278, 1
        %v336 = vpop.permute.xlu0 %335
        %337 = vrot.lane.b32.xlu0 %v275, 1
        %v338 = vpop.permute.xlu0 %337
        %339 = vrot.lane.b32.xlu0 %v253, 1
        %v340 = vpop.permute.xlu0 %339
        %341 = vrot.lane.b32.xlu0 %v279, 1
        %v342 = vpop.permute.xlu0 %341
        %343 = vrot.lane.b32.xlu0 %v276, 1
        %v344 = vpop.permute.xlu0 %343
        %345 = vrot.lane.b32.xlu0 %v256, 1
        %v346 = vpop.permute.xlu0 %345
        %347 = vrot.lane.b32.xlu0 %v280, 1
        %v348 = vpop.permute.xlu0 %347
        %361 = vrot.lane.b32.xlu0 %v273, 3
        %v362 = vpop.permute.xlu0 %361
        %363 = vrot.lane.b32.xlu0 %v247, 3
        %v364 = vpop.permute.xlu0 %363
        %365 = vrot.lane.b32.xlu0 %v277, 3
        %v366 = vpop.permute.xlu0 %365
        %367 = vrot.lane.b32.xlu0 %v274, 3
        %v368 = vpop.permute.xlu0 %367
        %369 = vrot.lane.b32.xlu0 %v250, 3
        %v370 = vpop.permute.xlu0 %369
        %371 = vrot.lane.b32.xlu0 %v278, 3
        %v372 = vpop.permute.xlu0 %371
        %373 = vrot.lane.b32.xlu0 %v275, 3
        %v374 = vpop.permute.xlu0 %373
        %375 = vrot.lane.b32.xlu0 %v253, 3
        %v376 = vpop.permute.xlu0 %375
        %377 = vrot.lane.b32.xlu0 %v279, 3
        %v378 = vpop.permute.xlu0 %377
        %379 = vrot.lane.b32.xlu0 %v276, 3
        %v380 = vpop.permute.xlu0 %379
        %381 = vrot.lane.b32.xlu0 %v256, 3
        %v382 = vpop.permute.xlu0 %381
        %383 = vrot.lane.b32.xlu0 %v280, 3
        %v384 = vpop.permute.xlu0 %383
        %vm397 = vcmask 7168
        %v398 = vsel %vm397, %v290, %v326
        %v399 = vsel %vm397, %v292, %v328
        %v400 = vsel %vm397, %v294, %v330
        %v401 = vsel %vm397, %v296, %v332
        %v402 = vsel %vm397, %v298, %v334
        %v403 = vsel %vm397, %v300, %v336
        %v404 = vsel %vm397, %v302, %v338
        %v405 = vsel %vm397, %v304, %v340
        %v406 = vsel %vm397, %v306, %v342
        %v407 = vsel %vm397, %v308, %v344
        %v408 = vsel %vm397, %v310, %v346
        %v409 = vsel %vm397, %v312, %v348
        %vm410 = vcmask 138240
        %v411 = vsel %vm410, %v398, %v362
        %v412 = vsel %vm410, %v399, %v364
        %v413 = vsel %vm410, %v400, %v366
        %v414 = vsel %vm410, %v401, %v368
        %v415 = vsel %vm410, %v402, %v370
        %v416 = vsel %vm410, %v403, %v372
        %v417 = vsel %vm410, %v404, %v374
        %v418 = vsel %vm410, %v405, %v376
        %v419 = vsel %vm410, %v406, %v378
        %v420 = vsel %vm410, %v407, %v380
        %v421 = vsel %vm410, %v408, %v382
        %v422 = vsel %vm410, %v409, %v384
        %v423 = vcombine.low %v411, %v417
        %v424 = vcombine.high %v411, %v417
        %v426 = vunpack.c.l.s4 1983009808
        %v427 = vunpack.c.0.s8 %v426
        %v428 = vlaneseq
        %v429 = vshrl.u32 %v428, 7
        %v430 = vsub.s32 %v427, %v429
        %v431 = vrot.slane %v423, %v430
        %v433 = vunpack.c.l.s4 1983009808
        %v434 = vunpack.c.0.s8 %v433
        %v435 = vlaneseq
        %v436 = vshrl.u32 %v435, 7
        %v437 = vsub.s32 %v434, %v436
        %v438 = vrot.slane %v424, %v437
        %v439 = vcombine.low %v414, %v420
        %v440 = vcombine.high %v414, %v420
        %v442 = vunpack.c.l.s4 1983009808
        %v443 = vunpack.c.0.s8 %v442
        %v444 = vlaneseq
        %v445 = vshrl.u32 %v444, 7
        %v446 = vsub.s32 %v443, %v445
        %v447 = vrot.slane %v439, %v446
        %v449 = vunpack.c.l.s4 1983009808
        %v450 = vunpack.c.0.s8 %v449
        %v451 = vlaneseq
        %v452 = vshrl.u32 %v451, 7
        %v453 = vsub.s32 %v450, %v452
        %v454 = vrot.slane %v440, %v453
        %v455 = vcombine.low %v431, %v447
        %v456 = vcombine.high %v431, %v447
        %v458 = vunpack.c.l.s4 1934713408
        %v459 = vunpack.c.0.s8 %v458
        %v460 = vlaneseq
        %v461 = vshrl.u32 %v460, 7
        %v462 = vsub.s32 %v459, %v461
        %v463 = vrot.slane %v455, %v462
        %v465 = vunpack.c.l.s4 1934713408
        %v466 = vunpack.c.0.s8 %v465
        %v467 = vlaneseq
        %v468 = vshrl.u32 %v467, 7
        %v469 = vsub.s32 %v466, %v468
        %v470 = vrot.slane %v456, %v469
        %v471 = vcombine.low %v438, %v454
        %v472 = vcombine.high %v438, %v454
        %v474 = vunpack.c.l.s4 1934713408
        %v475 = vunpack.c.0.s8 %v474
        %v476 = vlaneseq
        %v477 = vshrl.u32 %v476, 7
        %v478 = vsub.s32 %v475, %v477
        %v479 = vrot.slane %v471, %v478
        %v481 = vunpack.c.l.s4 1934713408
        %v482 = vunpack.c.0.s8 %v481
        %v483 = vlaneseq
        %v484 = vshrl.u32 %v483, 7
        %v485 = vsub.s32 %v482, %v484
        %v486 = vrot.slane %v472, %v485
        %v487 = vcombine.high %v463, 0.0
        %v488 = vcombine.high %v470, 0.0
        %v489 = vcombine.high %v479, 0.0
        %v490 = vcombine.high %v486, 0.0
        %v491 = vcombine.low %v412, %v418
        %v492 = vcombine.high %v412, %v418
        %v494 = vunpack.c.l.s4 1983009808
        %v495 = vunpack.c.0.s8 %v494
        %v496 = vlaneseq
        %v497 = vshrl.u32 %v496, 7
        %v498 = vsub.s32 %v495, %v497
        %v499 = vrot.slane %v491, %v498
        %v501 = vunpack.c.l.s4 1983009808
        %v502 = vunpack.c.0.s8 %v501
        %v503 = vlaneseq
        %v504 = vshrl.u32 %v503, 7
        %v505 = vsub.s32 %v502, %v504
        %v506 = vrot.slane %v492, %v505
        %v507 = vcombine.low %v415, %v421
        %v508 = vcombine.high %v415, %v421
        %v510 = vunpack.c.l.s4 1983009808
        %v511 = vunpack.c.0.s8 %v510
        %v512 = vlaneseq
        %v513 = vshrl.u32 %v512, 7
        %v514 = vsub.s32 %v511, %v513
        %v515 = vrot.slane %v507, %v514
        %v517 = vunpack.c.l.s4 1983009808
        %v518 = vunpack.c.0.s8 %v517
        %v519 = vlaneseq
        %v520 = vshrl.u32 %v519, 7
        %v521 = vsub.s32 %v518, %v520
        %v522 = vrot.slane %v508, %v521
        %v523 = vcombine.low %v499, %v515
        %v524 = vcombine.high %v499, %v515
        %v526 = vunpack.c.l.s4 1934713408
        %v527 = vunpack.c.0.s8 %v526
        %v528 = vlaneseq
        %v529 = vshrl.u32 %v528, 7
        %v530 = vsub.s32 %v527, %v529
        %v531 = vrot.slane %v523, %v530
        %v533 = vunpack.c.l.s4 1934713408
        %v534 = vunpack.c.0.s8 %v533
        %v535 = vlaneseq
        %v536 = vshrl.u32 %v535, 7
        %v537 = vsub.s32 %v534, %v536
        %v538 = vrot.slane %v524, %v537
        %v539 = vcombine.low %v506, %v522
        %v540 = vcombine.high %v506, %v522
        %v542 = vunpack.c.l.s4 1934713408
        %v543 = vunpack.c.0.s8 %v542
        %v544 = vlaneseq
        %v545 = vshrl.u32 %v544, 7
        %v546 = vsub.s32 %v543, %v545
        %v547 = vrot.slane %v539, %v546
        %v549 = vunpack.c.l.s4 1934713408
        %v550 = vunpack.c.0.s8 %v549
        %v551 = vlaneseq
        %v552 = vshrl.u32 %v551, 7
        %v553 = vsub.s32 %v550, %v552
        %v554 = vrot.slane %v540, %v553
        %v555 = vcombine.high %v531, 0.0
        %v556 = vcombine.high %v538, 0.0
        %v557 = vcombine.high %v547, 0.0
        %v558 = vcombine.high %v554, 0.0
        %560 = vrot.lane.b32.xlu0 %v487, 16
        %v561 = vpop.permute.xlu0 %560
        %564 = vrot.lane.b32.xlu0 %v470, 32
        %v565 = vpop.permute.xlu0 %564
        %568 = vrot.lane.b32.xlu0 %v488, 48
        %v569 = vpop.permute.xlu0 %568
        %572 = vrot.lane.b32.xlu0 %v479, 64
        %v573 = vpop.permute.xlu0 %572
        %576 = vrot.lane.b32.xlu0 %v489, 80
        %v577 = vpop.permute.xlu0 %576
        %580 = vrot.lane.b32.xlu0 %v486, 96
        %v581 = vpop.permute.xlu0 %580
        %584 = vrot.lane.b32.xlu0 %v490, 112
        %v585 = vpop.permute.xlu0 %584
        %588 = vrot.lane.b32.xlu0 %v555, 16
        %v589 = vpop.permute.xlu0 %588
        %592 = vrot.lane.b32.xlu0 %v538, 32
        %v593 = vpop.permute.xlu0 %592
        %596 = vrot.lane.b32.xlu0 %v556, 48
        %v597 = vpop.permute.xlu0 %596
        %600 = vrot.lane.b32.xlu0 %v547, 64
        %v601 = vpop.permute.xlu0 %600
        %604 = vrot.lane.b32.xlu0 %v557, 80
        %v605 = vpop.permute.xlu0 %604
        %608 = vrot.lane.b32.xlu0 %v554, 96
        %v609 = vpop.permute.xlu0 %608
        %612 = vrot.lane.b32.xlu0 %v558, 112
        %v613 = vpop.permute.xlu0 %612
        %vm615 = vcmask 130048
        %v616 = vsel %vm615, %v463, %v561
        %vm617 = vcmask 261120
        %v618 = vsel %vm617, %v616, %v565
        %vm619 = vcmask 392192
        %v620 = vsel %vm619, %v618, %v569
        %vm621 = vcmask 523264
        %v622 = vsel %vm621, %v620, %v573
        %vm623 = vcmask 654336
        %v624 = vsel %vm623, %v622, %v577
        %vm625 = vcmask 785408
        %v626 = vsel %vm625, %v624, %v581
        %vm627 = vcmask 916480
        %v628 = vsel %vm627, %v626, %v585
        %v629 = vsel %vm615, %v531, %v589
        %v630 = vsel %vm617, %v629, %v593
        %v631 = vsel %vm619, %v630, %v597
        %v632 = vsel %vm621, %v631, %v601
        %v633 = vsel %vm623, %v632, %v605
        %v634 = vsel %vm625, %v633, %v609
        %v635 = vsel %vm627, %v634, %v613
        %v636 = vld [vmem:[#allocation4] sm:$0xf]
        %645 = vrot.lane.b32.xlu0 %v411, 127
        %v646 = vpop.permute.xlu0 %645
        %647 = vrot.lane.b32.xlu0 %v412, 127
        %v648 = vpop.permute.xlu0 %647
        %649 = vrot.lane.b32.xlu0 %v414, 127
        %v650 = vpop.permute.xlu0 %649
        %651 = vrot.lane.b32.xlu0 %v415, 127
        %v652 = vpop.permute.xlu0 %651
        %653 = vrot.lane.b32.xlu0 %v417, 127
        %v654 = vpop.permute.xlu0 %653
        %655 = vrot.lane.b32.xlu0 %v418, 127
        %v656 = vpop.permute.xlu0 %655
        %657 = vrot.lane.b32.xlu0 %v420, 127
        %v658 = vpop.permute.xlu0 %657
        %659 = vrot.lane.b32.xlu0 %v421, 127
        %v660 = vpop.permute.xlu0 %659
        %v669 = vcombine.low %v646, %v654
        %v670 = vcombine.high %v646, %v654
        %v672 = vunpack.c.l.s4 1983009808
        %v673 = vunpack.c.0.s8 %v672
        %v674 = vlaneseq
        %v675 = vshrl.u32 %v674, 7
        %v676 = vsub.s32 %v673, %v675
        %v677 = vrot.slane %v669, %v676
        %v679 = vunpack.c.l.s4 1983009808
        %v680 = vunpack.c.0.s8 %v679
        %v681 = vlaneseq
        %v682 = vshrl.u32 %v681, 7
        %v683 = vsub.s32 %v680, %v682
        %v684 = vrot.slane %v670, %v683
        %v685 = vcombine.low %v650, %v658
        %v686 = vcombine.high %v650, %v658
        %v688 = vunpack.c.l.s4 1983009808
        %v689 = vunpack.c.0.s8 %v688
        %v690 = vlaneseq
        %v691 = vshrl.u32 %v690, 7
        %v692 = vsub.s32 %v689, %v691
        %v693 = vrot.slane %v685, %v692
        %v695 = vunpack.c.l.s4 1983009808
        %v696 = vunpack.c.0.s8 %v695
        %v697 = vlaneseq
        %v698 = vshrl.u32 %v697, 7
        %v699 = vsub.s32 %v696, %v698
        %v700 = vrot.slane %v686, %v699
        %v701 = vcombine.low %v677, %v693
        %v702 = vcombine.high %v677, %v693
        %v704 = vunpack.c.l.s4 1934713408
        %v705 = vunpack.c.0.s8 %v704
        %v706 = vlaneseq
        %v707 = vshrl.u32 %v706, 7
        %v708 = vsub.s32 %v705, %v707
        %v709 = vrot.slane %v701, %v708
        %v711 = vunpack.c.l.s4 1934713408
        %v712 = vunpack.c.0.s8 %v711
        %v713 = vlaneseq
        %v714 = vshrl.u32 %v713, 7
        %v715 = vsub.s32 %v712, %v714
        %v716 = vrot.slane %v702, %v715
        %v717 = vcombine.low %v684, %v700
        %v718 = vcombine.high %v684, %v700
        %v720 = vunpack.c.l.s4 1934713408
        %v721 = vunpack.c.0.s8 %v720
        %v722 = vlaneseq
        %v723 = vshrl.u32 %v722, 7
        %v724 = vsub.s32 %v721, %v723
        %v725 = vrot.slane %v717, %v724
        %v727 = vunpack.c.l.s4 1934713408
        %v728 = vunpack.c.0.s8 %v727
        %v729 = vlaneseq
        %v730 = vshrl.u32 %v729, 7
        %v731 = vsub.s32 %v728, %v730
        %v732 = vrot.slane %v718, %v731
        %v733 = vcombine.high %v709, 0.0
        %v734 = vcombine.high %v716, 0.0
        %v735 = vcombine.high %v725, 0.0
        %v736 = vcombine.high %v732, 0.0
        %v737 = vcombine.low %v648, %v656
        %v738 = vcombine.high %v648, %v656
        %v740 = vunpack.c.l.s4 1983009808
        %v741 = vunpack.c.0.s8 %v740
        %v742 = vlaneseq
        %v743 = vshrl.u32 %v742, 7
        %v744 = vsub.s32 %v741, %v743
        %v745 = vrot.slane %v737, %v744
        %v747 = vunpack.c.l.s4 1983009808
        %v748 = vunpack.c.0.s8 %v747
        %v749 = vlaneseq
        %v750 = vshrl.u32 %v749, 7
        %v751 = vsub.s32 %v748, %v750
        %v752 = vrot.slane %v738, %v751
        %v753 = vcombine.low %v652, %v660
        %v754 = vcombine.high %v652, %v660
        %v756 = vunpack.c.l.s4 1983009808
        %v757 = vunpack.c.0.s8 %v756
        %v758 = vlaneseq
        %v759 = vshrl.u32 %v758, 7
        %v760 = vsub.s32 %v757, %v759
        %v761 = vrot.slane %v753, %v760
        %v763 = vunpack.c.l.s4 1983009808
        %v764 = vunpack.c.0.s8 %v763
        %v765 = vlaneseq
        %v766 = vshrl.u32 %v765, 7
        %v767 = vsub.s32 %v764, %v766
        %v768 = vrot.slane %v754, %v767
        %v769 = vcombine.low %v745, %v761
        %v770 = vcombine.high %v745, %v761
        %v772 = vunpack.c.l.s4 1934713408
        %v773 = vunpack.c.0.s8 %v772
        %v774 = vlaneseq
        %v775 = vshrl.u32 %v774, 7
        %v776 = vsub.s32 %v773, %v775
        %v777 = vrot.slane %v769, %v776
        %v779 = vunpack.c.l.s4 1934713408
        %v780 = vunpack.c.0.s8 %v779
        %v781 = vlaneseq
        %v782 = vshrl.u32 %v781, 7
        %v783 = vsub.s32 %v780, %v782
        %v784 = vrot.slane %v770, %v783
        %v785 = vcombine.low %v752, %v768
        %v786 = vcombine.high %v752, %v768
        %v788 = vunpack.c.l.s4 1934713408
        %v789 = vunpack.c.0.s8 %v788
        %v790 = vlaneseq
        %v791 = vshrl.u32 %v790, 7
        %v792 = vsub.s32 %v789, %v791
        %v793 = vrot.slane %v785, %v792
        %v795 = vunpack.c.l.s4 1934713408
        %v796 = vunpack.c.0.s8 %v795
        %v797 = vlaneseq
        %v798 = vshrl.u32 %v797, 7
        %v799 = vsub.s32 %v796, %v798
        %v800 = vrot.slane %v786, %v799
        %v801 = vcombine.high %v777, 0.0
        %v802 = vcombine.high %v784, 0.0
        %v803 = vcombine.high %v793, 0.0
        %v804 = vcombine.high %v800, 0.0
        %806 = vrot.lane.b32.xlu0 %v733, 16
        %v807 = vpop.permute.xlu0 %806
        %810 = vrot.lane.b32.xlu0 %v716, 32
        %v811 = vpop.permute.xlu0 %810
        %814 = vrot.lane.b32.xlu0 %v734, 48
        %v815 = vpop.permute.xlu0 %814
        %818 = vrot.lane.b32.xlu0 %v725, 64
        %v819 = vpop.permute.xlu0 %818
        %822 = vrot.lane.b32.xlu0 %v735, 80
        %v823 = vpop.permute.xlu0 %822
        %826 = vrot.lane.b32.xlu0 %v732, 96
        %v827 = vpop.permute.xlu0 %826
        %830 = vrot.lane.b32.xlu0 %v736, 112
        %v831 = vpop.permute.xlu0 %830
        %834 = vrot.lane.b32.xlu0 %v801, 16
        %v835 = vpop.permute.xlu0 %834
        %838 = vrot.lane.b32.xlu0 %v784, 32
        %v839 = vpop.permute.xlu0 %838
        %842 = vrot.lane.b32.xlu0 %v802, 48
        %v843 = vpop.permute.xlu0 %842
        %846 = vrot.lane.b32.xlu0 %v793, 64
        %v847 = vpop.permute.xlu0 %846
        %850 = vrot.lane.b32.xlu0 %v803, 80
        %v851 = vpop.permute.xlu0 %850
        %854 = vrot.lane.b32.xlu0 %v800, 96
        %v855 = vpop.permute.xlu0 %854
        %858 = vrot.lane.b32.xlu0 %v804, 112
        %v859 = vpop.permute.xlu0 %858
        %v861 = vsel %vm615, %v709, %v807
        %v862 = vsel %vm617, %v861, %v811
        %v863 = vsel %vm619, %v862, %v815
        %v864 = vsel %vm621, %v863, %v819
        %v865 = vsel %vm623, %v864, %v823
        %v866 = vsel %vm625, %v865, %v827
        %v867 = vsel %vm627, %v866, %v831
        %v868 = vsel %vm615, %v777, %v835
        %v869 = vsel %vm617, %v868, %v839
        %v870 = vsel %vm619, %v869, %v843
        %v871 = vsel %vm621, %v870, %v847
        %v872 = vsel %vm623, %v871, %v851
        %v873 = vsel %vm625, %v872, %v855
        %v874 = vsel %vm627, %v873, %v859
        %s875 = scalar_lea.vmem [#allocation4], 4
        %v876 = vld [vmem:[%s875] sm:$0xf]
        %vm877 = vcmask 31744
        %v879 = vsel %vm877, %v876, 0
        %vm881 = vcmask 1043456
        %v883 = vsel %vm881, %v867, 0
        %v886 = vsel %vm881, %v874, 0
        %888 = vmatprep.subr.mxu0 %v886
        %889 = vmatpush1.msra.mxu0 %v883
        %890 = vmatprep.subr.mxu0 0.0
        %891 = vmatpush1.msra.mxu0 0.0
        %892 = vmatprep.subr.mxu0 0.0
        %893 = vmatpush1.msra.mxu0 0.0
        %894 = vmatprep.subr.mxu0 0.0
        %895 = vmatpush1.msra.mxu0 0.0
        %896 = vmatprep.subr.mxu0 0.0
        %897 = vmatpush1.msra.mxu0 0.0
        %898 = vmatprep.subr.mxu0 0.0
        %899 = vmatpush1.msra.mxu0 0.0
        %900 = vmatprep.subr.mxu0 0.0
        %901 = vmatpush1.msra.mxu0 0.0
        %902 = vmatprep.subr.mxu0 0.0
        %903 = vmatpush1.msra.mxu0 0.0
        %904 = vmatprep.subr.mxu0 0.0
        %905 = vmatpush1.msra.mxu0 0.0
        %906 = vmatprep.subr.mxu0 0.0
        %907 = vmatpush1.msra.mxu0 0.0
        %908 = vmatprep.subr.mxu0 0.0
        %909 = vmatpush1.msra.mxu0 0.0
        %910 = vmatprep.subr.mxu0 0.0
        %911 = vmatpush1.msra.mxu0 0.0
        %912 = vmatprep.subr.mxu0 0.0
        %913 = vmatpush1.msra.mxu0 0.0
        %914 = vmatprep.subr.mxu0 0.0
        %915 = vmatpush1.msra.mxu0 0.0
        %916 = vmatprep.subr.mxu0 0.0
        %917 = vmatpush1.msra.mxu0 0.0
        %918 = vmatprep.subr.mxu0 0.0
        %919 = vmatpush1.msra.mxu0 0.0
        %920 = vmatprep.subr.mxu0 0.0
        %921 = vmatpush1.msra.mxu0 0.0
        %922 = vmatprep.subr.mxu0 0.0
        %923 = vmatpush1.msra.mxu0 0.0
        %924 = vmatprep.subr.mxu0 0.0
        %925 = vmatpush1.msra.mxu0 0.0
        %926 = vmatprep.subr.mxu0 0.0
        %927 = vmatpush1.msra.mxu0 0.0
        %928 = vmatprep.subr.mxu0 0.0
        %929 = vmatpush1.msra.mxu0 0.0
        %930 = vmatprep.subr.mxu0 0.0
        %931 = vmatpush1.msra.mxu0 0.0
        %932 = vmatprep.subr.mxu0 0.0
        %933 = vmatpush1.msra.mxu0 0.0
        %934 = vmatprep.subr.mxu0 0.0
        %935 = vmatpush1.msra.mxu0 0.0
        %936 = vmatprep.subr.mxu0 0.0
        %937 = vmatpush1.msra.mxu0 0.0
        %938 = vmatprep.subr.mxu0 0.0
        %939 = vmatpush1.msra.mxu0 0.0
        %940 = vmatprep.subr.mxu0 0.0
        %941 = vmatpush1.msra.mxu0 0.0
        %942 = vmatprep.subr.mxu0 0.0
        %943 = vmatpush1.msra.mxu0 0.0
        %944 = vmatprep.subr.mxu0 0.0
        %945 = vmatpush1.msra.mxu0 0.0
        %946 = vmatprep.subr.mxu0 0.0
        %947 = vmatpush1.msra.mxu0 0.0
        %948 = vmatprep.subr.mxu0 0.0
        %949 = vmatpush1.msra.mxu0 0.0
        %950 = vmatprep.subr.mxu0 0.0
        %951 = vmatpush1.msra.mxu0 0.0
        %952 = vmatprep.mubr.f32.mxu0 0.0
        %953 = vmatmul.mubr.f32.gmra.mrb[0].mxu0 %v879
        %v954 = vpop.f32.mrb[0].mxu0
        %v955 = vadd.f32 0.0, %v954
        %v956 = vpop.f32.mrb[0].mxu0
        %v957 = vadd.f32 0.0, %v956
        %958 = vdwg.mxu0
        %v960 = vsel %vm877, %v636, 0
        %v963 = vsel %vm881, %v628, 0
        %v966 = vsel %vm881, %v635, 0
        %968 = vmatprep.subr.mxu0 %v966
        %969 = vmatpush1.msra.mxu0 %v963
        %970 = vmatprep.subr.mxu0 0.0
        %971 = vmatpush1.msra.mxu0 0.0
        %972 = vmatprep.subr.mxu0 0.0
        %973 = vmatpush1.msra.mxu0 0.0
        %974 = vmatprep.subr.mxu0 0.0
        %975 = vmatpush1.msra.mxu0 0.0
        %976 = vmatprep.subr.mxu0 0.0
        %977 = vmatpush1.msra.mxu0 0.0
        %978 = vmatprep.subr.mxu0 0.0
        %979 = vmatpush1.msra.mxu0 0.0
        %980 = vmatprep.subr.mxu0 0.0
        %981 = vmatpush1.msra.mxu0 0.0
        %982 = vmatprep.subr.mxu0 0.0
        %983 = vmatpush1.msra.mxu0 0.0
        %984 = vmatprep.subr.mxu0 0.0
        %985 = vmatpush1.msra.mxu0 0.0
        %986 = vmatprep.subr.mxu0 0.0
        %987 = vmatpush1.msra.mxu0 0.0
        %988 = vmatprep.subr.mxu0 0.0
        %989 = vmatpush1.msra.mxu0 0.0
        %990 = vmatprep.subr.mxu0 0.0
        %991 = vmatpush1.msra.mxu0 0.0
        %992 = vmatprep.subr.mxu0 0.0
        %993 = vmatpush1.msra.mxu0 0.0
        %994 = vmatprep.subr.mxu0 0.0
        %995 = vmatpush1.msra.mxu0 0.0
        %996 = vmatprep.subr.mxu0 0.0
        %997 = vmatpush1.msra.mxu0 0.0
        %998 = vmatprep.subr.mxu0 0.0
        %999 = vmatpush1.msra.mxu0 0.0
        %1000 = vmatprep.subr.mxu0 0.0
        %1001 = vmatpush1.msra.mxu0 0.0
        %1002 = vmatprep.subr.mxu0 0.0
        %1003 = vmatpush1.msra.mxu0 0.0
        %1004 = vmatprep.subr.mxu0 0.0
        %1005 = vmatpush1.msra.mxu0 0.0
        %1006 = vmatprep.subr.mxu0 0.0
        %1007 = vmatpush1.msra.mxu0 0.0
        %1008 = vmatprep.subr.mxu0 0.0
        %1009 = vmatpush1.msra.mxu0 0.0
        %1010 = vmatprep.subr.mxu0 0.0
        %1011 = vmatpush1.msra.mxu0 0.0
        %1012 = vmatprep.subr.mxu0 0.0
        %1013 = vmatpush1.msra.mxu0 0.0
        %1014 = vmatprep.subr.mxu0 0.0
        %1015 = vmatpush1.msra.mxu0 0.0
        %1016 = vmatprep.subr.mxu0 0.0
        %1017 = vmatpush1.msra.mxu0 0.0
        %1018 = vmatprep.subr.mxu0 0.0
        %1019 = vmatpush1.msra.mxu0 0.0
        %1020 = vmatprep.subr.mxu0 0.0
        %1021 = vmatpush1.msra.mxu0 0.0
        %1022 = vmatprep.subr.mxu0 0.0
        %1023 = vmatpush1.msra.mxu0 0.0
        %1024 = vmatprep.subr.mxu0 0.0
        %1025 = vmatpush1.msra.mxu0 0.0
        %1026 = vmatprep.subr.mxu0 0.0
        %1027 = vmatpush1.msra.mxu0 0.0
        %1028 = vmatprep.subr.mxu0 0.0
        %1029 = vmatpush1.msra.mxu0 0.0
        %1030 = vmatprep.subr.mxu0 0.0
        %1031 = vmatpush1.msra.mxu0 0.0
        %1032 = vmatprep.mubr.f32.mxu0 0.0
        %1033 = vmatmul.mubr.f32.gmra.mrb[0].mxu0 %v960
        %v1034 = vpop.f32.mrb[0].mxu0
        %v1035 = vadd.f32 %v955, %v1034
        %v1036 = vpop.f32.mrb[0].mxu0
        %v1037 = vadd.f32 %v957, %v1036
        %1038 = vdwg.mxu0
        %1039 = vrot.lane.b32.xlu0 %v411, 126
        %v1040 = vpop.permute.xlu0 %1039
        %1041 = vrot.lane.b32.xlu0 %v412, 126
        %v1042 = vpop.permute.xlu0 %1041
        %1043 = vrot.lane.b32.xlu0 %v414, 126
        %v1044 = vpop.permute.xlu0 %1043
        %1045 = vrot.lane.b32.xlu0 %v415, 126
        %v1046 = vpop.permute.xlu0 %1045
        %1047 = vrot.lane.b32.xlu0 %v417, 126
        %v1048 = vpop.permute.xlu0 %1047
        %1049 = vrot.lane.b32.xlu0 %v418, 126
        %v1050 = vpop.permute.xlu0 %1049
        %1051 = vrot.lane.b32.xlu0 %v420, 126
        %v1052 = vpop.permute.xlu0 %1051
        %1053 = vrot.lane.b32.xlu0 %v421, 126
        %v1054 = vpop.permute.xlu0 %1053
        %v1063 = vcombine.low %v1040, %v1048
        %v1064 = vcombine.high %v1040, %v1048
        %v1066 = vunpack.c.l.s4 1983009808
        %v1067 = vunpack.c.0.s8 %v1066
        %v1068 = vlaneseq
        %v1069 = vshrl.u32 %v1068, 7
        %v1070 = vsub.s32 %v1067, %v1069
        %v1071 = vrot.slane %v1063, %v1070
        %v1073 = vunpack.c.l.s4 1983009808
        %v1074 = vunpack.c.0.s8 %v1073
        %v1075 = vlaneseq
        %v1076 = vshrl.u32 %v1075, 7
        %v1077 = vsub.s32 %v1074, %v1076
        %v1078 = vrot.slane %v1064, %v1077
        %v1079 = vcombine.low %v1044, %v1052
        %v1080 = vcombine.high %v1044, %v1052
        %v1082 = vunpack.c.l.s4 1983009808
        %v1083 = vunpack.c.0.s8 %v1082
        %v1084 = vlaneseq
        %v1085 = vshrl.u32 %v1084, 7
        %v1086 = vsub.s32 %v1083, %v1085
        %v1087 = vrot.slane %v1079, %v1086
        %v1089 = vunpack.c.l.s4 1983009808
        %v1090 = vunpack.c.0.s8 %v1089
        %v1091 = vlaneseq
        %v1092 = vshrl.u32 %v1091, 7
        %v1093 = vsub.s32 %v1090, %v1092
        %v1094 = vrot.slane %v1080, %v1093
        %v1095 = vcombine.low %v1071, %v1087
        %v1096 = vcombine.high %v1071, %v1087
        %v1098 = vunpack.c.l.s4 1934713408
        %v1099 = vunpack.c.0.s8 %v1098
        %v1100 = vlaneseq
        %v1101 = vshrl.u32 %v1100, 7
        %v1102 = vsub.s32 %v1099, %v1101
        %v1103 = vrot.slane %v1095, %v1102
        %v1105 = vunpack.c.l.s4 1934713408
        %v1106 = vunpack.c.0.s8 %v1105
        %v1107 = vlaneseq
        %v1108 = vshrl.u32 %v1107, 7
        %v1109 = vsub.s32 %v1106, %v1108
        %v1110 = vrot.slane %v1096, %v1109
        %v1111 = vcombine.low %v1078, %v1094
        %v1112 = vcombine.high %v1078, %v1094
        %v1114 = vunpack.c.l.s4 1934713408
        %v1115 = vunpack.c.0.s8 %v1114
        %v1116 = vlaneseq
        %v1117 = vshrl.u32 %v1116, 7
        %v1118 = vsub.s32 %v1115, %v1117
        %v1119 = vrot.slane %v1111, %v1118
        %v1121 = vunpack.c.l.s4 1934713408
        %v1122 = vunpack.c.0.s8 %v1121
        %v1123 = vlaneseq
        %v1124 = vshrl.u32 %v1123, 7
        %v1125 = vsub.s32 %v1122, %v1124
        %v1126 = vrot.slane %v1112, %v1125
        %v1127 = vcombine.high %v1103, 0.0
        %v1128 = vcombine.high %v1110, 0.0
        %v1129 = vcombine.high %v1119, 0.0
        %v1130 = vcombine.high %v1126, 0.0
        %v1131 = vcombine.low %v1042, %v1050
        %v1132 = vcombine.high %v1042, %v1050
        %v1134 = vunpack.c.l.s4 1983009808
        %v1135 = vunpack.c.0.s8 %v1134
        %v1136 = vlaneseq
        %v1137 = vshrl.u32 %v1136, 7
        %v1138 = vsub.s32 %v1135, %v1137
        %v1139 = vrot.slane %v1131, %v1138
        %v1141 = vunpack.c.l.s4 1983009808
        %v1142 = vunpack.c.0.s8 %v1141
        %v1143 = vlaneseq
        %v1144 = vshrl.u32 %v1143, 7
        %v1145 = vsub.s32 %v1142, %v1144
        %v1146 = vrot.slane %v1132, %v1145
        %v1147 = vcombine.low %v1046, %v1054
        %v1148 = vcombine.high %v1046, %v1054
        %v1150 = vunpack.c.l.s4 1983009808
        %v1151 = vunpack.c.0.s8 %v1150
        %v1152 = vlaneseq
        %v1153 = vshrl.u32 %v1152, 7
        %v1154 = vsub.s32 %v1151, %v1153
        %v1155 = vrot.slane %v1147, %v1154
        %v1157 = vunpack.c.l.s4 1983009808
        %v1158 = vunpack.c.0.s8 %v1157
        %v1159 = vlaneseq
        %v1160 = vshrl.u32 %v1159, 7
        %v1161 = vsub.s32 %v1158, %v1160
        %v1162 = vrot.slane %v1148, %v1161
        %v1163 = vcombine.low %v1139, %v1155
        %v1164 = vcombine.high %v1139, %v1155
        %v1166 = vunpack.c.l.s4 1934713408
        %v1167 = vunpack.c.0.s8 %v1166
        %v1168 = vlaneseq
        %v1169 = vshrl.u32 %v1168, 7
        %v1170 = vsub.s32 %v1167, %v1169
        %v1171 = vrot.slane %v1163, %v1170
        %v1173 = vunpack.c.l.s4 1934713408
        %v1174 = vunpack.c.0.s8 %v1173
        %v1175 = vlaneseq
        %v1176 = vshrl.u32 %v1175, 7
        %v1177 = vsub.s32 %v1174, %v1176
        %v1178 = vrot.slane %v1164, %v1177
        %v1179 = vcombine.low %v1146, %v1162
        %v1180 = vcombine.high %v1146, %v1162
        %v1182 = vunpack.c.l.s4 1934713408
        %v1183 = vunpack.c.0.s8 %v1182
        %v1184 = vlaneseq
        %v1185 = vshrl.u32 %v1184, 7
        %v1186 = vsub.s32 %v1183, %v1185
        %v1187 = vrot.slane %v1179, %v1186
        %v1189 = vunpack.c.l.s4 1934713408
        %v1190 = vunpack.c.0.s8 %v1189
        %v1191 = vlaneseq
        %v1192 = vshrl.u32 %v1191, 7
        %v1193 = vsub.s32 %v1190, %v1192
        %v1194 = vrot.slane %v1180, %v1193
        %v1195 = vcombine.high %v1171, 0.0
        %v1196 = vcombine.high %v1178, 0.0
        %v1197 = vcombine.high %v1187, 0.0
        %v1198 = vcombine.high %v1194, 0.0
        %1200 = vrot.lane.b32.xlu0 %v1127, 16
        %v1201 = vpop.permute.xlu0 %1200
        %1204 = vrot.lane.b32.xlu0 %v1110, 32
        %v1205 = vpop.permute.xlu0 %1204
        %1208 = vrot.lane.b32.xlu0 %v1128, 48
        %v1209 = vpop.permute.xlu0 %1208
        %1212 = vrot.lane.b32.xlu0 %v1119, 64
        %v1213 = vpop.permute.xlu0 %1212
        %1216 = vrot.lane.b32.xlu0 %v1129, 80
        %v1217 = vpop.permute.xlu0 %1216
        %1220 = vrot.lane.b32.xlu0 %v1126, 96
        %v1221 = vpop.permute.xlu0 %1220
        %1224 = vrot.lane.b32.xlu0 %v1130, 112
        %v1225 = vpop.permute.xlu0 %1224
        %1228 = vrot.lane.b32.xlu0 %v1195, 16
        %v1229 = vpop.permute.xlu0 %1228
        %1232 = vrot.lane.b32.xlu0 %v1178, 32
        %v1233 = vpop.permute.xlu0 %1232
        %1236 = vrot.lane.b32.xlu0 %v1196, 48
        %v1237 = vpop.permute.xlu0 %1236
        %1240 = vrot.lane.b32.xlu0 %v1187, 64
        %v1241 = vpop.permute.xlu0 %1240
        %1244 = vrot.lane.b32.xlu0 %v1197, 80
        %v1245 = vpop.permute.xlu0 %1244
        %1248 = vrot.lane.b32.xlu0 %v1194, 96
        %v1249 = vpop.permute.xlu0 %1248
        %1252 = vrot.lane.b32.xlu0 %v1198, 112
        %v1253 = vpop.permute.xlu0 %1252
        %v1255 = vsel %vm615, %v1103, %v1201
        %v1256 = vsel %vm617, %v1255, %v1205
        %v1257 = vsel %vm619, %v1256, %v1209
        %v1258 = vsel %vm621, %v1257, %v1213
        %v1259 = vsel %vm623, %v1258, %v1217
        %v1260 = vsel %vm625, %v1259, %v1221
        %v1261 = vsel %vm627, %v1260, %v1225
        %v1262 = vsel %vm615, %v1171, %v1229
        %v1263 = vsel %vm617, %v1262, %v1233
        %v1264 = vsel %vm619, %v1263, %v1237
        %v1265 = vsel %vm621, %v1264, %v1241
        %v1266 = vsel %vm623, %v1265, %v1245
        %v1267 = vsel %vm625, %v1266, %v1249
        %v1268 = vsel %vm627, %v1267, %v1253
        %s1269 = scalar_lea.vmem [#allocation4], 8
        %v1270 = vld [vmem:[%s1269] sm:$0xf]
        %v1272 = vsel %vm877, %v1270, 0
        %v1275 = vsel %vm881, %v1261, 0
        %v1278 = vsel %vm881, %v1268, 0
        %1280 = vmatprep.subr.mxu0 %v1278
        %1281 = vmatpush1.msra.mxu0 %v1275
        %1282 = vmatprep.subr.mxu0 0.0
        %1283 = vmatpush1.msra.mxu0 0.0
        %1284 = vmatprep.subr.mxu0 0.0
        %1285 = vmatpush1.msra.mxu0 0.0
        %1286 = vmatprep.subr.mxu0 0.0
        %1287 = vmatpush1.msra.mxu0 0.0
        %1288 = vmatprep.subr.mxu0 0.0
        %1289 = vmatpush1.msra.mxu0 0.0
        %1290 = vmatprep.subr.mxu0 0.0
        %1291 = vmatpush1.msra.mxu0 0.0
        %1292 = vmatprep.subr.mxu0 0.0
        %1293 = vmatpush1.msra.mxu0 0.0
        %1294 = vmatprep.subr.mxu0 0.0
        %1295 = vmatpush1.msra.mxu0 0.0
        %1296 = vmatprep.subr.mxu0 0.0
        %1297 = vmatpush1.msra.mxu0 0.0
        %1298 = vmatprep.subr.mxu0 0.0
        %1299 = vmatpush1.msra.mxu0 0.0
        %1300 = vmatprep.subr.mxu0 0.0
        %1301 = vmatpush1.msra.mxu0 0.0
        %1302 = vmatprep.subr.mxu0 0.0
        %1303 = vmatpush1.msra.mxu0 0.0
        %1304 = vmatprep.subr.mxu0 0.0
        %1305 = vmatpush1.msra.mxu0 0.0
        %1306 = vmatprep.subr.mxu0 0.0
        %1307 = vmatpush1.msra.mxu0 0.0
        %1308 = vmatprep.subr.mxu0 0.0
        %1309 = vmatpush1.msra.mxu0 0.0
        %1310 = vmatprep.subr.mxu0 0.0
        %1311 = vmatpush1.msra.mxu0 0.0
        %1312 = vmatprep.subr.mxu0 0.0
        %1313 = vmatpush1.msra.mxu0 0.0
        %1314 = vmatprep.subr.mxu0 0.0
        %1315 = vmatpush1.msra.mxu0 0.0
        %1316 = vmatprep.subr.mxu0 0.0
        %1317 = vmatpush1.msra.mxu0 0.0
        %1318 = vmatprep.subr.mxu0 0.0
        %1319 = vmatpush1.msra.mxu0 0.0
        %1320 = vmatprep.subr.mxu0 0.0
        %1321 = vmatpush1.msra.mxu0 0.0
        %1322 = vmatprep.subr.mxu0 0.0
        %1323 = vmatpush1.msra.mxu0 0.0
        %1324 = vmatprep.subr.mxu0 0.0
        %1325 = vmatpush1.msra.mxu0 0.0
        %1326 = vmatprep.subr.mxu0 0.0
        %1327 = vmatpush1.msra.mxu0 0.0
        %1328 = vmatprep.subr.mxu0 0.0
        %1329 = vmatpush1.msra.mxu0 0.0
        %1330 = vmatprep.subr.mxu0 0.0
        %1331 = vmatpush1.msra.mxu0 0.0
        %1332 = vmatprep.subr.mxu0 0.0
        %1333 = vmatpush1.msra.mxu0 0.0
        %1334 = vmatprep.subr.mxu0 0.0
        %1335 = vmatpush1.msra.mxu0 0.0
        %1336 = vmatprep.subr.mxu0 0.0
        %1337 = vmatpush1.msra.mxu0 0.0
        %1338 = vmatprep.subr.mxu0 0.0
        %1339 = vmatpush1.msra.mxu0 0.0
        %1340 = vmatprep.subr.mxu0 0.0
        %1341 = vmatpush1.msra.mxu0 0.0
        %1342 = vmatprep.subr.mxu0 0.0
        %1343 = vmatpush1.msra.mxu0 0.0
        %1344 = vmatprep.mubr.f32.mxu0 0.0
        %1345 = vmatmul.mubr.f32.gmra.mrb[0].mxu0 %v1272
        %v1346 = vpop.f32.mrb[0].mxu0
        %v1347 = vadd.f32 0.0, %v1346
        %v1348 = vpop.f32.mrb[0].mxu0
        %v1349 = vadd.f32 0.0, %v1348
        %1350 = vdwg.mxu0
        %v1351 = vadd.f32 %v1035, %v1347
        %v1352 = vadd.f32 %v1037, %v1349
        %vm1357 = vcmask 1046528
        %v1358 = vrot.slane %v411, 1
        %v1359 = vrot.slane %v412, 1
        %v1360 = vsel %vm1357, %v1358, %v1359
        %v1361 = vrot.slane %v413, 1
        %v1362 = vsel %vm1357, %v1359, %v1361
        %v1363 = vrot.slane %v414, 1
        %v1364 = vrot.slane %v415, 1
        %v1365 = vsel %vm1357, %v1363, %v1364
        %v1366 = vrot.slane %v416, 1
        %v1367 = vsel %vm1357, %v1364, %v1366
        %v1368 = vrot.slane %v417, 1
        %v1369 = vrot.slane %v418, 1
        %v1370 = vsel %vm1357, %v1368, %v1369
        %v1371 = vrot.slane %v419, 1
        %v1372 = vsel %vm1357, %v1369, %v1371
        %v1373 = vrot.slane %v420, 1
        %v1374 = vrot.slane %v421, 1
        %v1375 = vsel %vm1357, %v1373, %v1374
        %v1376 = vrot.slane %v422, 1
        %v1377 = vsel %vm1357, %v1374, %v1376
        %v1386 = vcombine.low %v1360, %v1370
        %v1387 = vcombine.high %v1360, %v1370
        %v1389 = vunpack.c.l.s4 1983009808
        %v1390 = vunpack.c.0.s8 %v1389
        %v1391 = vlaneseq
        %v1392 = vshrl.u32 %v1391, 7
        %v1393 = vsub.s32 %v1390, %v1392
        %v1394 = vrot.slane %v1386, %v1393
        %v1396 = vunpack.c.l.s4 1983009808
        %v1397 = vunpack.c.0.s8 %v1396
        %v1398 = vlaneseq
        %v1399 = vshrl.u32 %v1398, 7
        %v1400 = vsub.s32 %v1397, %v1399
        %v1401 = vrot.slane %v1387, %v1400
        %v1402 = vcombine.low %v1365, %v1375
        %v1403 = vcombine.high %v1365, %v1375
        %v1405 = vunpack.c.l.s4 1983009808
        %v1406 = vunpack.c.0.s8 %v1405
        %v1407 = vlaneseq
        %v1408 = vshrl.u32 %v1407, 7
        %v1409 = vsub.s32 %v1406, %v1408
        %v1410 = vrot.slane %v1402, %v1409
        %v1412 = vunpack.c.l.s4 1983009808
        %v1413 = vunpack.c.0.s8 %v1412
        %v1414 = vlaneseq
        %v1415 = vshrl.u32 %v1414, 7
        %v1416 = vsub.s32 %v1413, %v1415
        %v1417 = vrot.slane %v1403, %v1416
        %v1418 = vcombine.low %v1394, %v1410
        %v1419 = vcombine.high %v1394, %v1410
        %v1421 = vunpack.c.l.s4 1934713408
        %v1422 = vunpack.c.0.s8 %v1421
        %v1423 = vlaneseq
        %v1424 = vshrl.u32 %v1423, 7
        %v1425 = vsub.s32 %v1422, %v1424
        %v1426 = vrot.slane %v1418, %v1425
        %v1428 = vunpack.c.l.s4 1934713408
        %v1429 = vunpack.c.0.s8 %v1428
        %v1430 = vlaneseq
        %v1431 = vshrl.u32 %v1430, 7
        %v1432 = vsub.s32 %v1429, %v1431
        %v1433 = vrot.slane %v1419, %v1432
        %v1434 = vcombine.low %v1401, %v1417
        %v1435 = vcombine.high %v1401, %v1417
        %v1437 = vunpack.c.l.s4 1934713408
        %v1438 = vunpack.c.0.s8 %v1437
        %v1439 = vlaneseq
        %v1440 = vshrl.u32 %v1439, 7
        %v1441 = vsub.s32 %v1438, %v1440
        %v1442 = vrot.slane %v1434, %v1441
        %v1444 = vunpack.c.l.s4 1934713408
        %v1445 = vunpack.c.0.s8 %v1444
        %v1446 = vlaneseq
        %v1447 = vshrl.u32 %v1446, 7
        %v1448 = vsub.s32 %v1445, %v1447
        %v1449 = vrot.slane %v1435, %v1448
        %v1450 = vcombine.high %v1426, 0.0
        %v1451 = vcombine.high %v1433, 0.0
        %v1452 = vcombine.high %v1442, 0.0
        %v1453 = vcombine.high %v1449, 0.0
        %v1454 = vcombine.low %v1362, %v1372
        %v1455 = vcombine.high %v1362, %v1372
        %v1457 = vunpack.c.l.s4 1983009808
        %v1458 = vunpack.c.0.s8 %v1457
        %v1459 = vlaneseq
        %v1460 = vshrl.u32 %v1459, 7
        %v1461 = vsub.s32 %v1458, %v1460
        %v1462 = vrot.slane %v1454, %v1461
        %v1464 = vunpack.c.l.s4 1983009808
        %v1465 = vunpack.c.0.s8 %v1464
        %v1466 = vlaneseq
        %v1467 = vshrl.u32 %v1466, 7
        %v1468 = vsub.s32 %v1465, %v1467
        %v1469 = vrot.slane %v1455, %v1468
        %v1470 = vcombine.low %v1367, %v1377
        %v1471 = vcombine.high %v1367, %v1377
        %v1473 = vunpack.c.l.s4 1983009808
        %v1474 = vunpack.c.0.s8 %v1473
        %v1475 = vlaneseq
        %v1476 = vshrl.u32 %v1475, 7
        %v1477 = vsub.s32 %v1474, %v1476
        %v1478 = vrot.slane %v1470, %v1477
        %v1480 = vunpack.c.l.s4 1983009808
        %v1481 = vunpack.c.0.s8 %v1480
        %v1482 = vlaneseq
        %v1483 = vshrl.u32 %v1482, 7
        %v1484 = vsub.s32 %v1481, %v1483
        %v1485 = vrot.slane %v1471, %v1484
        %v1486 = vcombine.low %v1462, %v1478
        %v1487 = vcombine.high %v1462, %v1478
        %v1489 = vunpack.c.l.s4 1934713408
        %v1490 = vunpack.c.0.s8 %v1489
        %v1491 = vlaneseq
        %v1492 = vshrl.u32 %v1491, 7
        %v1493 = vsub.s32 %v1490, %v1492
        %v1494 = vrot.slane %v1486, %v1493
        %v1496 = vunpack.c.l.s4 1934713408
        %v1497 = vunpack.c.0.s8 %v1496
        %v1498 = vlaneseq
        %v1499 = vshrl.u32 %v1498, 7
        %v1500 = vsub.s32 %v1497, %v1499
        %v1501 = vrot.slane %v1487, %v1500
        %v1502 = vcombine.low %v1469, %v1485
        %v1503 = vcombine.high %v1469, %v1485
        %v1505 = vunpack.c.l.s4 1934713408
        %v1506 = vunpack.c.0.s8 %v1505
        %v1507 = vlaneseq
        %v1508 = vshrl.u32 %v1507, 7
        %v1509 = vsub.s32 %v1506, %v1508
        %v1510 = vrot.slane %v1502, %v1509
        %v1512 = vunpack.c.l.s4 1934713408
        %v1513 = vunpack.c.0.s8 %v1512
        %v1514 = vlaneseq
        %v1515 = vshrl.u32 %v1514, 7
        %v1516 = vsub.s32 %v1513, %v1515
        %v1517 = vrot.slane %v1503, %v1516
        %v1518 = vcombine.high %v1494, 0.0
        %v1519 = vcombine.high %v1501, 0.0
        %v1520 = vcombine.high %v1510, 0.0
        %v1521 = vcombine.high %v1517, 0.0
        %1523 = vrot.lane.b32.xlu0 %v1450, 16
        %v1524 = vpop.permute.xlu0 %1523
        %1527 = vrot.lane.b32.xlu0 %v1433, 32
        %v1528 = vpop.permute.xlu0 %1527
        %1531 = vrot.lane.b32.xlu0 %v1451, 48
        %v1532 = vpop.permute.xlu0 %1531
        %1535 = vrot.lane.b32.xlu0 %v1442, 64
        %v1536 = vpop.permute.xlu0 %1535
        %1539 = vrot.lane.b32.xlu0 %v1452, 80
        %v1540 = vpop.permute.xlu0 %1539
        %1543 = vrot.lane.b32.xlu0 %v1449, 96
        %v1544 = vpop.permute.xlu0 %1543
        %1547 = vrot.lane.b32.xlu0 %v1453, 112
        %v1548 = vpop.permute.xlu0 %1547
        %1551 = vrot.lane.b32.xlu0 %v1518, 16
        %v1552 = vpop.permute.xlu0 %1551
        %1555 = vrot.lane.b32.xlu0 %v1501, 32
        %v1556 = vpop.permute.xlu0 %1555
        %1559 = vrot.lane.b32.xlu0 %v1519, 48
        %v1560 = vpop.permute.xlu0 %1559
        %1563 = vrot.lane.b32.xlu0 %v1510, 64
        %v1564 = vpop.permute.xlu0 %1563
        %1567 = vrot.lane.b32.xlu0 %v1520, 80
        %v1568 = vpop.permute.xlu0 %1567
        %1571 = vrot.lane.b32.xlu0 %v1517, 96
        %v1572 = vpop.permute.xlu0 %1571
        %1575 = vrot.lane.b32.xlu0 %v1521, 112
        %v1576 = vpop.permute.xlu0 %1575
        %v1578 = vsel %vm615, %v1426, %v1524
        %v1579 = vsel %vm617, %v1578, %v1528
        %v1580 = vsel %vm619, %v1579, %v1532
        %v1581 = vsel %vm621, %v1580, %v1536
        %v1582 = vsel %vm623, %v1581, %v1540
        %v1583 = vsel %vm625, %v1582, %v1544
        %v1584 = vsel %vm627, %v1583, %v1548
        %v1585 = vsel %vm615, %v1494, %v1552
        %v1586 = vsel %vm617, %v1585, %v1556
        %v1587 = vsel %vm619, %v1586, %v1560
        %v1588 = vsel %vm621, %v1587, %v1564
        %v1589 = vsel %vm623, %v1588, %v1568
        %v1590 = vsel %vm625, %v1589, %v1572
        %v1591 = vsel %vm627, %v1590, %v1576
        %s1592 = scalar_lea.vmem [#allocation4], 12
        %v1593 = vld [vmem:[%s1592] sm:$0xf]
        %v1595 = vsel %vm877, %v1593, 0
        %v1598 = vsel %vm881, %v1584, 0
        %v1601 = vsel %vm881, %v1591, 0
        %1603 = vmatprep.subr.mxu0 %v1601
        %1604 = vmatpush1.msra.mxu0 %v1598
        %1605 = vmatprep.subr.mxu0 0.0
        %1606 = vmatpush1.msra.mxu0 0.0
        %1607 = vmatprep.subr.mxu0 0.0
        %1608 = vmatpush1.msra.mxu0 0.0
        %1609 = vmatprep.subr.mxu0 0.0
        %1610 = vmatpush1.msra.mxu0 0.0
        %1611 = vmatprep.subr.mxu0 0.0
        %1612 = vmatpush1.msra.mxu0 0.0
        %1613 = vmatprep.subr.mxu0 0.0
        %1614 = vmatpush1.msra.mxu0 0.0
        %1615 = vmatprep.subr.mxu0 0.0
        %1616 = vmatpush1.msra.mxu0 0.0
        %1617 = vmatprep.subr.mxu0 0.0
        %1618 = vmatpush1.msra.mxu0 0.0
        %1619 = vmatprep.subr.mxu0 0.0
        %1620 = vmatpush1.msra.mxu0 0.0
        %1621 = vmatprep.subr.mxu0 0.0
        %1622 = vmatpush1.msra.mxu0 0.0
        %1623 = vmatprep.subr.mxu0 0.0
        %1624 = vmatpush1.msra.mxu0 0.0
        %1625 = vmatprep.subr.mxu0 0.0
        %1626 = vmatpush1.msra.mxu0 0.0
        %1627 = vmatprep.subr.mxu0 0.0
        %1628 = vmatpush1.msra.mxu0 0.0
        %1629 = vmatprep.subr.mxu0 0.0
        %1630 = vmatpush1.msra.mxu0 0.0
        %1631 = vmatprep.subr.mxu0 0.0
        %1632 = vmatpush1.msra.mxu0 0.0
        %1633 = vmatprep.subr.mxu0 0.0
        %1634 = vmatpush1.msra.mxu0 0.0
        %1635 = vmatprep.subr.mxu0 0.0
        %1636 = vmatpush1.msra.mxu0 0.0
        %1637 = vmatprep.subr.mxu0 0.0
        %1638 = vmatpush1.msra.mxu0 0.0
        %1639 = vmatprep.subr.mxu0 0.0
        %1640 = vmatpush1.msra.mxu0 0.0
        %1641 = vmatprep.subr.mxu0 0.0
        %1642 = vmatpush1.msra.mxu0 0.0
        %1643 = vmatprep.subr.mxu0 0.0
        %1644 = vmatpush1.msra.mxu0 0.0
        %1645 = vmatprep.subr.mxu0 0.0
        %1646 = vmatpush1.msra.mxu0 0.0
        %1647 = vmatprep.subr.mxu0 0.0
        %1648 = vmatpush1.msra.mxu0 0.0
        %1649 = vmatprep.subr.mxu0 0.0
        %1650 = vmatpush1.msra.mxu0 0.0
        %1651 = vmatprep.subr.mxu0 0.0
        %1652 = vmatpush1.msra.mxu0 0.0
        %1653 = vmatprep.subr.mxu0 0.0
        %1654 = vmatpush1.msra.mxu0 0.0
        %1655 = vmatprep.subr.mxu0 0.0
        %1656 = vmatpush1.msra.mxu0 0.0
        %1657 = vmatprep.subr.mxu0 0.0
        %1658 = vmatpush1.msra.mxu0 0.0
        %1659 = vmatprep.subr.mxu0 0.0
        %1660 = vmatpush1.msra.mxu0 0.0
        %1661 = vmatprep.subr.mxu0 0.0
        %1662 = vmatpush1.msra.mxu0 0.0
        %1663 = vmatprep.subr.mxu0 0.0
        %1664 = vmatpush1.msra.mxu0 0.0
        %1665 = vmatprep.subr.mxu0 0.0
        %1666 = vmatpush1.msra.mxu0 0.0
        %1667 = vmatprep.mubr.f32.mxu0 0.0
        %1668 = vmatmul.mubr.f32.gmra.mrb[0].mxu0 %v1595
        %v1669 = vpop.f32.mrb[0].mxu0
        %v1670 = vadd.f32 0.0, %v1669
        %v1671 = vpop.f32.mrb[0].mxu0
        %v1672 = vadd.f32 0.0, %v1671
        %1673 = vdwg.mxu0
        %v1674 = vadd.f32 %v1351, %v1670
        %v1675 = vadd.f32 %v1352, %v1672
        %1676 = vrot.lane.b32.xlu0 %v1360, 127
        %v1677 = vpop.permute.xlu0 %1676
        %1678 = vrot.lane.b32.xlu0 %v1362, 127
        %v1679 = vpop.permute.xlu0 %1678
        %1680 = vrot.lane.b32.xlu0 %v1365, 127
        %v1681 = vpop.permute.xlu0 %1680
        %1682 = vrot.lane.b32.xlu0 %v1367, 127
        %v1683 = vpop.permute.xlu0 %1682
        %1684 = vrot.lane.b32.xlu0 %v1370, 127
        %v1685 = vpop.permute.xlu0 %1684
        %1686 = vrot.lane.b32.xlu0 %v1372, 127
        %v1687 = vpop.permute.xlu0 %1686
        %1688 = vrot.lane.b32.xlu0 %v1375, 127
        %v1689 = vpop.permute.xlu0 %1688
        %1690 = vrot.lane.b32.xlu0 %v1377, 127
        %v1691 = vpop.permute.xlu0 %1690
        %v1700 = vcombine.low %v1677, %v1685
        %v1701 = vcombine.high %v1677, %v1685
        %v1703 = vunpack.c.l.s4 1983009808
        %v1704 = vunpack.c.0.s8 %v1703
        %v1705 = vlaneseq
        %v1706 = vshrl.u32 %v1705, 7
        %v1707 = vsub.s32 %v1704, %v1706
        %v1708 = vrot.slane %v1700, %v1707
        %v1710 = vunpack.c.l.s4 1983009808
        %v1711 = vunpack.c.0.s8 %v1710
        %v1712 = vlaneseq
        %v1713 = vshrl.u32 %v1712, 7
        %v1714 = vsub.s32 %v1711, %v1713
        %v1715 = vrot.slane %v1701, %v1714
        %v1716 = vcombine.low %v1681, %v1689
        %v1717 = vcombine.high %v1681, %v1689
        %v1719 = vunpack.c.l.s4 1983009808
        %v1720 = vunpack.c.0.s8 %v1719
        %v1721 = vlaneseq
        %v1722 = vshrl.u32 %v1721, 7
        %v1723 = vsub.s32 %v1720, %v1722
        %v1724 = vrot.slane %v1716, %v1723
        %v1726 = vunpack.c.l.s4 1983009808
        %v1727 = vunpack.c.0.s8 %v1726
        %v1728 = vlaneseq
        %v1729 = vshrl.u32 %v1728, 7
        %v1730 = vsub.s32 %v1727, %v1729
        %v1731 = vrot.slane %v1717, %v1730
        %v1732 = vcombine.low %v1708, %v1724
        %v1733 = vcombine.high %v1708, %v1724
        %v1735 = vunpack.c.l.s4 1934713408
        %v1736 = vunpack.c.0.s8 %v1735
        %v1737 = vlaneseq
        %v1738 = vshrl.u32 %v1737, 7
        %v1739 = vsub.s32 %v1736, %v1738
        %v1740 = vrot.slane %v1732, %v1739
        %v1742 = vunpack.c.l.s4 1934713408
        %v1743 = vunpack.c.0.s8 %v1742
        %v1744 = vlaneseq
        %v1745 = vshrl.u32 %v1744, 7
        %v1746 = vsub.s32 %v1743, %v1745
        %v1747 = vrot.slane %v1733, %v1746
        %v1748 = vcombine.low %v1715, %v1731
        %v1749 = vcombine.high %v1715, %v1731
        %v1751 = vunpack.c.l.s4 1934713408
        %v1752 = vunpack.c.0.s8 %v1751
        %v1753 = vlaneseq
        %v1754 = vshrl.u32 %v1753, 7
        %v1755 = vsub.s32 %v1752, %v1754
        %v1756 = vrot.slane %v1748, %v1755
        %v1758 = vunpack.c.l.s4 1934713408
        %v1759 = vunpack.c.0.s8 %v1758
        %v1760 = vlaneseq
        %v1761 = vshrl.u32 %v1760, 7
        %v1762 = vsub.s32 %v1759, %v1761
        %v1763 = vrot.slane %v1749, %v1762
        %v1764 = vcombine.high %v1740, 0.0
        %v1765 = vcombine.high %v1747, 0.0
        %v1766 = vcombine.high %v1756, 0.0
        %v1767 = vcombine.high %v1763, 0.0
        %v1768 = vcombine.low %v1679, %v1687
        %v1769 = vcombine.high %v1679, %v1687
        %v1771 = vunpack.c.l.s4 1983009808
        %v1772 = vunpack.c.0.s8 %v1771
        %v1773 = vlaneseq
        %v1774 = vshrl.u32 %v1773, 7
        %v1775 = vsub.s32 %v1772, %v1774
        %v1776 = vrot.slane %v1768, %v1775
        %v1778 = vunpack.c.l.s4 1983009808
        %v1779 = vunpack.c.0.s8 %v1778
        %v1780 = vlaneseq
        %v1781 = vshrl.u32 %v1780, 7
        %v1782 = vsub.s32 %v1779, %v1781
        %v1783 = vrot.slane %v1769, %v1782
        %v1784 = vcombine.low %v1683, %v1691
        %v1785 = vcombine.high %v1683, %v1691
        %v1787 = vunpack.c.l.s4 1983009808
        %v1788 = vunpack.c.0.s8 %v1787
        %v1789 = vlaneseq
        %v1790 = vshrl.u32 %v1789, 7
        %v1791 = vsub.s32 %v1788, %v1790
        %v1792 = vrot.slane %v1784, %v1791
        %v1794 = vunpack.c.l.s4 1983009808
        %v1795 = vunpack.c.0.s8 %v1794
        %v1796 = vlaneseq
        %v1797 = vshrl.u32 %v1796, 7
        %v1798 = vsub.s32 %v1795, %v1797
        %v1799 = vrot.slane %v1785, %v1798
        %v1800 = vcombine.low %v1776, %v1792
        %v1801 = vcombine.high %v1776, %v1792
        %v1803 = vunpack.c.l.s4 1934713408
        %v1804 = vunpack.c.0.s8 %v1803
        %v1805 = vlaneseq
        %v1806 = vshrl.u32 %v1805, 7
        %v1807 = vsub.s32 %v1804, %v1806
        %v1808 = vrot.slane %v1800, %v1807
        %v1810 = vunpack.c.l.s4 1934713408
        %v1811 = vunpack.c.0.s8 %v1810
        %v1812 = vlaneseq
        %v1813 = vshrl.u32 %v1812, 7
        %v1814 = vsub.s32 %v1811, %v1813
        %v1815 = vrot.slane %v1801, %v1814
        %v1816 = vcombine.low %v1783, %v1799
        %v1817 = vcombine.high %v1783, %v1799
        %v1819 = vunpack.c.l.s4 1934713408
        %v1820 = vunpack.c.0.s8 %v1819
        %v1821 = vlaneseq
        %v1822 = vshrl.u32 %v1821, 7
        %v1823 = vsub.s32 %v1820, %v1822
        %v1824 = vrot.slane %v1816, %v1823
        %v1826 = vunpack.c.l.s4 1934713408
        %v1827 = vunpack.c.0.s8 %v1826
        %v1828 = vlaneseq
        %v1829 = vshrl.u32 %v1828, 7
        %v1830 = vsub.s32 %v1827, %v1829
        %v1831 = vrot.slane %v1817, %v1830
        %v1832 = vcombine.high %v1808, 0.0
        %v1833 = vcombine.high %v1815, 0.0
        %v1834 = vcombine.high %v1824, 0.0
        %v1835 = vcombine.high %v1831, 0.0
        %1837 = vrot.lane.b32.xlu0 %v1764, 16
        %v1838 = vpop.permute.xlu0 %1837
        %1841 = vrot.lane.b32.xlu0 %v1747, 32
        %v1842 = vpop.permute.xlu0 %1841
        %1845 = vrot.lane.b32.xlu0 %v1765, 48
        %v1846 = vpop.permute.xlu0 %1845
        %1849 = vrot.lane.b32.xlu0 %v1756, 64
        %v1850 = vpop.permute.xlu0 %1849
        %1853 = vrot.lane.b32.xlu0 %v1766, 80
        %v1854 = vpop.permute.xlu0 %1853
        %1857 = vrot.lane.b32.xlu0 %v1763, 96
        %v1858 = vpop.permute.xlu0 %1857
        %1861 = vrot.lane.b32.xlu0 %v1767, 112
        %v1862 = vpop.permute.xlu0 %1861
        %1865 = vrot.lane.b32.xlu0 %v1832, 16
        %v1866 = vpop.permute.xlu0 %1865
        %1869 = vrot.lane.b32.xlu0 %v1815, 32
        %v1870 = vpop.permute.xlu0 %1869
        %1873 = vrot.lane.b32.xlu0 %v1833, 48
        %v1874 = vpop.permute.xlu0 %1873
        %1877 = vrot.lane.b32.xlu0 %v1824, 64
        %v1878 = vpop.permute.xlu0 %1877
        %1881 = vrot.lane.b32.xlu0 %v1834, 80
        %v1882 = vpop.permute.xlu0 %1881
        %1885 = vrot.lane.b32.xlu0 %v1831, 96
        %v1886 = vpop.permute.xlu0 %1885
        %1889 = vrot.lane.b32.xlu0 %v1835, 112
        %v1890 = vpop.permute.xlu0 %1889
        %v1892 = vsel %vm615, %v1740, %v1838
        %v1893 = vsel %vm617, %v1892, %v1842
        %v1894 = vsel %vm619, %v1893, %v1846
        %v1895 = vsel %vm621, %v1894, %v1850
        %v1896 = vsel %vm623, %v1895, %v1854
        %v1897 = vsel %vm625, %v1896, %v1858
        %v1898 = vsel %vm627, %v1897, %v1862
        %v1899 = vsel %vm615, %v1808, %v1866
        %v1900 = vsel %vm617, %v1899, %v1870
        %v1901 = vsel %vm619, %v1900, %v1874
        %v1902 = vsel %vm621, %v1901, %v1878
        %v1903 = vsel %vm623, %v1902, %v1882
        %v1904 = vsel %vm625, %v1903, %v1886
        %v1905 = vsel %vm627, %v1904, %v1890
        %s1906 = scalar_lea.vmem [#allocation4], 16
        %v1907 = vld [vmem:[%s1906] sm:$0xf]
        %v1909 = vsel %vm877, %v1907, 0
        %v1912 = vsel %vm881, %v1898, 0
        %v1915 = vsel %vm881, %v1905, 0
        %1917 = vmatprep.subr.mxu0 %v1915
        %1918 = vmatpush1.msra.mxu0 %v1912
        %1919 = vmatprep.subr.mxu0 0.0
        %1920 = vmatpush1.msra.mxu0 0.0
        %1921 = vmatprep.subr.mxu0 0.0
        %1922 = vmatpush1.msra.mxu0 0.0
        %1923 = vmatprep.subr.mxu0 0.0
        %1924 = vmatpush1.msra.mxu0 0.0
        %1925 = vmatprep.subr.mxu0 0.0
        %1926 = vmatpush1.msra.mxu0 0.0
        %1927 = vmatprep.subr.mxu0 0.0
        %1928 = vmatpush1.msra.mxu0 0.0
        %1929 = vmatprep.subr.mxu0 0.0
        %1930 = vmatpush1.msra.mxu0 0.0
        %1931 = vmatprep.subr.mxu0 0.0
        %1932 = vmatpush1.msra.mxu0 0.0
        %1933 = vmatprep.subr.mxu0 0.0
        %1934 = vmatpush1.msra.mxu0 0.0
        %1935 = vmatprep.subr.mxu0 0.0
        %1936 = vmatpush1.msra.mxu0 0.0
        %1937 = vmatprep.subr.mxu0 0.0
        %1938 = vmatpush1.msra.mxu0 0.0
        %1939 = vmatprep.subr.mxu0 0.0
        %1940 = vmatpush1.msra.mxu0 0.0
        %1941 = vmatprep.subr.mxu0 0.0
        %1942 = vmatpush1.msra.mxu0 0.0
        %1943 = vmatprep.subr.mxu0 0.0
        %1944 = vmatpush1.msra.mxu0 0.0
        %1945 = vmatprep.subr.mxu0 0.0
        %1946 = vmatpush1.msra.mxu0 0.0
        %1947 = vmatprep.subr.mxu0 0.0
        %1948 = vmatpush1.msra.mxu0 0.0
        %1949 = vmatprep.subr.mxu0 0.0
        %1950 = vmatpush1.msra.mxu0 0.0
        %1951 = vmatprep.subr.mxu0 0.0
        %1952 = vmatpush1.msra.mxu0 0.0
        %1953 = vmatprep.subr.mxu0 0.0
        %1954 = vmatpush1.msra.mxu0 0.0
        %1955 = vmatprep.subr.mxu0 0.0
        %1956 = vmatpush1.msra.mxu0 0.0
        %1957 = vmatprep.subr.mxu0 0.0
        %1958 = vmatpush1.msra.mxu0 0.0
        %1959 = vmatprep.subr.mxu0 0.0
        %1960 = vmatpush1.msra.mxu0 0.0
        %1961 = vmatprep.subr.mxu0 0.0
        %1962 = vmatpush1.msra.mxu0 0.0
        %1963 = vmatprep.subr.mxu0 0.0
        %1964 = vmatpush1.msra.mxu0 0.0
        %1965 = vmatprep.subr.mxu0 0.0
        %1966 = vmatpush1.msra.mxu0 0.0
        %1967 = vmatprep.subr.mxu0 0.0
        %1968 = vmatpush1.msra.mxu0 0.0
        %1969 = vmatprep.subr.mxu0 0.0
        %1970 = vmatpush1.msra.mxu0 0.0
        %1971 = vmatprep.subr.mxu0 0.0
        %1972 = vmatpush1.msra.mxu0 0.0
        %1973 = vmatprep.subr.mxu0 0.0
        %1974 = vmatpush1.msra.mxu0 0.0
        %1975 = vmatprep.subr.mxu0 0.0
        %1976 = vmatpush1.msra.mxu0 0.0
        %1977 = vmatprep.subr.mxu0 0.0
        %1978 = vmatpush1.msra.mxu0 0.0
        %1979 = vmatprep.subr.mxu0 0.0
        %1980 = vmatpush1.msra.mxu0 0.0
        %1981 = vmatprep.mubr.f32.mxu0 0.0
        %1982 = vmatmul.mubr.f32.gmra.mrb[0].mxu0 %v1909
        %v1983 = vpop.f32.mrb[0].mxu0
        %v1984 = vadd.f32 0.0, %v1983
        %v1985 = vpop.f32.mrb[0].mxu0
        %v1986 = vadd.f32 0.0, %v1985
        %1987 = vdwg.mxu0
        %v1988 = vadd.f32 %v1674, %v1984
        %v1989 = vadd.f32 %v1675, %v1986
        %1990 = vrot.lane.b32.xlu0 %v1360, 126
        %v1991 = vpop.permute.xlu0 %1990
        %1992 = vrot.lane.b32.xlu0 %v1362, 126
        %v1993 = vpop.permute.xlu0 %1992
        %1994 = vrot.lane.b32.xlu0 %v1365, 126
        %v1995 = vpop.permute.xlu0 %1994
        %1996 = vrot.lane.b32.xlu0 %v1367, 126
        %v1997 = vpop.permute.xlu0 %1996
        %1998 = vrot.lane.b32.xlu0 %v1370, 126
        %v1999 = vpop.permute.xlu0 %1998
        %2000 = vrot.lane.b32.xlu0 %v1372, 126
        %v2001 = vpop.permute.xlu0 %2000
        %2002 = vrot.lane.b32.xlu0 %v1375, 126
        %v2003 = vpop.permute.xlu0 %2002
        %2004 = vrot.lane.b32.xlu0 %v1377, 126
        %v2005 = vpop.permute.xlu0 %2004
        %v2014 = vcombine.low %v1991, %v1999
        %v2015 = vcombine.high %v1991, %v1999
        %v2017 = vunpack.c.l.s4 1983009808
        %v2018 = vunpack.c.0.s8 %v2017
        %v2019 = vlaneseq
        %v2020 = vshrl.u32 %v2019, 7
        %v2021 = vsub.s32 %v2018, %v2020
        %v2022 = vrot.slane %v2014, %v2021
        %v2024 = vunpack.c.l.s4 1983009808
        %v2025 = vunpack.c.0.s8 %v2024
        %v2026 = vlaneseq
        %v2027 = vshrl.u32 %v2026, 7
        %v2028 = vsub.s32 %v2025, %v2027
        %v2029 = vrot.slane %v2015, %v2028
        %v2030 = vcombine.low %v1995, %v2003
        %v2031 = vcombine.high %v1995, %v2003
        %v2033 = vunpack.c.l.s4 1983009808
        %v2034 = vunpack.c.0.s8 %v2033
        %v2035 = vlaneseq
        %v2036 = vshrl.u32 %v2035, 7
        %v2037 = vsub.s32 %v2034, %v2036
        %v2038 = vrot.slane %v2030, %v2037
        %v2040 = vunpack.c.l.s4 1983009808
        %v2041 = vunpack.c.0.s8 %v2040
        %v2042 = vlaneseq
        %v2043 = vshrl.u32 %v2042, 7
        %v2044 = vsub.s32 %v2041, %v2043
        %v2045 = vrot.slane %v2031, %v2044
        %v2046 = vcombine.low %v2022, %v2038
        %v2047 = vcombine.high %v2022, %v2038
        %v2049 = vunpack.c.l.s4 1934713408
        %v2050 = vunpack.c.0.s8 %v2049
        %v2051 = vlaneseq
        %v2052 = vshrl.u32 %v2051, 7
        %v2053 = vsub.s32 %v2050, %v2052
        %v2054 = vrot.slane %v2046, %v2053
        %v2056 = vunpack.c.l.s4 1934713408
        %v2057 = vunpack.c.0.s8 %v2056
        %v2058 = vlaneseq
        %v2059 = vshrl.u32 %v2058, 7
        %v2060 = vsub.s32 %v2057, %v2059
        %v2061 = vrot.slane %v2047, %v2060
        %v2062 = vcombine.low %v2029, %v2045
        %v2063 = vcombine.high %v2029, %v2045
        %v2065 = vunpack.c.l.s4 1934713408
        %v2066 = vunpack.c.0.s8 %v2065
        %v2067 = vlaneseq
        %v2068 = vshrl.u32 %v2067, 7
        %v2069 = vsub.s32 %v2066, %v2068
        %v2070 = vrot.slane %v2062, %v2069
        %v2072 = vunpack.c.l.s4 1934713408
        %v2073 = vunpack.c.0.s8 %v2072
        %v2074 = vlaneseq
        %v2075 = vshrl.u32 %v2074, 7
        %v2076 = vsub.s32 %v2073, %v2075
        %v2077 = vrot.slane %v2063, %v2076
        %v2078 = vcombine.high %v2054, 0.0
        %v2079 = vcombine.high %v2061, 0.0
        %v2080 = vcombine.high %v2070, 0.0
        %v2081 = vcombine.high %v2077, 0.0
        %v2082 = vcombine.low %v1993, %v2001
        %v2083 = vcombine.high %v1993, %v2001
        %v2085 = vunpack.c.l.s4 1983009808
        %v2086 = vunpack.c.0.s8 %v2085
        %v2087 = vlaneseq
        %v2088 = vshrl.u32 %v2087, 7
        %v2089 = vsub.s32 %v2086, %v2088
        %v2090 = vrot.slane %v2082, %v2089
        %v2092 = vunpack.c.l.s4 1983009808
        %v2093 = vunpack.c.0.s8 %v2092
        %v2094 = vlaneseq
        %v2095 = vshrl.u32 %v2094, 7
        %v2096 = vsub.s32 %v2093, %v2095
        %v2097 = vrot.slane %v2083, %v2096
        %v2098 = vcombine.low %v1997, %v2005
        %v2099 = vcombine.high %v1997, %v2005
        %v2101 = vunpack.c.l.s4 1983009808
        %v2102 = vunpack.c.0.s8 %v2101
        %v2103 = vlaneseq
        %v2104 = vshrl.u32 %v2103, 7
        %v2105 = vsub.s32 %v2102, %v2104
        %v2106 = vrot.slane %v2098, %v2105
        %v2108 = vunpack.c.l.s4 1983009808
        %v2109 = vunpack.c.0.s8 %v2108
        %v2110 = vlaneseq
        %v2111 = vshrl.u32 %v2110, 7
        %v2112 = vsub.s32 %v2109, %v2111
        %v2113 = vrot.slane %v2099, %v2112
        %v2114 = vcombine.low %v2090, %v2106
        %v2115 = vcombine.high %v2090, %v2106
        %v2117 = vunpack.c.l.s4 1934713408
        %v2118 = vunpack.c.0.s8 %v2117
        %v2119 = vlaneseq
        %v2120 = vshrl.u32 %v2119, 7
        %v2121 = vsub.s32 %v2118, %v2120
        %v2122 = vrot.slane %v2114, %v2121
        %v2124 = vunpack.c.l.s4 1934713408
        %v2125 = vunpack.c.0.s8 %v2124
        %v2126 = vlaneseq
        %v2127 = vshrl.u32 %v2126, 7
        %v2128 = vsub.s32 %v2125, %v2127
        %v2129 = vrot.slane %v2115, %v2128
        %v2130 = vcombine.low %v2097, %v2113
        %v2131 = vcombine.high %v2097, %v2113
        %v2133 = vunpack.c.l.s4 1934713408
        %v2134 = vunpack.c.0.s8 %v2133
        %v2135 = vlaneseq
        %v2136 = vshrl.u32 %v2135, 7
        %v2137 = vsub.s32 %v2134, %v2136
        %v2138 = vrot.slane %v2130, %v2137
        %v2140 = vunpack.c.l.s4 1934713408
        %v2141 = vunpack.c.0.s8 %v2140
        %v2142 = vlaneseq
        %v2143 = vshrl.u32 %v2142, 7
        %v2144 = vsub.s32 %v2141, %v2143
        %v2145 = vrot.slane %v2131, %v2144
        %v2146 = vcombine.high %v2122, 0.0
        %v2147 = vcombine.high %v2129, 0.0
        %v2148 = vcombine.high %v2138, 0.0
        %v2149 = vcombine.high %v2145, 0.0
        %2151 = vrot.lane.b32.xlu0 %v2078, 16
        %v2152 = vpop.permute.xlu0 %2151
        %2155 = vrot.lane.b32.xlu0 %v2061, 32
        %v2156 = vpop.permute.xlu0 %2155
        %2159 = vrot.lane.b32.xlu0 %v2079, 48
        %v2160 = vpop.permute.xlu0 %2159
        %2163 = vrot.lane.b32.xlu0 %v2070, 64
        %v2164 = vpop.permute.xlu0 %2163
        %2167 = vrot.lane.b32.xlu0 %v2080, 80
        %v2168 = vpop.permute.xlu0 %2167
        %2171 = vrot.lane.b32.xlu0 %v2077, 96
        %v2172 = vpop.permute.xlu0 %2171
        %2175 = vrot.lane.b32.xlu0 %v2081, 112
        %v2176 = vpop.permute.xlu0 %2175
        %2179 = vrot.lane.b32.xlu0 %v2146, 16
        %v2180 = vpop.permute.xlu0 %2179
        %2183 = vrot.lane.b32.xlu0 %v2129, 32
        %v2184 = vpop.permute.xlu0 %2183
        %2187 = vrot.lane.b32.xlu0 %v2147, 48
        %v2188 = vpop.permute.xlu0 %2187
        %2191 = vrot.lane.b32.xlu0 %v2138, 64
        %v2192 = vpop.permute.xlu0 %2191
        %2195 = vrot.lane.b32.xlu0 %v2148, 80
        %v2196 = vpop.permute.xlu0 %2195
        %2199 = vrot.lane.b32.xlu0 %v2145, 96
        %v2200 = vpop.permute.xlu0 %2199
        %2203 = vrot.lane.b32.xlu0 %v2149, 112
        %v2204 = vpop.permute.xlu0 %2203
        %v2206 = vsel %vm615, %v2054, %v2152
        %v2207 = vsel %vm617, %v2206, %v2156
        %v2208 = vsel %vm619, %v2207, %v2160
        %v2209 = vsel %vm621, %v2208, %v2164
        %v2210 = vsel %vm623, %v2209, %v2168
        %v2211 = vsel %vm625, %v2210, %v2172
        %v2212 = vsel %vm627, %v2211, %v2176
        %v2213 = vsel %vm615, %v2122, %v2180
        %v2214 = vsel %vm617, %v2213, %v2184
        %v2215 = vsel %vm619, %v2214, %v2188
        %v2216 = vsel %vm621, %v2215, %v2192
        %v2217 = vsel %vm623, %v2216, %v2196
        %v2218 = vsel %vm625, %v2217, %v2200
        %v2219 = vsel %vm627, %v2218, %v2204
        %s2220 = scalar_lea.vmem [#allocation4], 20
        %v2221 = vld [vmem:[%s2220] sm:$0xf]
        %v2223 = vsel %vm877, %v2221, 0
        %v2226 = vsel %vm881, %v2212, 0
        %v2229 = vsel %vm881, %v2219, 0
        %2231 = vmatprep.subr.mxu0 %v2229
        %2232 = vmatpush1.msra.mxu0 %v2226
        %2233 = vmatprep.subr.mxu0 0.0
        %2234 = vmatpush1.msra.mxu0 0.0
        %2235 = vmatprep.subr.mxu0 0.0
        %2236 = vmatpush1.msra.mxu0 0.0
        %2237 = vmatprep.subr.mxu0 0.0
        %2238 = vmatpush1.msra.mxu0 0.0
        %2239 = vmatprep.subr.mxu0 0.0
        %2240 = vmatpush1.msra.mxu0 0.0
        %2241 = vmatprep.subr.mxu0 0.0
        %2242 = vmatpush1.msra.mxu0 0.0
        %2243 = vmatprep.subr.mxu0 0.0
        %2244 = vmatpush1.msra.mxu0 0.0
        %2245 = vmatprep.subr.mxu0 0.0
        %2246 = vmatpush1.msra.mxu0 0.0
        %2247 = vmatprep.subr.mxu0 0.0
        %2248 = vmatpush1.msra.mxu0 0.0
        %2249 = vmatprep.subr.mxu0 0.0
        %2250 = vmatpush1.msra.mxu0 0.0
        %2251 = vmatprep.subr.mxu0 0.0
        %2252 = vmatpush1.msra.mxu0 0.0
        %2253 = vmatprep.subr.mxu0 0.0
        %2254 = vmatpush1.msra.mxu0 0.0
        %2255 = vmatprep.subr.mxu0 0.0
        %2256 = vmatpush1.msra.mxu0 0.0
        %2257 = vmatprep.subr.mxu0 0.0
        %2258 = vmatpush1.msra.mxu0 0.0
        %2259 = vmatprep.subr.mxu0 0.0
        %2260 = vmatpush1.msra.mxu0 0.0
        %2261 = vmatprep.subr.mxu0 0.0
        %2262 = vmatpush1.msra.mxu0 0.0
        %2263 = vmatprep.subr.mxu0 0.0
        %2264 = vmatpush1.msra.mxu0 0.0
        %2265 = vmatprep.subr.mxu0 0.0
        %2266 = vmatpush1.msra.mxu0 0.0
        %2267 = vmatprep.subr.mxu0 0.0
        %2268 = vmatpush1.msra.mxu0 0.0
        %2269 = vmatprep.subr.mxu0 0.0
        %2270 = vmatpush1.msra.mxu0 0.0
        %2271 = vmatprep.subr.mxu0 0.0
        %2272 = vmatpush1.msra.mxu0 0.0
        %2273 = vmatprep.subr.mxu0 0.0
        %2274 = vmatpush1.msra.mxu0 0.0
        %2275 = vmatprep.subr.mxu0 0.0
        %2276 = vmatpush1.msra.mxu0 0.0
        %2277 = vmatprep.subr.mxu0 0.0
        %2278 = vmatpush1.msra.mxu0 0.0
        %2279 = vmatprep.subr.mxu0 0.0
        %2280 = vmatpush1.msra.mxu0 0.0
        %2281 = vmatprep.subr.mxu0 0.0
        %2282 = vmatpush1.msra.mxu0 0.0
        %2283 = vmatprep.subr.mxu0 0.0
        %2284 = vmatpush1.msra.mxu0 0.0
        %2285 = vmatprep.subr.mxu0 0.0
        %2286 = vmatpush1.msra.mxu0 0.0
        %2287 = vmatprep.subr.mxu0 0.0
        %2288 = vmatpush1.msra.mxu0 0.0
        %2289 = vmatprep.subr.mxu0 0.0
        %2290 = vmatpush1.msra.mxu0 0.0
        %2291 = vmatprep.subr.mxu0 0.0
        %2292 = vmatpush1.msra.mxu0 0.0
        %2293 = vmatprep.subr.mxu0 0.0
        %2294 = vmatpush1.msra.mxu0 0.0
        %2295 = vmatprep.mubr.f32.mxu0 0.0
        %2296 = vmatmul.mubr.f32.gmra.mrb[0].mxu0 %v2223
        %v2297 = vpop.f32.mrb[0].mxu0
        %v2298 = vadd.f32 0.0, %v2297
        %v2299 = vpop.f32.mrb[0].mxu0
        %v2300 = vadd.f32 0.0, %v2299
        %2301 = vdwg.mxu0
        %v2302 = vadd.f32 %v1988, %v2298
        %v2303 = vadd.f32 %v1989, %v2300
        %vm2304 = vcmask 1045504
        %v2305 = vrot.slane %v411, 2
        %v2306 = vrot.slane %v412, 2
        %v2307 = vsel %vm2304, %v2305, %v2306
        %v2308 = vrot.slane %v413, 2
        %v2309 = vsel %vm2304, %v2306, %v2308
        %v2310 = vrot.slane %v414, 2
        %v2311 = vrot.slane %v415, 2
        %v2312 = vsel %vm2304, %v2310, %v2311
        %v2313 = vrot.slane %v416, 2
        %v2314 = vsel %vm2304, %v2311, %v2313
        %v2315 = vrot.slane %v417, 2
        %v2316 = vrot.slane %v418, 2
        %v2317 = vsel %vm2304, %v2315, %v2316
        %v2318 = vrot.slane %v419, 2
        %v2319 = vsel %vm2304, %v2316, %v2318
        %v2320 = vrot.slane %v420, 2
        %v2321 = vrot.slane %v421, 2
        %v2322 = vsel %vm2304, %v2320, %v2321
        %v2323 = vrot.slane %v422, 2
        %v2324 = vsel %vm2304, %v2321, %v2323
        %v2333 = vcombine.low %v2307, %v2317
        %v2334 = vcombine.high %v2307, %v2317
        %v2336 = vunpack.c.l.s4 1983009808
        %v2337 = vunpack.c.0.s8 %v2336
        %v2338 = vlaneseq
        %v2339 = vshrl.u32 %v2338, 7
        %v2340 = vsub.s32 %v2337, %v2339
        %v2341 = vrot.slane %v2333, %v2340
        %v2343 = vunpack.c.l.s4 1983009808
        %v2344 = vunpack.c.0.s8 %v2343
        %v2345 = vlaneseq
        %v2346 = vshrl.u32 %v2345, 7
        %v2347 = vsub.s32 %v2344, %v2346
        %v2348 = vrot.slane %v2334, %v2347
        %v2349 = vcombine.low %v2312, %v2322
        %v2350 = vcombine.high %v2312, %v2322
        %v2352 = vunpack.c.l.s4 1983009808
        %v2353 = vunpack.c.0.s8 %v2352
        %v2354 = vlaneseq
        %v2355 = vshrl.u32 %v2354, 7
        %v2356 = vsub.s32 %v2353, %v2355
        %v2357 = vrot.slane %v2349, %v2356
        %v2359 = vunpack.c.l.s4 1983009808
        %v2360 = vunpack.c.0.s8 %v2359
        %v2361 = vlaneseq
        %v2362 = vshrl.u32 %v2361, 7
        %v2363 = vsub.s32 %v2360, %v2362
        %v2364 = vrot.slane %v2350, %v2363
        %v2365 = vcombine.low %v2341, %v2357
        %v2366 = vcombine.high %v2341, %v2357
        %v2368 = vunpack.c.l.s4 1934713408
        %v2369 = vunpack.c.0.s8 %v2368
        %v2370 = vlaneseq
        %v2371 = vshrl.u32 %v2370, 7
        %v2372 = vsub.s32 %v2369, %v2371
        %v2373 = vrot.slane %v2365, %v2372
        %v2375 = vunpack.c.l.s4 1934713408
        %v2376 = vunpack.c.0.s8 %v2375
        %v2377 = vlaneseq
        %v2378 = vshrl.u32 %v2377, 7
        %v2379 = vsub.s32 %v2376, %v2378
        %v2380 = vrot.slane %v2366, %v2379
        %v2381 = vcombine.low %v2348, %v2364
        %v2382 = vcombine.high %v2348, %v2364
        %v2384 = vunpack.c.l.s4 1934713408
        %v2385 = vunpack.c.0.s8 %v2384
        %v2386 = vlaneseq
        %v2387 = vshrl.u32 %v2386, 7
        %v2388 = vsub.s32 %v2385, %v2387
        %v2389 = vrot.slane %v2381, %v2388
        %v2391 = vunpack.c.l.s4 1934713408
        %v2392 = vunpack.c.0.s8 %v2391
        %v2393 = vlaneseq
        %v2394 = vshrl.u32 %v2393, 7
        %v2395 = vsub.s32 %v2392, %v2394
        %v2396 = vrot.slane %v2382, %v2395
        %v2397 = vcombine.high %v2373, 0.0
        %v2398 = vcombine.high %v2380, 0.0
        %v2399 = vcombine.high %v2389, 0.0
        %v2400 = vcombine.high %v2396, 0.0
        %v2401 = vcombine.low %v2309, %v2319
        %v2402 = vcombine.high %v2309, %v2319
        %v2404 = vunpack.c.l.s4 1983009808
        %v2405 = vunpack.c.0.s8 %v2404
        %v2406 = vlaneseq
        %v2407 = vshrl.u32 %v2406, 7
        %v2408 = vsub.s32 %v2405, %v2407
        %v2409 = vrot.slane %v2401, %v2408
        %v2411 = vunpack.c.l.s4 1983009808
        %v2412 = vunpack.c.0.s8 %v2411
        %v2413 = vlaneseq
        %v2414 = vshrl.u32 %v2413, 7
        %v2415 = vsub.s32 %v2412, %v2414
        %v2416 = vrot.slane %v2402, %v2415
        %v2417 = vcombine.low %v2314, %v2324
        %v2418 = vcombine.high %v2314, %v2324
        %v2420 = vunpack.c.l.s4 1983009808
        %v2421 = vunpack.c.0.s8 %v2420
        %v2422 = vlaneseq
        %v2423 = vshrl.u32 %v2422, 7
        %v2424 = vsub.s32 %v2421, %v2423
        %v2425 = vrot.slane %v2417, %v2424
        %v2427 = vunpack.c.l.s4 1983009808
        %v2428 = vunpack.c.0.s8 %v2427
        %v2429 = vlaneseq
        %v2430 = vshrl.u32 %v2429, 7
        %v2431 = vsub.s32 %v2428, %v2430
        %v2432 = vrot.slane %v2418, %v2431
        %v2433 = vcombine.low %v2409, %v2425
        %v2434 = vcombine.high %v2409, %v2425
        %v2436 = vunpack.c.l.s4 1934713408
        %v2437 = vunpack.c.0.s8 %v2436
        %v2438 = vlaneseq
        %v2439 = vshrl.u32 %v2438, 7
        %v2440 = vsub.s32 %v2437, %v2439
        %v2441 = vrot.slane %v2433, %v2440
        %v2443 = vunpack.c.l.s4 1934713408
        %v2444 = vunpack.c.0.s8 %v2443
        %v2445 = vlaneseq
        %v2446 = vshrl.u32 %v2445, 7
        %v2447 = vsub.s32 %v2444, %v2446
        %v2448 = vrot.slane %v2434, %v2447
        %v2449 = vcombine.low %v2416, %v2432
        %v2450 = vcombine.high %v2416, %v2432
        %v2452 = vunpack.c.l.s4 1934713408
        %v2453 = vunpack.c.0.s8 %v2452
        %v2454 = vlaneseq
        %v2455 = vshrl.u32 %v2454, 7
        %v2456 = vsub.s32 %v2453, %v2455
        %v2457 = vrot.slane %v2449, %v2456
        %v2459 = vunpack.c.l.s4 1934713408
        %v2460 = vunpack.c.0.s8 %v2459
        %v2461 = vlaneseq
        %v2462 = vshrl.u32 %v2461, 7
        %v2463 = vsub.s32 %v2460, %v2462
        %v2464 = vrot.slane %v2450, %v2463
        %v2465 = vcombine.high %v2441, 0.0
        %v2466 = vcombine.high %v2448, 0.0
        %v2467 = vcombine.high %v2457, 0.0
        %v2468 = vcombine.high %v2464, 0.0
        %2470 = vrot.lane.b32.xlu0 %v2397, 16
        %v2471 = vpop.permute.xlu0 %2470
        %2474 = vrot.lane.b32.xlu0 %v2380, 32
        %v2475 = vpop.permute.xlu0 %2474
        %2478 = vrot.lane.b32.xlu0 %v2398, 48
        %v2479 = vpop.permute.xlu0 %2478
        %2482 = vrot.lane.b32.xlu0 %v2389, 64
        %v2483 = vpop.permute.xlu0 %2482
        %2486 = vrot.lane.b32.xlu0 %v2399, 80
        %v2487 = vpop.permute.xlu0 %2486
        %2490 = vrot.lane.b32.xlu0 %v2396, 96
        %v2491 = vpop.permute.xlu0 %2490
        %2494 = vrot.lane.b32.xlu0 %v2400, 112
        %v2495 = vpop.permute.xlu0 %2494
        %2498 = vrot.lane.b32.xlu0 %v2465, 16
        %v2499 = vpop.permute.xlu0 %2498
        %2502 = vrot.lane.b32.xlu0 %v2448, 32
        %v2503 = vpop.permute.xlu0 %2502
        %2506 = vrot.lane.b32.xlu0 %v2466, 48
        %v2507 = vpop.permute.xlu0 %2506
        %2510 = vrot.lane.b32.xlu0 %v2457, 64
        %v2511 = vpop.permute.xlu0 %2510
        %2514 = vrot.lane.b32.xlu0 %v2467, 80
        %v2515 = vpop.permute.xlu0 %2514
        %2518 = vrot.lane.b32.xlu0 %v2464, 96
        %v2519 = vpop.permute.xlu0 %2518
        %2522 = vrot.lane.b32.xlu0 %v2468, 112
        %v2523 = vpop.permute.xlu0 %2522
        %v2525 = vsel %vm615, %v2373, %v2471
        %v2526 = vsel %vm617, %v2525, %v2475
        %v2527 = vsel %vm619, %v2526, %v2479
        %v2528 = vsel %vm621, %v2527, %v2483
        %v2529 = vsel %vm623, %v2528, %v2487
        %v2530 = vsel %vm625, %v2529, %v2491
        %v2531 = vsel %vm627, %v2530, %v2495
        %v2532 = vsel %vm615, %v2441, %v2499
        %v2533 = vsel %vm617, %v2532, %v2503
        %v2534 = vsel %vm619, %v2533, %v2507
        %v2535 = vsel %vm621, %v2534, %v2511
        %v2536 = vsel %vm623, %v2535, %v2515
        %v2537 = vsel %vm625, %v2536, %v2519
        %v2538 = vsel %vm627, %v2537, %v2523
        %s2539 = scalar_lea.vmem [#allocation4], 24
        %v2540 = vld [vmem:[%s2539] sm:$0xf]
        %v2542 = vsel %vm877, %v2540, 0
        %v2545 = vsel %vm881, %v2531, 0
        %v2548 = vsel %vm881, %v2538, 0
        %2550 = vmatprep.subr.mxu0 %v2548
        %2551 = vmatpush1.msra.mxu0 %v2545
        %2552 = vmatprep.subr.mxu0 0.0
        %2553 = vmatpush1.msra.mxu0 0.0
        %2554 = vmatprep.subr.mxu0 0.0
        %2555 = vmatpush1.msra.mxu0 0.0
        %2556 = vmatprep.subr.mxu0 0.0
        %2557 = vmatpush1.msra.mxu0 0.0
        %2558 = vmatprep.subr.mxu0 0.0
        %2559 = vmatpush1.msra.mxu0 0.0
        %2560 = vmatprep.subr.mxu0 0.0
        %2561 = vmatpush1.msra.mxu0 0.0
        %2562 = vmatprep.subr.mxu0 0.0
        %2563 = vmatpush1.msra.mxu0 0.0
        %2564 = vmatprep.subr.mxu0 0.0
        %2565 = vmatpush1.msra.mxu0 0.0
        %2566 = vmatprep.subr.mxu0 0.0
        %2567 = vmatpush1.msra.mxu0 0.0
        %2568 = vmatprep.subr.mxu0 0.0
        %2569 = vmatpush1.msra.mxu0 0.0
        %2570 = vmatprep.subr.mxu0 0.0
        %2571 = vmatpush1.msra.mxu0 0.0
        %2572 = vmatprep.subr.mxu0 0.0
        %2573 = vmatpush1.msra.mxu0 0.0
        %2574 = vmatprep.subr.mxu0 0.0
        %2575 = vmatpush1.msra.mxu0 0.0
        %2576 = vmatprep.subr.mxu0 0.0
        %2577 = vmatpush1.msra.mxu0 0.0
        %2578 = vmatprep.subr.mxu0 0.0
        %2579 = vmatpush1.msra.mxu0 0.0
        %2580 = vmatprep.subr.mxu0 0.0
        %2581 = vmatpush1.msra.mxu0 0.0
        %2582 = vmatprep.subr.mxu0 0.0
        %2583 = vmatpush1.msra.mxu0 0.0
        %2584 = vmatprep.subr.mxu0 0.0
        %2585 = vmatpush1.msra.mxu0 0.0
        %2586 = vmatprep.subr.mxu0 0.0
        %2587 = vmatpush1.msra.mxu0 0.0
        %2588 = vmatprep.subr.mxu0 0.0
        %2589 = vmatpush1.msra.mxu0 0.0
        %2590 = vmatprep.subr.mxu0 0.0
        %2591 = vmatpush1.msra.mxu0 0.0
        %2592 = vmatprep.subr.mxu0 0.0
        %2593 = vmatpush1.msra.mxu0 0.0
        %2594 = vmatprep.subr.mxu0 0.0
        %2595 = vmatpush1.msra.mxu0 0.0
        %2596 = vmatprep.subr.mxu0 0.0
        %2597 = vmatpush1.msra.mxu0 0.0
        %2598 = vmatprep.subr.mxu0 0.0
        %2599 = vmatpush1.msra.mxu0 0.0
        %2600 = vmatprep.subr.mxu0 0.0
        %2601 = vmatpush1.msra.mxu0 0.0
        %2602 = vmatprep.subr.mxu0 0.0
        %2603 = vmatpush1.msra.mxu0 0.0
        %2604 = vmatprep.subr.mxu0 0.0
        %2605 = vmatpush1.msra.mxu0 0.0
        %2606 = vmatprep.subr.mxu0 0.0
        %2607 = vmatpush1.msra.mxu0 0.0
        %2608 = vmatprep.subr.mxu0 0.0
        %2609 = vmatpush1.msra.mxu0 0.0
        %2610 = vmatprep.subr.mxu0 0.0
        %2611 = vmatpush1.msra.mxu0 0.0
        %2612 = vmatprep.subr.mxu0 0.0
        %2613 = vmatpush1.msra.mxu0 0.0
        %2614 = vmatprep.mubr.f32.mxu0 0.0
        %2615 = vmatmul.mubr.f32.gmra.mrb[0].mxu0 %v2542
        %v2616 = vpop.f32.mrb[0].mxu0
        %v2617 = vadd.f32 0.0, %v2616
        %v2618 = vpop.f32.mrb[0].mxu0
        %v2619 = vadd.f32 0.0, %v2618
        %2620 = vdwg.mxu0
        %v2621 = vadd.f32 %v2302, %v2617
        %v2622 = vadd.f32 %v2303, %v2619
        %2623 = vrot.lane.b32.xlu0 %v2307, 127
        %v2624 = vpop.permute.xlu0 %2623
        %2625 = vrot.lane.b32.xlu0 %v2309, 127
        %v2626 = vpop.permute.xlu0 %2625
        %2627 = vrot.lane.b32.xlu0 %v2312, 127
        %v2628 = vpop.permute.xlu0 %2627
        %2629 = vrot.lane.b32.xlu0 %v2314, 127
        %v2630 = vpop.permute.xlu0 %2629
        %2631 = vrot.lane.b32.xlu0 %v2317, 127
        %v2632 = vpop.permute.xlu0 %2631
        %2633 = vrot.lane.b32.xlu0 %v2319, 127
        %v2634 = vpop.permute.xlu0 %2633
        %2635 = vrot.lane.b32.xlu0 %v2322, 127
        %v2636 = vpop.permute.xlu0 %2635
        %2637 = vrot.lane.b32.xlu0 %v2324, 127
        %v2638 = vpop.permute.xlu0 %2637
        %v2647 = vcombine.low %v2624, %v2632
        %v2648 = vcombine.high %v2624, %v2632
        %v2650 = vunpack.c.l.s4 1983009808
        %v2651 = vunpack.c.0.s8 %v2650
        %v2652 = vlaneseq
        %v2653 = vshrl.u32 %v2652, 7
        %v2654 = vsub.s32 %v2651, %v2653
        %v2655 = vrot.slane %v2647, %v2654
        %v2657 = vunpack.c.l.s4 1983009808
        %v2658 = vunpack.c.0.s8 %v2657
        %v2659 = vlaneseq
        %v2660 = vshrl.u32 %v2659, 7
        %v2661 = vsub.s32 %v2658, %v2660
        %v2662 = vrot.slane %v2648, %v2661
        %v2663 = vcombine.low %v2628, %v2636
        %v2664 = vcombine.high %v2628, %v2636
        %v2666 = vunpack.c.l.s4 1983009808
        %v2667 = vunpack.c.0.s8 %v2666
        %v2668 = vlaneseq
        %v2669 = vshrl.u32 %v2668, 7
        %v2670 = vsub.s32 %v2667, %v2669
        %v2671 = vrot.slane %v2663, %v2670
        %v2673 = vunpack.c.l.s4 1983009808
        %v2674 = vunpack.c.0.s8 %v2673
        %v2675 = vlaneseq
        %v2676 = vshrl.u32 %v2675, 7
        %v2677 = vsub.s32 %v2674, %v2676
        %v2678 = vrot.slane %v2664, %v2677
        %v2679 = vcombine.low %v2655, %v2671
        %v2680 = vcombine.high %v2655, %v2671
        %v2682 = vunpack.c.l.s4 1934713408
        %v2683 = vunpack.c.0.s8 %v2682
        %v2684 = vlaneseq
        %v2685 = vshrl.u32 %v2684, 7
        %v2686 = vsub.s32 %v2683, %v2685
        %v2687 = vrot.slane %v2679, %v2686
        %v2689 = vunpack.c.l.s4 1934713408
        %v2690 = vunpack.c.0.s8 %v2689
        %v2691 = vlaneseq
        %v2692 = vshrl.u32 %v2691, 7
        %v2693 = vsub.s32 %v2690, %v2692
        %v2694 = vrot.slane %v2680, %v2693
        %v2695 = vcombine.low %v2662, %v2678
        %v2696 = vcombine.high %v2662, %v2678
        %v2698 = vunpack.c.l.s4 1934713408
        %v2699 = vunpack.c.0.s8 %v2698
        %v2700 = vlaneseq
        %v2701 = vshrl.u32 %v2700, 7
        %v2702 = vsub.s32 %v2699, %v2701
        %v2703 = vrot.slane %v2695, %v2702
        %v2705 = vunpack.c.l.s4 1934713408
        %v2706 = vunpack.c.0.s8 %v2705
        %v2707 = vlaneseq
        %v2708 = vshrl.u32 %v2707, 7
        %v2709 = vsub.s32 %v2706, %v2708
        %v2710 = vrot.slane %v2696, %v2709
        %v2711 = vcombine.high %v2687, 0.0
        %v2712 = vcombine.high %v2694, 0.0
        %v2713 = vcombine.high %v2703, 0.0
        %v2714 = vcombine.high %v2710, 0.0
        %v2715 = vcombine.low %v2626, %v2634
        %v2716 = vcombine.high %v2626, %v2634
        %v2718 = vunpack.c.l.s4 1983009808
        %v2719 = vunpack.c.0.s8 %v2718
        %v2720 = vlaneseq
        %v2721 = vshrl.u32 %v2720, 7
        %v2722 = vsub.s32 %v2719, %v2721
        %v2723 = vrot.slane %v2715, %v2722
        %v2725 = vunpack.c.l.s4 1983009808
        %v2726 = vunpack.c.0.s8 %v2725
        %v2727 = vlaneseq
        %v2728 = vshrl.u32 %v2727, 7
        %v2729 = vsub.s32 %v2726, %v2728
        %v2730 = vrot.slane %v2716, %v2729
        %v2731 = vcombine.low %v2630, %v2638
        %v2732 = vcombine.high %v2630, %v2638
        %v2734 = vunpack.c.l.s4 1983009808
        %v2735 = vunpack.c.0.s8 %v2734
        %v2736 = vlaneseq
        %v2737 = vshrl.u32 %v2736, 7
        %v2738 = vsub.s32 %v2735, %v2737
        %v2739 = vrot.slane %v2731, %v2738
        %v2741 = vunpack.c.l.s4 1983009808
        %v2742 = vunpack.c.0.s8 %v2741
        %v2743 = vlaneseq
        %v2744 = vshrl.u32 %v2743, 7
        %v2745 = vsub.s32 %v2742, %v2744
        %v2746 = vrot.slane %v2732, %v2745
        %v2747 = vcombine.low %v2723, %v2739
        %v2748 = vcombine.high %v2723, %v2739
        %v2750 = vunpack.c.l.s4 1934713408
        %v2751 = vunpack.c.0.s8 %v2750
        %v2752 = vlaneseq
        %v2753 = vshrl.u32 %v2752, 7
        %v2754 = vsub.s32 %v2751, %v2753
        %v2755 = vrot.slane %v2747, %v2754
        %v2757 = vunpack.c.l.s4 1934713408
        %v2758 = vunpack.c.0.s8 %v2757
        %v2759 = vlaneseq
        %v2760 = vshrl.u32 %v2759, 7
        %v2761 = vsub.s32 %v2758, %v2760
        %v2762 = vrot.slane %v2748, %v2761
        %v2763 = vcombine.low %v2730, %v2746
        %v2764 = vcombine.high %v2730, %v2746
        %v2766 = vunpack.c.l.s4 1934713408
        %v2767 = vunpack.c.0.s8 %v2766
        %v2768 = vlaneseq
        %v2769 = vshrl.u32 %v2768, 7
        %v2770 = vsub.s32 %v2767, %v2769
        %v2771 = vrot.slane %v2763, %v2770
        %v2773 = vunpack.c.l.s4 1934713408
        %v2774 = vunpack.c.0.s8 %v2773
        %v2775 = vlaneseq
        %v2776 = vshrl.u32 %v2775, 7
        %v2777 = vsub.s32 %v2774, %v2776
        %v2778 = vrot.slane %v2764, %v2777
        %v2779 = vcombine.high %v2755, 0.0
        %v2780 = vcombine.high %v2762, 0.0
        %v2781 = vcombine.high %v2771, 0.0
        %v2782 = vcombine.high %v2778, 0.0
        %2784 = vrot.lane.b32.xlu0 %v2711, 16
        %v2785 = vpop.permute.xlu0 %2784
        %2788 = vrot.lane.b32.xlu0 %v2694, 32
        %v2789 = vpop.permute.xlu0 %2788
        %2792 = vrot.lane.b32.xlu0 %v2712, 48
        %v2793 = vpop.permute.xlu0 %2792
        %2796 = vrot.lane.b32.xlu0 %v2703, 64
        %v2797 = vpop.permute.xlu0 %2796
        %2800 = vrot.lane.b32.xlu0 %v2713, 80
        %v2801 = vpop.permute.xlu0 %2800
        %2804 = vrot.lane.b32.xlu0 %v2710, 96
        %v2805 = vpop.permute.xlu0 %2804
        %2808 = vrot.lane.b32.xlu0 %v2714, 112
        %v2809 = vpop.permute.xlu0 %2808
        %2812 = vrot.lane.b32.xlu0 %v2779, 16
        %v2813 = vpop.permute.xlu0 %2812
        %2816 = vrot.lane.b32.xlu0 %v2762, 32
        %v2817 = vpop.permute.xlu0 %2816
        %2820 = vrot.lane.b32.xlu0 %v2780, 48
        %v2821 = vpop.permute.xlu0 %2820
        %2824 = vrot.lane.b32.xlu0 %v2771, 64
        %v2825 = vpop.permute.xlu0 %2824
        %2828 = vrot.lane.b32.xlu0 %v2781, 80
        %v2829 = vpop.permute.xlu0 %2828
        %2832 = vrot.lane.b32.xlu0 %v2778, 96
        %v2833 = vpop.permute.xlu0 %2832
        %2836 = vrot.lane.b32.xlu0 %v2782, 112
        %v2837 = vpop.permute.xlu0 %2836
        %v2839 = vsel %vm615, %v2687, %v2785
        %v2840 = vsel %vm617, %v2839, %v2789
        %v2841 = vsel %vm619, %v2840, %v2793
        %v2842 = vsel %vm621, %v2841, %v2797
        %v2843 = vsel %vm623, %v2842, %v2801
        %v2844 = vsel %vm625, %v2843, %v2805
        %v2845 = vsel %vm627, %v2844, %v2809
        %v2846 = vsel %vm615, %v2755, %v2813
        %v2847 = vsel %vm617, %v2846, %v2817
        %v2848 = vsel %vm619, %v2847, %v2821
        %v2849 = vsel %vm621, %v2848, %v2825
        %v2850 = vsel %vm623, %v2849, %v2829
        %v2851 = vsel %vm625, %v2850, %v2833
        %v2852 = vsel %vm627, %v2851, %v2837
        %s2853 = scalar_lea.vmem [#allocation4], 28
        %v2854 = vld [vmem:[%s2853] sm:$0xf]
        %v2856 = vsel %vm877, %v2854, 0
        %v2859 = vsel %vm881, %v2845, 0
        %v2862 = vsel %vm881, %v2852, 0
        %2864 = vmatprep.subr.mxu0 %v2862
        %2865 = vmatpush1.msra.mxu0 %v2859
        %2866 = vmatprep.subr.mxu0 0.0
        %2867 = vmatpush1.msra.mxu0 0.0
        %2868 = vmatprep.subr.mxu0 0.0
        %2869 = vmatpush1.msra.mxu0 0.0
        %2870 = vmatprep.subr.mxu0 0.0
        %2871 = vmatpush1.msra.mxu0 0.0
        %2872 = vmatprep.subr.mxu0 0.0
        %2873 = vmatpush1.msra.mxu0 0.0
        %2874 = vmatprep.subr.mxu0 0.0
        %2875 = vmatpush1.msra.mxu0 0.0
        %2876 = vmatprep.subr.mxu0 0.0
        %2877 = vmatpush1.msra.mxu0 0.0
        %2878 = vmatprep.subr.mxu0 0.0
        %2879 = vmatpush1.msra.mxu0 0.0
        %2880 = vmatprep.subr.mxu0 0.0
        %2881 = vmatpush1.msra.mxu0 0.0
        %2882 = vmatprep.subr.mxu0 0.0
        %2883 = vmatpush1.msra.mxu0 0.0
        %2884 = vmatprep.subr.mxu0 0.0
        %2885 = vmatpush1.msra.mxu0 0.0
        %2886 = vmatprep.subr.mxu0 0.0
        %2887 = vmatpush1.msra.mxu0 0.0
        %2888 = vmatprep.subr.mxu0 0.0
        %2889 = vmatpush1.msra.mxu0 0.0
        %2890 = vmatprep.subr.mxu0 0.0
        %2891 = vmatpush1.msra.mxu0 0.0
        %2892 = vmatprep.subr.mxu0 0.0
        %2893 = vmatpush1.msra.mxu0 0.0
        %2894 = vmatprep.subr.mxu0 0.0
        %2895 = vmatpush1.msra.mxu0 0.0
        %2896 = vmatprep.subr.mxu0 0.0
        %2897 = vmatpush1.msra.mxu0 0.0
        %2898 = vmatprep.subr.mxu0 0.0
        %2899 = vmatpush1.msra.mxu0 0.0
        %2900 = vmatprep.subr.mxu0 0.0
        %2901 = vmatpush1.msra.mxu0 0.0
        %2902 = vmatprep.subr.mxu0 0.0
        %2903 = vmatpush1.msra.mxu0 0.0
        %2904 = vmatprep.subr.mxu0 0.0
        %2905 = vmatpush1.msra.mxu0 0.0
        %2906 = vmatprep.subr.mxu0 0.0
        %2907 = vmatpush1.msra.mxu0 0.0
        %2908 = vmatprep.subr.mxu0 0.0
        %2909 = vmatpush1.msra.mxu0 0.0
        %2910 = vmatprep.subr.mxu0 0.0
        %2911 = vmatpush1.msra.mxu0 0.0
        %2912 = vmatprep.subr.mxu0 0.0
        %2913 = vmatpush1.msra.mxu0 0.0
        %2914 = vmatprep.subr.mxu0 0.0
        %2915 = vmatpush1.msra.mxu0 0.0
        %2916 = vmatprep.subr.mxu0 0.0
        %2917 = vmatpush1.msra.mxu0 0.0
        %2918 = vmatprep.subr.mxu0 0.0
        %2919 = vmatpush1.msra.mxu0 0.0
        %2920 = vmatprep.subr.mxu0 0.0
        %2921 = vmatpush1.msra.mxu0 0.0
        %2922 = vmatprep.subr.mxu0 0.0
        %2923 = vmatpush1.msra.mxu0 0.0
        %2924 = vmatprep.subr.mxu0 0.0
        %2925 = vmatpush1.msra.mxu0 0.0
        %2926 = vmatprep.subr.mxu0 0.0
        %2927 = vmatpush1.msra.mxu0 0.0
        %2928 = vmatprep.mubr.f32.mxu0 0.0
        %2929 = vmatmul.mubr.f32.gmra.mrb[0].mxu0 %v2856
        %v2930 = vpop.f32.mrb[0].mxu0
        %v2931 = vadd.f32 0.0, %v2930
        %v2932 = vpop.f32.mrb[0].mxu0
        %v2933 = vadd.f32 0.0, %v2932
        %2934 = vdwg.mxu0
        %v2935 = vadd.f32 %v2621, %v2931
        %v2936 = vadd.f32 %v2622, %v2933
        %2937 = vrot.lane.b32.xlu0 %v2307, 126
        %v2938 = vpop.permute.xlu0 %2937
        %2939 = vrot.lane.b32.xlu0 %v2309, 126
        %v2940 = vpop.permute.xlu0 %2939
        %2941 = vrot.lane.b32.xlu0 %v2312, 126
        %v2942 = vpop.permute.xlu0 %2941
        %2943 = vrot.lane.b32.xlu0 %v2314, 126
        %v2944 = vpop.permute.xlu0 %2943
        %2945 = vrot.lane.b32.xlu0 %v2317, 126
        %v2946 = vpop.permute.xlu0 %2945
        %2947 = vrot.lane.b32.xlu0 %v2319, 126
        %v2948 = vpop.permute.xlu0 %2947
        %2949 = vrot.lane.b32.xlu0 %v2322, 126
        %v2950 = vpop.permute.xlu0 %2949
        %2951 = vrot.lane.b32.xlu0 %v2324, 126
        %v2952 = vpop.permute.xlu0 %2951
        %v2961 = vcombine.low %v2938, %v2946
        %v2962 = vcombine.high %v2938, %v2946
        %v2964 = vunpack.c.l.s4 1983009808
        %v2965 = vunpack.c.0.s8 %v2964
        %v2966 = vlaneseq
        %v2967 = vshrl.u32 %v2966, 7
        %v2968 = vsub.s32 %v2965, %v2967
        %v2969 = vrot.slane %v2961, %v2968
        %v2971 = vunpack.c.l.s4 1983009808
        %v2972 = vunpack.c.0.s8 %v2971
        %v2973 = vlaneseq
        %v2974 = vshrl.u32 %v2973, 7
        %v2975 = vsub.s32 %v2972, %v2974
        %v2976 = vrot.slane %v2962, %v2975
        %v2977 = vcombine.low %v2942, %v2950
        %v2978 = vcombine.high %v2942, %v2950
        %v2980 = vunpack.c.l.s4 1983009808
        %v2981 = vunpack.c.0.s8 %v2980
        %v2982 = vlaneseq
        %v2983 = vshrl.u32 %v2982, 7
        %v2984 = vsub.s32 %v2981, %v2983
        %v2985 = vrot.slane %v2977, %v2984
        %v2987 = vunpack.c.l.s4 1983009808
        %v2988 = vunpack.c.0.s8 %v2987
        %v2989 = vlaneseq
        %v2990 = vshrl.u32 %v2989, 7
        %v2991 = vsub.s32 %v2988, %v2990
        %v2992 = vrot.slane %v2978, %v2991
        %v2993 = vcombine.low %v2969, %v2985
        %v2994 = vcombine.high %v2969, %v2985
        %v2996 = vunpack.c.l.s4 1934713408
        %v2997 = vunpack.c.0.s8 %v2996
        %v2998 = vlaneseq
        %v2999 = vshrl.u32 %v2998, 7
        %v3000 = vsub.s32 %v2997, %v2999
        %v3001 = vrot.slane %v2993, %v3000
        %v3003 = vunpack.c.l.s4 1934713408
        %v3004 = vunpack.c.0.s8 %v3003
        %v3005 = vlaneseq
        %v3006 = vshrl.u32 %v3005, 7
        %v3007 = vsub.s32 %v3004, %v3006
        %v3008 = vrot.slane %v2994, %v3007
        %v3009 = vcombine.low %v2976, %v2992
        %v3010 = vcombine.high %v2976, %v2992
        %v3012 = vunpack.c.l.s4 1934713408
        %v3013 = vunpack.c.0.s8 %v3012
        %v3014 = vlaneseq
        %v3015 = vshrl.u32 %v3014, 7
        %v3016 = vsub.s32 %v3013, %v3015
        %v3017 = vrot.slane %v3009, %v3016
        %v3019 = vunpack.c.l.s4 1934713408
        %v3020 = vunpack.c.0.s8 %v3019
        %v3021 = vlaneseq
        %v3022 = vshrl.u32 %v3021, 7
        %v3023 = vsub.s32 %v3020, %v3022
        %v3024 = vrot.slane %v3010, %v3023
        %v3025 = vcombine.high %v3001, 0.0
        %v3026 = vcombine.high %v3008, 0.0
        %v3027 = vcombine.high %v3017, 0.0
        %v3028 = vcombine.high %v3024, 0.0
        %v3029 = vcombine.low %v2940, %v2948
        %v3030 = vcombine.high %v2940, %v2948
        %v3032 = vunpack.c.l.s4 1983009808
        %v3033 = vunpack.c.0.s8 %v3032
        %v3034 = vlaneseq
        %v3035 = vshrl.u32 %v3034, 7
        %v3036 = vsub.s32 %v3033, %v3035
        %v3037 = vrot.slane %v3029, %v3036
        %v3039 = vunpack.c.l.s4 1983009808
        %v3040 = vunpack.c.0.s8 %v3039
        %v3041 = vlaneseq
        %v3042 = vshrl.u32 %v3041, 7
        %v3043 = vsub.s32 %v3040, %v3042
        %v3044 = vrot.slane %v3030, %v3043
        %v3045 = vcombine.low %v2944, %v2952
        %v3046 = vcombine.high %v2944, %v2952
        %v3048 = vunpack.c.l.s4 1983009808
        %v3049 = vunpack.c.0.s8 %v3048
        %v3050 = vlaneseq
        %v3051 = vshrl.u32 %v3050, 7
        %v3052 = vsub.s32 %v3049, %v3051
        %v3053 = vrot.slane %v3045, %v3052
        %v3055 = vunpack.c.l.s4 1983009808
        %v3056 = vunpack.c.0.s8 %v3055
        %v3057 = vlaneseq
        %v3058 = vshrl.u32 %v3057, 7
        %v3059 = vsub.s32 %v3056, %v3058
        %v3060 = vrot.slane %v3046, %v3059
        %v3061 = vcombine.low %v3037, %v3053
        %v3062 = vcombine.high %v3037, %v3053
        %v3064 = vunpack.c.l.s4 1934713408
        %v3065 = vunpack.c.0.s8 %v3064
        %v3066 = vlaneseq
        %v3067 = vshrl.u32 %v3066, 7
        %v3068 = vsub.s32 %v3065, %v3067
        %v3069 = vrot.slane %v3061, %v3068
        %v3071 = vunpack.c.l.s4 1934713408
        %v3072 = vunpack.c.0.s8 %v3071
        %v3073 = vlaneseq
        %v3074 = vshrl.u32 %v3073, 7
        %v3075 = vsub.s32 %v3072, %v3074
        %v3076 = vrot.slane %v3062, %v3075
        %v3077 = vcombine.low %v3044, %v3060
        %v3078 = vcombine.high %v3044, %v3060
        %v3080 = vunpack.c.l.s4 1934713408
        %v3081 = vunpack.c.0.s8 %v3080
        %v3082 = vlaneseq
        %v3083 = vshrl.u32 %v3082, 7
        %v3084 = vsub.s32 %v3081, %v3083
        %v3085 = vrot.slane %v3077, %v3084
        %v3087 = vunpack.c.l.s4 1934713408
        %v3088 = vunpack.c.0.s8 %v3087
        %v3089 = vlaneseq
        %v3090 = vshrl.u32 %v3089, 7
        %v3091 = vsub.s32 %v3088, %v3090
        %v3092 = vrot.slane %v3078, %v3091
        %v3093 = vcombine.high %v3069, 0.0
        %v3094 = vcombine.high %v3076, 0.0
        %v3095 = vcombine.high %v3085, 0.0
        %v3096 = vcombine.high %v3092, 0.0
        %3098 = vrot.lane.b32.xlu0 %v3025, 16
        %v3099 = vpop.permute.xlu0 %3098
        %3102 = vrot.lane.b32.xlu0 %v3008, 32
        %v3103 = vpop.permute.xlu0 %3102
        %3106 = vrot.lane.b32.xlu0 %v3026, 48
        %v3107 = vpop.permute.xlu0 %3106
        %3110 = vrot.lane.b32.xlu0 %v3017, 64
        %v3111 = vpop.permute.xlu0 %3110
        %3114 = vrot.lane.b32.xlu0 %v3027, 80
        %v3115 = vpop.permute.xlu0 %3114
        %3118 = vrot.lane.b32.xlu0 %v3024, 96
        %v3119 = vpop.permute.xlu0 %3118
        %3122 = vrot.lane.b32.xlu0 %v3028, 112
        %v3123 = vpop.permute.xlu0 %3122
        %3126 = vrot.lane.b32.xlu0 %v3093, 16
        %v3127 = vpop.permute.xlu0 %3126
        %3130 = vrot.lane.b32.xlu0 %v3076, 32
        %v3131 = vpop.permute.xlu0 %3130
        %3134 = vrot.lane.b32.xlu0 %v3094, 48
        %v3135 = vpop.permute.xlu0 %3134
        %3138 = vrot.lane.b32.xlu0 %v3085, 64
        %v3139 = vpop.permute.xlu0 %3138
        %3142 = vrot.lane.b32.xlu0 %v3095, 80
        %v3143 = vpop.permute.xlu0 %3142
        %3146 = vrot.lane.b32.xlu0 %v3092, 96
        %v3147 = vpop.permute.xlu0 %3146
        %3150 = vrot.lane.b32.xlu0 %v3096, 112
        %v3151 = vpop.permute.xlu0 %3150
        %v3153 = vsel %vm615, %v3001, %v3099
        %v3154 = vsel %vm617, %v3153, %v3103
        %v3155 = vsel %vm619, %v3154, %v3107
        %v3156 = vsel %vm621, %v3155, %v3111
        %v3157 = vsel %vm623, %v3156, %v3115
        %v3158 = vsel %vm625, %v3157, %v3119
        %v3159 = vsel %vm627, %v3158, %v3123
        %v3160 = vsel %vm615, %v3069, %v3127
        %v3161 = vsel %vm617, %v3160, %v3131
        %v3162 = vsel %vm619, %v3161, %v3135
        %v3163 = vsel %vm621, %v3162, %v3139
        %v3164 = vsel %vm623, %v3163, %v3143
        %v3165 = vsel %vm625, %v3164, %v3147
        %v3166 = vsel %vm627, %v3165, %v3151
        %s3167 = scalar_lea.vmem [#allocation4], 32
        %v3168 = vld [vmem:[%s3167] sm:$0xf]
        %v3170 = vsel %vm877, %v3168, 0
        %v3173 = vsel %vm881, %v3159, 0
        %v3176 = vsel %vm881, %v3166, 0
        %3178 = vmatprep.subr.mxu0 %v3176
        %3179 = vmatpush1.msra.mxu0 %v3173
        %3180 = vmatprep.subr.mxu0 0.0
        %3181 = vmatpush1.msra.mxu0 0.0
        %3182 = vmatprep.subr.mxu0 0.0
        %3183 = vmatpush1.msra.mxu0 0.0
        %3184 = vmatprep.subr.mxu0 0.0
        %3185 = vmatpush1.msra.mxu0 0.0
        %3186 = vmatprep.subr.mxu0 0.0
        %3187 = vmatpush1.msra.mxu0 0.0
        %3188 = vmatprep.subr.mxu0 0.0
        %3189 = vmatpush1.msra.mxu0 0.0
        %3190 = vmatprep.subr.mxu0 0.0
        %3191 = vmatpush1.msra.mxu0 0.0
        %3192 = vmatprep.subr.mxu0 0.0
        %3193 = vmatpush1.msra.mxu0 0.0
        %3194 = vmatprep.subr.mxu0 0.0
        %3195 = vmatpush1.msra.mxu0 0.0
        %3196 = vmatprep.subr.mxu0 0.0
        %3197 = vmatpush1.msra.mxu0 0.0
        %3198 = vmatprep.subr.mxu0 0.0
        %3199 = vmatpush1.msra.mxu0 0.0
        %3200 = vmatprep.subr.mxu0 0.0
        %3201 = vmatpush1.msra.mxu0 0.0
        %3202 = vmatprep.subr.mxu0 0.0
        %3203 = vmatpush1.msra.mxu0 0.0
        %3204 = vmatprep.subr.mxu0 0.0
        %3205 = vmatpush1.msra.mxu0 0.0
        %3206 = vmatprep.subr.mxu0 0.0
        %3207 = vmatpush1.msra.mxu0 0.0
        %3208 = vmatprep.subr.mxu0 0.0
        %3209 = vmatpush1.msra.mxu0 0.0
        %3210 = vmatprep.subr.mxu0 0.0
        %3211 = vmatpush1.msra.mxu0 0.0
        %3212 = vmatprep.subr.mxu0 0.0
        %3213 = vmatpush1.msra.mxu0 0.0
        %3214 = vmatprep.subr.mxu0 0.0
        %3215 = vmatpush1.msra.mxu0 0.0
        %3216 = vmatprep.subr.mxu0 0.0
        %3217 = vmatpush1.msra.mxu0 0.0
        %3218 = vmatprep.subr.mxu0 0.0
        %3219 = vmatpush1.msra.mxu0 0.0
        %3220 = vmatprep.subr.mxu0 0.0
        %3221 = vmatpush1.msra.mxu0 0.0
        %3222 = vmatprep.subr.mxu0 0.0
        %3223 = vmatpush1.msra.mxu0 0.0
        %3224 = vmatprep.subr.mxu0 0.0
        %3225 = vmatpush1.msra.mxu0 0.0
        %3226 = vmatprep.subr.mxu0 0.0
        %3227 = vmatpush1.msra.mxu0 0.0
        %3228 = vmatprep.subr.mxu0 0.0
        %3229 = vmatpush1.msra.mxu0 0.0
        %3230 = vmatprep.subr.mxu0 0.0
        %3231 = vmatpush1.msra.mxu0 0.0
        %3232 = vmatprep.subr.mxu0 0.0
        %3233 = vmatpush1.msra.mxu0 0.0
        %3234 = vmatprep.subr.mxu0 0.0
        %3235 = vmatpush1.msra.mxu0 0.0
        %3236 = vmatprep.subr.mxu0 0.0
        %3237 = vmatpush1.msra.mxu0 0.0
        %3238 = vmatprep.subr.mxu0 0.0
        %3239 = vmatpush1.msra.mxu0 0.0
        %3240 = vmatprep.subr.mxu0 0.0
        %3241 = vmatpush1.msra.mxu0 0.0
        %3242 = vmatprep.mubr.f32.mxu0 0.0
        %3243 = vmatmul.mubr.f32.gmra.mrb[0].mxu0 %v3170
        %v3244 = vpop.f32.mrb[0].mxu0
        %v3245 = vadd.f32 0.0, %v3244
        %v3246 = vpop.f32.mrb[0].mxu0
        %v3247 = vadd.f32 0.0, %v3246
        %3248 = vdwg.mxu0
        %v3249 = vadd.f32 %v2935, %v3245
        %v3250 = vadd.f32 %v2936, %v3247
        %v3251 = vsel %vm881, %v3249, 0.0
        %v3252 = vsel %vm881, %v3250, 0.0
        %v3253 = vadd.f32 %v3251, %v3252
        %3254 = vadd.xlane.f32.xlu0 %v3253
        %v3255 = vpop.xlane.xlu0 %3254
        %v3256 = vmul.f32 %v3255, 0.00390625
        %v3257 = vsub.f32 %v3249, %v3256
        %v3258 = vsub.f32 %v3250, %v3256
        %v3259 = vmul.f32 %v3257, %v3257
        %v3260 = vmul.f32 %v3258, %v3258
        %v3261 = vsel %vm881, %v3259, 0.0
        %v3262 = vsel %vm881, %v3260, 0.0
        %v3263 = vadd.f32 %v3261, %v3262
        %3264 = vadd.xlane.f32.xlu0 %v3263
        %v3265 = vpop.xlane.xlu0 %3264
        %v3266 = vmul.f32 %v3265, 0.00390625
        %v3267 = vadd.f32 %v3266, 1e-05
        %v3268 = vrsqrt.pop %v3267
        %v3269 = vmul.f32 %v3257, %v3268
        %v3270 = vmul.f32 %v3258, %v3268
        %v3271 = vmax.f32 %v3269, 0.0
        %v3272 = vmax.f32 %v3270, 0.0
        %3274 = vrot.lane.b32.xlu0 %v3271, 112
        %v3275 = vpop.permute.xlu0 %3274
        %3277 = vrot.lane.b32.xlu0 %v3271, 96
        %v3278 = vpop.permute.xlu0 %3277
        %3280 = vrot.lane.b32.xlu0 %v3271, 80
        %v3281 = vpop.permute.xlu0 %3280
        %3283 = vrot.lane.b32.xlu0 %v3271, 64
        %v3284 = vpop.permute.xlu0 %3283
        %3286 = vrot.lane.b32.xlu0 %v3271, 48
        %v3287 = vpop.permute.xlu0 %3286
        %3289 = vrot.lane.b32.xlu0 %v3271, 32
        %v3290 = vpop.permute.xlu0 %3289
        %3292 = vrot.lane.b32.xlu0 %v3271, 16
        %v3293 = vpop.permute.xlu0 %3292
        %3296 = vrot.lane.b32.xlu0 %v3272, 112
        %v3297 = vpop.permute.xlu0 %3296
        %3299 = vrot.lane.b32.xlu0 %v3272, 96
        %v3300 = vpop.permute.xlu0 %3299
        %3302 = vrot.lane.b32.xlu0 %v3272, 80
        %v3303 = vpop.permute.xlu0 %3302
        %3305 = vrot.lane.b32.xlu0 %v3272, 64
        %v3306 = vpop.permute.xlu0 %3305
        %3308 = vrot.lane.b32.xlu0 %v3272, 48
        %v3309 = vpop.permute.xlu0 %3308
        %3311 = vrot.lane.b32.xlu0 %v3272, 32
        %v3312 = vpop.permute.xlu0 %3311
        %3314 = vrot.lane.b32.xlu0 %v3272, 16
        %v3315 = vpop.permute.xlu0 %3314
        %v3317 = vcombine.low %v3271, %v3278
        %v3319 = vunpack.c.l.s4 1983009808
        %v3320 = vunpack.c.0.s8 %v3319
        %v3321 = vlaneseq
        %v3322 = vshrl.u32 %v3321, 7
        %v3323 = vsub.s32 %v3320, %v3322
        %v3324 = vrot.slane %v3317, %v3323
        %v3325 = vcombine.low %v3275, %v3281
        %v3327 = vunpack.c.l.s4 1983009808
        %v3328 = vunpack.c.0.s8 %v3327
        %v3329 = vlaneseq
        %v3330 = vshrl.u32 %v3329, 7
        %v3331 = vsub.s32 %v3328, %v3330
        %v3332 = vrot.slane %v3325, %v3331
        %v3333 = vcombine.low %v3284, %v3290
        %v3335 = vunpack.c.l.s4 1983009808
        %v3336 = vunpack.c.0.s8 %v3335
        %v3337 = vlaneseq
        %v3338 = vshrl.u32 %v3337, 7
        %v3339 = vsub.s32 %v3336, %v3338
        %v3340 = vrot.slane %v3333, %v3339
        %v3341 = vcombine.low %v3287, %v3293
        %v3343 = vunpack.c.l.s4 1983009808
        %v3344 = vunpack.c.0.s8 %v3343
        %v3345 = vlaneseq
        %v3346 = vshrl.u32 %v3345, 7
        %v3347 = vsub.s32 %v3344, %v3346
        %v3348 = vrot.slane %v3341, %v3347
        %v3349 = vcombine.low %v3324, %v3332
        %v3350 = vcombine.high %v3324, %v3332
        %v3352 = vunpack.c.l.s4 1934713408
        %v3353 = vunpack.c.0.s8 %v3352
        %v3354 = vlaneseq
        %v3355 = vshrl.u32 %v3354, 7
        %v3356 = vsub.s32 %v3353, %v3355
        %v3357 = vrot.slane %v3349, %v3356
        %v3359 = vunpack.c.l.s4 1934713408
        %v3360 = vunpack.c.0.s8 %v3359
        %v3361 = vlaneseq
        %v3362 = vshrl.u32 %v3361, 7
        %v3363 = vsub.s32 %v3360, %v3362
        %v3364 = vrot.slane %v3350, %v3363
        %v3365 = vcombine.low %v3340, %v3348
        %v3366 = vcombine.high %v3340, %v3348
        %v3368 = vunpack.c.l.s4 1934713408
        %v3369 = vunpack.c.0.s8 %v3368
        %v3370 = vlaneseq
        %v3371 = vshrl.u32 %v3370, 7
        %v3372 = vsub.s32 %v3369, %v3371
        %v3373 = vrot.slane %v3365, %v3372
        %v3375 = vunpack.c.l.s4 1934713408
        %v3376 = vunpack.c.0.s8 %v3375
        %v3377 = vlaneseq
        %v3378 = vshrl.u32 %v3377, 7
        %v3379 = vsub.s32 %v3376, %v3378
        %v3380 = vrot.slane %v3366, %v3379
        %v3381 = vcombine.low %v3357, %v3373
        %v3382 = vcombine.high %v3357, %v3373
        %v3383 = vcombine.low %v3364, %v3380
        %v3384 = vcombine.high %v3364, %v3380
        %v3385 = vcombine.low %v3272, %v3300
        %v3387 = vunpack.c.l.s4 1983009808
        %v3388 = vunpack.c.0.s8 %v3387
        %v3389 = vlaneseq
        %v3390 = vshrl.u32 %v3389, 7
        %v3391 = vsub.s32 %v3388, %v3390
        %v3392 = vrot.slane %v3385, %v3391
        %v3393 = vcombine.low %v3297, %v3303
        %v3395 = vunpack.c.l.s4 1983009808
        %v3396 = vunpack.c.0.s8 %v3395
        %v3397 = vlaneseq
        %v3398 = vshrl.u32 %v3397, 7
        %v3399 = vsub.s32 %v3396, %v3398
        %v3400 = vrot.slane %v3393, %v3399
        %v3401 = vcombine.low %v3306, %v3312
        %v3403 = vunpack.c.l.s4 1983009808
        %v3404 = vunpack.c.0.s8 %v3403
        %v3405 = vlaneseq
        %v3406 = vshrl.u32 %v3405, 7
        %v3407 = vsub.s32 %v3404, %v3406
        %v3408 = vrot.slane %v3401, %v3407
        %v3409 = vcombine.low %v3309, %v3315
        %v3411 = vunpack.c.l.s4 1983009808
        %v3412 = vunpack.c.0.s8 %v3411
        %v3413 = vlaneseq
        %v3414 = vshrl.u32 %v3413, 7
        %v3415 = vsub.s32 %v3412, %v3414
        %v3416 = vrot.slane %v3409, %v3415
        %v3417 = vcombine.low %v3392, %v3400
        %v3418 = vcombine.high %v3392, %v3400
        %v3420 = vunpack.c.l.s4 1934713408
        %v3421 = vunpack.c.0.s8 %v3420
        %v3422 = vlaneseq
        %v3423 = vshrl.u32 %v3422, 7
        %v3424 = vsub.s32 %v3421, %v3423
        %v3425 = vrot.slane %v3417, %v3424
        %v3427 = vunpack.c.l.s4 1934713408
        %v3428 = vunpack.c.0.s8 %v3427
        %v3429 = vlaneseq
        %v3430 = vshrl.u32 %v3429, 7
        %v3431 = vsub.s32 %v3428, %v3430
        %v3432 = vrot.slane %v3418, %v3431
        %v3433 = vcombine.low %v3408, %v3416
        %v3434 = vcombine.high %v3408, %v3416
        %v3436 = vunpack.c.l.s4 1934713408
        %v3437 = vunpack.c.0.s8 %v3436
        %v3438 = vlaneseq
        %v3439 = vshrl.u32 %v3438, 7
        %v3440 = vsub.s32 %v3437, %v3439
        %v3441 = vrot.slane %v3433, %v3440
        %v3443 = vunpack.c.l.s4 1934713408
        %v3444 = vunpack.c.0.s8 %v3443
        %v3445 = vlaneseq
        %v3446 = vshrl.u32 %v3445, 7
        %v3447 = vsub.s32 %v3444, %v3446
        %v3448 = vrot.slane %v3434, %v3447
        %v3449 = vcombine.low %v3425, %v3441
        %v3450 = vcombine.high %v3425, %v3441
        %v3451 = vcombine.low %v3432, %v3448
        %v3452 = vcombine.high %v3432, %v3448
        %v3457 = vrot.slane %v3381, 1
        %v3458 = vrot.slane %v3382, 1
        %v3459 = vrot.slane %v3383, 1
        %v3460 = vrot.slane %v3384, 1
        %v3469 = vrot.slane %v3381, 7
        %v3470 = vrot.slane %v3449, 7
        %v3471 = vsel %vm244, %v3469, %v3470
        %v3472 = vrot.slane %v3382, 7
        %v3473 = vrot.slane %v3450, 7
        %v3474 = vsel %vm244, %v3472, %v3473
        %v3475 = vrot.slane %v3383, 7
        %v3476 = vrot.slane %v3451, 7
        %v3477 = vsel %vm244, %v3475, %v3476
        %v3478 = vrot.slane %v3384, 7
        %v3479 = vrot.slane %v3452, 7
        %v3480 = vsel %vm244, %v3478, %v3479
        %v3489 = vrot.slane %v3449, 5
        %v3490 = vrot.slane %v3450, 5
        %v3491 = vrot.slane %v3451, 5
        %v3492 = vrot.slane %v3452, 5
        %v3497 = vsel %vm244, %v3457, %v3469
        %v3498 = vsel %vm244, %v3458, %v3472
        %v3499 = vsel %vm244, %v3459, %v3475
        %v3500 = vsel %vm244, %v3460, %v3478
        %v3501 = vsel %vm244, %v3470, %v3489
        %v3502 = vsel %vm244, %v3473, %v3490
        %v3503 = vsel %vm244, %v3476, %v3491
        %v3504 = vsel %vm244, %v3479, %v3492
        %3513 = vrot.lane.b32.xlu0 %v3497, 127
        %v3514 = vpop.permute.xlu0 %3513
        %3515 = vrot.lane.b32.xlu0 %v3471, 127
        %v3516 = vpop.permute.xlu0 %3515
        %3517 = vrot.lane.b32.xlu0 %v3501, 127
        %v3518 = vpop.permute.xlu0 %3517
        %3519 = vrot.lane.b32.xlu0 %v3498, 127
        %v3520 = vpop.permute.xlu0 %3519
        %3521 = vrot.lane.b32.xlu0 %v3474, 127
        %v3522 = vpop.permute.xlu0 %3521
        %3523 = vrot.lane.b32.xlu0 %v3502, 127
        %v3524 = vpop.permute.xlu0 %3523
        %3525 = vrot.lane.b32.xlu0 %v3499, 127
        %v3526 = vpop.permute.xlu0 %3525
        %3527 = vrot.lane.b32.xlu0 %v3477, 127
        %v3528 = vpop.permute.xlu0 %3527
        %3529 = vrot.lane.b32.xlu0 %v3503, 127
        %v3530 = vpop.permute.xlu0 %3529
        %3531 = vrot.lane.b32.xlu0 %v3500, 127
        %v3532 = vpop.permute.xlu0 %3531
        %3533 = vrot.lane.b32.xlu0 %v3480, 127
        %v3534 = vpop.permute.xlu0 %3533
        %3535 = vrot.lane.b32.xlu0 %v3504, 127
        %v3536 = vpop.permute.xlu0 %3535
        %3549 = vrot.lane.b32.xlu0 %v3497, 1
        %v3550 = vpop.permute.xlu0 %3549
        %3551 = vrot.lane.b32.xlu0 %v3471, 1
        %v3552 = vpop.permute.xlu0 %3551
        %3553 = vrot.lane.b32.xlu0 %v3501, 1
        %v3554 = vpop.permute.xlu0 %3553
        %3555 = vrot.lane.b32.xlu0 %v3498, 1
        %v3556 = vpop.permute.xlu0 %3555
        %3557 = vrot.lane.b32.xlu0 %v3474, 1
        %v3558 = vpop.permute.xlu0 %3557
        %3559 = vrot.lane.b32.xlu0 %v3502, 1
        %v3560 = vpop.permute.xlu0 %3559
        %3561 = vrot.lane.b32.xlu0 %v3499, 1
        %v3562 = vpop.permute.xlu0 %3561
        %3563 = vrot.lane.b32.xlu0 %v3477, 1
        %v3564 = vpop.permute.xlu0 %3563
        %3565 = vrot.lane.b32.xlu0 %v3503, 1
        %v3566 = vpop.permute.xlu0 %3565
        %3567 = vrot.lane.b32.xlu0 %v3500, 1
        %v3568 = vpop.permute.xlu0 %3567
        %3569 = vrot.lane.b32.xlu0 %v3480, 1
        %v3570 = vpop.permute.xlu0 %3569
        %3571 = vrot.lane.b32.xlu0 %v3504, 1
        %v3572 = vpop.permute.xlu0 %3571
        %3585 = vrot.lane.b32.xlu0 %v3497, 3
        %v3586 = vpop.permute.xlu0 %3585
        %3587 = vrot.lane.b32.xlu0 %v3471, 3
        %v3588 = vpop.permute.xlu0 %3587
        %3589 = vrot.lane.b32.xlu0 %v3501, 3
        %v3590 = vpop.permute.xlu0 %3589
        %3591 = vrot.lane.b32.xlu0 %v3498, 3
        %v3592 = vpop.permute.xlu0 %3591
        %3593 = vrot.lane.b32.xlu0 %v3474, 3
        %v3594 = vpop.permute.xlu0 %3593
        %3595 = vrot.lane.b32.xlu0 %v3502, 3
        %v3596 = vpop.permute.xlu0 %3595
        %3597 = vrot.lane.b32.xlu0 %v3499, 3
        %v3598 = vpop.permute.xlu0 %3597
        %3599 = vrot.lane.b32.xlu0 %v3477, 3
        %v3600 = vpop.permute.xlu0 %3599
        %3601 = vrot.lane.b32.xlu0 %v3503, 3
        %v3602 = vpop.permute.xlu0 %3601
        %3603 = vrot.lane.b32.xlu0 %v3500, 3
        %v3604 = vpop.permute.xlu0 %3603
        %3605 = vrot.lane.b32.xlu0 %v3480, 3
        %v3606 = vpop.permute.xlu0 %3605
        %3607 = vrot.lane.b32.xlu0 %v3504, 3
        %v3608 = vpop.permute.xlu0 %3607
        %v3621 = vsel %vm397, %v3514, %v3550
        %v3622 = vsel %vm397, %v3516, %v3552
        %v3623 = vsel %vm397, %v3518, %v3554
        %v3624 = vsel %vm397, %v3520, %v3556
        %v3625 = vsel %vm397, %v3522, %v3558
        %v3626 = vsel %vm397, %v3524, %v3560
        %v3627 = vsel %vm397, %v3526, %v3562
        %v3628 = vsel %vm397, %v3528, %v3564
        %v3629 = vsel %vm397, %v3530, %v3566
        %v3630 = vsel %vm397, %v3532, %v3568
        %v3631 = vsel %vm397, %v3534, %v3570
        %v3632 = vsel %vm397, %v3536, %v3572
        %v3633 = vsel %vm410, %v3621, %v3586
        %v3634 = vsel %vm410, %v3622, %v3588
        %v3635 = vsel %vm410, %v3623, %v3590
        %v3636 = vsel %vm410, %v3624, %v3592
        %v3637 = vsel %vm410, %v3625, %v3594
        %v3638 = vsel %vm410, %v3626, %v3596
        %v3639 = vsel %vm410, %v3627, %v3598
        %v3640 = vsel %vm410, %v3628, %v3600
        %v3641 = vsel %vm410, %v3629, %v3602
        %v3642 = vsel %vm410, %v3630, %v3604
        %v3643 = vsel %vm410, %v3631, %v3606
        %v3644 = vsel %vm410, %v3632, %v3608
        %v3645 = vcombine.low %v3633, %v3639
        %v3646 = vcombine.high %v3633, %v3639
        %v3648 = vunpack.c.l.s4 1983009808
        %v3649 = vunpack.c.0.s8 %v3648
        %v3650 = vlaneseq
        %v3651 = vshrl.u32 %v3650, 7
        %v3652 = vsub.s32 %v3649, %v3651
        %v3653 = vrot.slane %v3645, %v3652
        %v3655 = vunpack.c.l.s4 1983009808
        %v3656 = vunpack.c.0.s8 %v3655
        %v3657 = vlaneseq
        %v3658 = vshrl.u32 %v3657, 7
        %v3659 = vsub.s32 %v3656, %v3658
        %v3660 = vrot.slane %v3646, %v3659
        %v3661 = vcombine.low %v3636, %v3642
        %v3662 = vcombine.high %v3636, %v3642
        %v3664 = vunpack.c.l.s4 1983009808
        %v3665 = vunpack.c.0.s8 %v3664
        %v3666 = vlaneseq
        %v3667 = vshrl.u32 %v3666, 7
        %v3668 = vsub.s32 %v3665, %v3667
        %v3669 = vrot.slane %v3661, %v3668
        %v3671 = vunpack.c.l.s4 1983009808
        %v3672 = vunpack.c.0.s8 %v3671
        %v3673 = vlaneseq
        %v3674 = vshrl.u32 %v3673, 7
        %v3675 = vsub.s32 %v3672, %v3674
        %v3676 = vrot.slane %v3662, %v3675
        %v3677 = vcombine.low %v3653, %v3669
        %v3678 = vcombine.high %v3653, %v3669
        %v3680 = vunpack.c.l.s4 1934713408
        %v3681 = vunpack.c.0.s8 %v3680
        %v3682 = vlaneseq
        %v3683 = vshrl.u32 %v3682, 7
        %v3684 = vsub.s32 %v3681, %v3683
        %v3685 = vrot.slane %v3677, %v3684
        %v3687 = vunpack.c.l.s4 1934713408
        %v3688 = vunpack.c.0.s8 %v3687
        %v3689 = vlaneseq
        %v3690 = vshrl.u32 %v3689, 7
        %v3691 = vsub.s32 %v3688, %v3690
        %v3692 = vrot.slane %v3678, %v3691
        %v3693 = vcombine.low %v3660, %v3676
        %v3694 = vcombine.high %v3660, %v3676
        %v3696 = vunpack.c.l.s4 1934713408
        %v3697 = vunpack.c.0.s8 %v3696
        %v3698 = vlaneseq
        %v3699 = vshrl.u32 %v3698, 7
        %v3700 = vsub.s32 %v3697, %v3699
        %v3701 = vrot.slane %v3693, %v3700
        %v3703 = vunpack.c.l.s4 1934713408
        %v3704 = vunpack.c.0.s8 %v3703
        %v3705 = vlaneseq
        %v3706 = vshrl.u32 %v3705, 7
        %v3707 = vsub.s32 %v3704, %v3706
        %v3708 = vrot.slane %v3694, %v3707
        %v3709 = vcombine.high %v3685, 0.0
        %v3710 = vcombine.high %v3692, 0.0
        %v3711 = vcombine.high %v3701, 0.0
        %v3712 = vcombine.high %v3708, 0.0
        %v3713 = vcombine.low %v3634, %v3640
        %v3714 = vcombine.high %v3634, %v3640
        %v3716 = vunpack.c.l.s4 1983009808
        %v3717 = vunpack.c.0.s8 %v3716
        %v3718 = vlaneseq
        %v3719 = vshrl.u32 %v3718, 7
        %v3720 = vsub.s32 %v3717, %v3719
        %v3721 = vrot.slane %v3713, %v3720
        %v3723 = vunpack.c.l.s4 1983009808
        %v3724 = vunpack.c.0.s8 %v3723
        %v3725 = vlaneseq
        %v3726 = vshrl.u32 %v3725, 7
        %v3727 = vsub.s32 %v3724, %v3726
        %v3728 = vrot.slane %v3714, %v3727
        %v3729 = vcombine.low %v3637, %v3643
        %v3730 = vcombine.high %v3637, %v3643
        %v3732 = vunpack.c.l.s4 1983009808
        %v3733 = vunpack.c.0.s8 %v3732
        %v3734 = vlaneseq
        %v3735 = vshrl.u32 %v3734, 7
        %v3736 = vsub.s32 %v3733, %v3735
        %v3737 = vrot.slane %v3729, %v3736
        %v3739 = vunpack.c.l.s4 1983009808
        %v3740 = vunpack.c.0.s8 %v3739
        %v3741 = vlaneseq
        %v3742 = vshrl.u32 %v3741, 7
        %v3743 = vsub.s32 %v3740, %v3742
        %v3744 = vrot.slane %v3730, %v3743
        %v3745 = vcombine.low %v3721, %v3737
        %v3746 = vcombine.high %v3721, %v3737
        %v3748 = vunpack.c.l.s4 1934713408
        %v3749 = vunpack.c.0.s8 %v3748
        %v3750 = vlaneseq
        %v3751 = vshrl.u32 %v3750, 7
        %v3752 = vsub.s32 %v3749, %v3751
        %v3753 = vrot.slane %v3745, %v3752
        %v3755 = vunpack.c.l.s4 1934713408
        %v3756 = vunpack.c.0.s8 %v3755
        %v3757 = vlaneseq
        %v3758 = vshrl.u32 %v3757, 7
        %v3759 = vsub.s32 %v3756, %v3758
        %v3760 = vrot.slane %v3746, %v3759
        %v3761 = vcombine.low %v3728, %v3744
        %v3762 = vcombine.high %v3728, %v3744
        %v3764 = vunpack.c.l.s4 1934713408
        %v3765 = vunpack.c.0.s8 %v3764
        %v3766 = vlaneseq
        %v3767 = vshrl.u32 %v3766, 7
        %v3768 = vsub.s32 %v3765, %v3767
        %v3769 = vrot.slane %v3761, %v3768
        %v3771 = vunpack.c.l.s4 1934713408
        %v3772 = vunpack.c.0.s8 %v3771
        %v3773 = vlaneseq
        %v3774 = vshrl.u32 %v3773, 7
        %v3775 = vsub.s32 %v3772, %v3774
        %v3776 = vrot.slane %v3762, %v3775
        %v3777 = vcombine.high %v3753, 0.0
        %v3778 = vcombine.high %v3760, 0.0
        %v3779 = vcombine.high %v3769, 0.0
        %v3780 = vcombine.high %v3776, 0.0
        %3782 = vrot.lane.b32.xlu0 %v3709, 16
        %v3783 = vpop.permute.xlu0 %3782
        %3786 = vrot.lane.b32.xlu0 %v3692, 32
        %v3787 = vpop.permute.xlu0 %3786
        %3790 = vrot.lane.b32.xlu0 %v3710, 48
        %v3791 = vpop.permute.xlu0 %3790
        %3794 = vrot.lane.b32.xlu0 %v3701, 64
        %v3795 = vpop.permute.xlu0 %3794
        %3798 = vrot.lane.b32.xlu0 %v3711, 80
        %v3799 = vpop.permute.xlu0 %3798
        %3802 = vrot.lane.b32.xlu0 %v3708, 96
        %v3803 = vpop.permute.xlu0 %3802
        %3806 = vrot.lane.b32.xlu0 %v3712, 112
        %v3807 = vpop.permute.xlu0 %3806
        %3810 = vrot.lane.b32.xlu0 %v3777, 16
        %v3811 = vpop.permute.xlu0 %3810
        %3814 = vrot.lane.b32.xlu0 %v3760, 32
        %v3815 = vpop.permute.xlu0 %3814
        %3818 = vrot.lane.b32.xlu0 %v3778, 48
        %v3819 = vpop.permute.xlu0 %3818
        %3822 = vrot.lane.b32.xlu0 %v3769, 64
        %v3823 = vpop.permute.xlu0 %3822
        %3826 = vrot.lane.b32.xlu0 %v3779, 80
        %v3827 = vpop.permute.xlu0 %3826
        %3830 = vrot.lane.b32.xlu0 %v3776, 96
        %v3831 = vpop.permute.xlu0 %3830
        %3834 = vrot.lane.b32.xlu0 %v3780, 112
        %v3835 = vpop.permute.xlu0 %3834
        %v3837 = vsel %vm615, %v3685, %v3783
        %v3838 = vsel %vm617, %v3837, %v3787
        %v3839 = vsel %vm619, %v3838, %v3791
        %v3840 = vsel %vm621, %v3839, %v3795
        %v3841 = vsel %vm623, %v3840, %v3799
        %v3842 = vsel %vm625, %v3841, %v3803
        %v3843 = vsel %vm627, %v3842, %v3807
        %v3844 = vsel %vm615, %v3753, %v3811
        %v3845 = vsel %vm617, %v3844, %v3815
        %v3846 = vsel %vm619, %v3845, %v3819
        %v3847 = vsel %vm621, %v3846, %v3823
        %v3848 = vsel %vm623, %v3847, %v3827
        %v3849 = vsel %vm625, %v3848, %v3831
        %v3850 = vsel %vm627, %v3849, %v3835
        %v3851 = vld [vmem:[#allocation6] sm:$0xf]
        %3860 = vrot.lane.b32.xlu0 %v3633, 127
        %v3861 = vpop.permute.xlu0 %3860
        %3862 = vrot.lane.b32.xlu0 %v3634, 127
        %v3863 = vpop.permute.xlu0 %3862
        %3864 = vrot.lane.b32.xlu0 %v3636, 127
        %v3865 = vpop.permute.xlu0 %3864
        %3866 = vrot.lane.b32.xlu0 %v3637, 127
        %v3867 = vpop.permute.xlu0 %3866
        %3868 = vrot.lane.b32.xlu0 %v3639, 127
        %v3869 = vpop.permute.xlu0 %3868
        %3870 = vrot.lane.b32.xlu0 %v3640, 127
        %v3871 = vpop.permute.xlu0 %3870
        %3872 = vrot.lane.b32.xlu0 %v3642, 127
        %v3873 = vpop.permute.xlu0 %3872
        %3874 = vrot.lane.b32.xlu0 %v3643, 127
        %v3875 = vpop.permute.xlu0 %3874
        %v3884 = vcombine.low %v3861, %v3869
        %v3885 = vcombine.high %v3861, %v3869
        %v3887 = vunpack.c.l.s4 1983009808
        %v3888 = vunpack.c.0.s8 %v3887
        %v3889 = vlaneseq
        %v3890 = vshrl.u32 %v3889, 7
        %v3891 = vsub.s32 %v3888, %v3890
        %v3892 = vrot.slane %v3884, %v3891
        %v3894 = vunpack.c.l.s4 1983009808
        %v3895 = vunpack.c.0.s8 %v3894
        %v3896 = vlaneseq
        %v3897 = vshrl.u32 %v3896, 7
        %v3898 = vsub.s32 %v3895, %v3897
        %v3899 = vrot.slane %v3885, %v3898
        %v3900 = vcombine.low %v3865, %v3873
        %v3901 = vcombine.high %v3865, %v3873
        %v3903 = vunpack.c.l.s4 1983009808
        %v3904 = vunpack.c.0.s8 %v3903
        %v3905 = vlaneseq
        %v3906 = vshrl.u32 %v3905, 7
        %v3907 = vsub.s32 %v3904, %v3906
        %v3908 = vrot.slane %v3900, %v3907
        %v3910 = vunpack.c.l.s4 1983009808
        %v3911 = vunpack.c.0.s8 %v3910
        %v3912 = vlaneseq
        %v3913 = vshrl.u32 %v3912, 7
        %v3914 = vsub.s32 %v3911, %v3913
        %v3915 = vrot.slane %v3901, %v3914
        %v3916 = vcombine.low %v3892, %v3908
        %v3917 = vcombine.high %v3892, %v3908
        %v3919 = vunpack.c.l.s4 1934713408
        %v3920 = vunpack.c.0.s8 %v3919
        %v3921 = vlaneseq
        %v3922 = vshrl.u32 %v3921, 7
        %v3923 = vsub.s32 %v3920, %v3922
        %v3924 = vrot.slane %v3916, %v3923
        %v3926 = vunpack.c.l.s4 1934713408
        %v3927 = vunpack.c.0.s8 %v3926
        %v3928 = vlaneseq
        %v3929 = vshrl.u32 %v3928, 7
        %v3930 = vsub.s32 %v3927, %v3929
        %v3931 = vrot.slane %v3917, %v3930
        %v3932 = vcombine.low %v3899, %v3915
        %v3933 = vcombine.high %v3899, %v3915
        %v3935 = vunpack.c.l.s4 1934713408
        %v3936 = vunpack.c.0.s8 %v3935
        %v3937 = vlaneseq
        %v3938 = vshrl.u32 %v3937, 7
        %v3939 = vsub.s32 %v3936, %v3938
        %v3940 = vrot.slane %v3932, %v3939
        %v3942 = vunpack.c.l.s4 1934713408
        %v3943 = vunpack.c.0.s8 %v3942
        %v3944 = vlaneseq
        %v3945 = vshrl.u32 %v3944, 7
        %v3946 = vsub.s32 %v3943, %v3945
        %v3947 = vrot.slane %v3933, %v3946
        %v3948 = vcombine.high %v3924, 0.0
        %v3949 = vcombine.high %v3931, 0.0
        %v3950 = vcombine.high %v3940, 0.0
        %v3951 = vcombine.high %v3947, 0.0
        %v3952 = vcombine.low %v3863, %v3871
        %v3953 = vcombine.high %v3863, %v3871
        %v3955 = vunpack.c.l.s4 1983009808
        %v3956 = vunpack.c.0.s8 %v3955
        %v3957 = vlaneseq
        %v3958 = vshrl.u32 %v3957, 7
        %v3959 = vsub.s32 %v3956, %v3958
        %v3960 = vrot.slane %v3952, %v3959
        %v3962 = vunpack.c.l.s4 1983009808
        %v3963 = vunpack.c.0.s8 %v3962
        %v3964 = vlaneseq
        %v3965 = vshrl.u32 %v3964, 7
        %v3966 = vsub.s32 %v3963, %v3965
        %v3967 = vrot.slane %v3953, %v3966
        %v3968 = vcombine.low %v3867, %v3875
        %v3969 = vcombine.high %v3867, %v3875
        %v3971 = vunpack.c.l.s4 1983009808
        %v3972 = vunpack.c.0.s8 %v3971
        %v3973 = vlaneseq
        %v3974 = vshrl.u32 %v3973, 7
        %v3975 = vsub.s32 %v3972, %v3974
        %v3976 = vrot.slane %v3968, %v3975
        %v3978 = vunpack.c.l.s4 1983009808
        %v3979 = vunpack.c.0.s8 %v3978
        %v3980 = vlaneseq
        %v3981 = vshrl.u32 %v3980, 7
        %v3982 = vsub.s32 %v3979, %v3981
        %v3983 = vrot.slane %v3969, %v3982
        %v3984 = vcombine.low %v3960, %v3976
        %v3985 = vcombine.high %v3960, %v3976
        %v3987 = vunpack.c.l.s4 1934713408
        %v3988 = vunpack.c.0.s8 %v3987
        %v3989 = vlaneseq
        %v3990 = vshrl.u32 %v3989, 7
        %v3991 = vsub.s32 %v3988, %v3990
        %v3992 = vrot.slane %v3984, %v3991
        %v3994 = vunpack.c.l.s4 1934713408
        %v3995 = vunpack.c.0.s8 %v3994
        %v3996 = vlaneseq
        %v3997 = vshrl.u32 %v3996, 7
        %v3998 = vsub.s32 %v3995, %v3997
        %v3999 = vrot.slane %v3985, %v3998
        %v4000 = vcombine.low %v3967, %v3983
        %v4001 = vcombine.high %v3967, %v3983
        %v4003 = vunpack.c.l.s4 1934713408
        %v4004 = vunpack.c.0.s8 %v4003
        %v4005 = vlaneseq
        %v4006 = vshrl.u32 %v4005, 7
        %v4007 = vsub.s32 %v4004, %v4006
        %v4008 = vrot.slane %v4000, %v4007
        %v4010 = vunpack.c.l.s4 1934713408
        %v4011 = vunpack.c.0.s8 %v4010
        %v4012 = vlaneseq
        %v4013 = vshrl.u32 %v4012, 7
        %v4014 = vsub.s32 %v4011, %v4013
        %v4015 = vrot.slane %v4001, %v4014
        %v4016 = vcombine.high %v3992, 0.0
        %v4017 = vcombine.high %v3999, 0.0
        %v4018 = vcombine.high %v4008, 0.0
        %v4019 = vcombine.high %v4015, 0.0
        %4021 = vrot.lane.b32.xlu0 %v3948, 16
        %v4022 = vpop.permute.xlu0 %4021
        %4025 = vrot.lane.b32.xlu0 %v3931, 32
        %v4026 = vpop.permute.xlu0 %4025
        %4029 = vrot.lane.b32.xlu0 %v3949, 48
        %v4030 = vpop.permute.xlu0 %4029
        %4033 = vrot.lane.b32.xlu0 %v3940, 64
        %v4034 = vpop.permute.xlu0 %4033
        %4037 = vrot.lane.b32.xlu0 %v3950, 80
        %v4038 = vpop.permute.xlu0 %4037
        %4041 = vrot.lane.b32.xlu0 %v3947, 96
        %v4042 = vpop.permute.xlu0 %4041
        %4045 = vrot.lane.b32.xlu0 %v3951, 112
        %v4046 = vpop.permute.xlu0 %4045
        %4049 = vrot.lane.b32.xlu0 %v4016, 16
        %v4050 = vpop.permute.xlu0 %4049
        %4053 = vrot.lane.b32.xlu0 %v3999, 32
        %v4054 = vpop.permute.xlu0 %4053
        %4057 = vrot.lane.b32.xlu0 %v4017, 48
        %v4058 = vpop.permute.xlu0 %4057
        %4061 = vrot.lane.b32.xlu0 %v4008, 64
        %v4062 = vpop.permute.xlu0 %4061
        %4065 = vrot.lane.b32.xlu0 %v4018, 80
        %v4066 = vpop.permute.xlu0 %4065
        %4069 = vrot.lane.b32.xlu0 %v4015, 96
        %v4070 = vpop.permute.xlu0 %4069
        %4073 = vrot.lane.b32.xlu0 %v4019, 112
        %v4074 = vpop.permute.xlu0 %4073
        %v4076 = vsel %vm615, %v3924, %v4022
        %v4077 = vsel %vm617, %v4076, %v4026
        %v4078 = vsel %vm619, %v4077, %v4030
        %v4079 = vsel %vm621, %v4078, %v4034
        %v4080 = vsel %vm623, %v4079, %v4038
        %v4081 = vsel %vm625, %v4080, %v4042
        %v4082 = vsel %vm627, %v4081, %v4046
        %v4083 = vsel %vm615, %v3992, %v4050
        %v4084 = vsel %vm617, %v4083, %v4054
        %v4085 = vsel %vm619, %v4084, %v4058
        %v4086 = vsel %vm621, %v4085, %v4062
        %v4087 = vsel %vm623, %v4086, %v4066
        %v4088 = vsel %vm625, %v4087, %v4070
        %v4089 = vsel %vm627, %v4088, %v4074
        %s4090 = scalar_lea.vmem [#allocation6], 4
        %v4091 = vld [vmem:[%s4090] sm:$0xf]
        %v4093 = vsel %vm877, %v4091, 0
        %v4096 = vsel %vm881, %v4082, 0
        %v4099 = vsel %vm881, %v4089, 0
        %4101 = vmatprep.subr.mxu0 %v4099
        %4102 = vmatpush1.msra.mxu0 %v4096
        %4103 = vmatprep.subr.mxu0 0.0
        %4104 = vmatpush1.msra.mxu0 0.0
        %4105 = vmatprep.subr.mxu0 0.0
        %4106 = vmatpush1.msra.mxu0 0.0
        %4107 = vmatprep.subr.mxu0 0.0
        %4108 = vmatpush1.msra.mxu0 0.0
        %4109 = vmatprep.subr.mxu0 0.0
        %4110 = vmatpush1.msra.mxu0 0.0
        %4111 = vmatprep.subr.mxu0 0.0
        %4112 = vmatpush1.msra.mxu0 0.0
        %4113 = vmatprep.subr.mxu0 0.0
        %4114 = vmatpush1.msra.mxu0 0.0
        %4115 = vmatprep.subr.mxu0 0.0
        %4116 = vmatpush1.msra.mxu0 0.0
        %4117 = vmatprep.subr.mxu0 0.0
        %4118 = vmatpush1.msra.mxu0 0.0
        %4119 = vmatprep.subr.mxu0 0.0
        %4120 = vmatpush1.msra.mxu0 0.0
        %4121 = vmatprep.subr.mxu0 0.0
        %4122 = vmatpush1.msra.mxu0 0.0
        %4123 = vmatprep.subr.mxu0 0.0
        %4124 = vmatpush1.msra.mxu0 0.0
        %4125 = vmatprep.subr.mxu0 0.0
        %4126 = vmatpush1.msra.mxu0 0.0
        %4127 = vmatprep.subr.mxu0 0.0
        %4128 = vmatpush1.msra.mxu0 0.0
        %4129 = vmatprep.subr.mxu0 0.0
        %4130 = vmatpush1.msra.mxu0 0.0
        %4131 = vmatprep.subr.mxu0 0.0
        %4132 = vmatpush1.msra.mxu0 0.0
        %4133 = vmatprep.subr.mxu0 0.0
        %4134 = vmatpush1.msra.mxu0 0.0
        %4135 = vmatprep.subr.mxu0 0.0
        %4136 = vmatpush1.msra.mxu0 0.0
        %4137 = vmatprep.subr.mxu0 0.0
        %4138 = vmatpush1.msra.mxu0 0.0
        %4139 = vmatprep.subr.mxu0 0.0
        %4140 = vmatpush1.msra.mxu0 0.0
        %4141 = vmatprep.subr.mxu0 0.0
        %4142 = vmatpush1.msra.mxu0 0.0
        %4143 = vmatprep.subr.mxu0 0.0
        %4144 = vmatpush1.msra.mxu0 0.0
        %4145 = vmatprep.subr.mxu0 0.0
        %4146 = vmatpush1.msra.mxu0 0.0
        %4147 = vmatprep.subr.mxu0 0.0
        %4148 = vmatpush1.msra.mxu0 0.0
        %4149 = vmatprep.subr.mxu0 0.0
        %4150 = vmatpush1.msra.mxu0 0.0
        %4151 = vmatprep.subr.mxu0 0.0
        %4152 = vmatpush1.msra.mxu0 0.0
        %4153 = vmatprep.subr.mxu0 0.0
        %4154 = vmatpush1.msra.mxu0 0.0
        %4155 = vmatprep.subr.mxu0 0.0
        %4156 = vmatpush1.msra.mxu0 0.0
        %4157 = vmatprep.subr.mxu0 0.0
        %4158 = vmatpush1.msra.mxu0 0.0
        %4159 = vmatprep.subr.mxu0 0.0
        %4160 = vmatpush1.msra.mxu0 0.0
        %4161 = vmatprep.subr.mxu0 0.0
        %4162 = vmatpush1.msra.mxu0 0.0
        %4163 = vmatprep.subr.mxu0 0.0
        %4164 = vmatpush1.msra.mxu0 0.0
        %4165 = vmatprep.mubr.f32.mxu0 0.0
        %4166 = vmatmul.mubr.f32.gmra.mrb[0].mxu0 %v4093
        %v4167 = vpop.f32.mrb[0].mxu0
        %v4168 = vadd.f32 0.0, %v4167
        %v4169 = vpop.f32.mrb[0].mxu0
        %v4170 = vadd.f32 0.0, %v4169
        %4171 = vdwg.mxu0
        %v4173 = vsel %vm877, %v3851, 0
        %v4176 = vsel %vm881, %v3843, 0
        %v4179 = vsel %vm881, %v3850, 0
        %4181 = vmatprep.subr.mxu0 %v4179
        %4182 = vmatpush1.msra.mxu0 %v4176
        %4183 = vmatprep.subr.mxu0 0.0
        %4184 = vmatpush1.msra.mxu0 0.0
        %4185 = vmatprep.subr.mxu0 0.0
        %4186 = vmatpush1.msra.mxu0 0.0
        %4187 = vmatprep.subr.mxu0 0.0
        %4188 = vmatpush1.msra.mxu0 0.0
        %4189 = vmatprep.subr.mxu0 0.0
        %4190 = vmatpush1.msra.mxu0 0.0
        %4191 = vmatprep.subr.mxu0 0.0
        %4192 = vmatpush1.msra.mxu0 0.0
        %4193 = vmatprep.subr.mxu0 0.0
        %4194 = vmatpush1.msra.mxu0 0.0
        %4195 = vmatprep.subr.mxu0 0.0
        %4196 = vmatpush1.msra.mxu0 0.0
        %4197 = vmatprep.subr.mxu0 0.0
        %4198 = vmatpush1.msra.mxu0 0.0
        %4199 = vmatprep.subr.mxu0 0.0
        %4200 = vmatpush1.msra.mxu0 0.0
        %4201 = vmatprep.subr.mxu0 0.0
        %4202 = vmatpush1.msra.mxu0 0.0
        %4203 = vmatprep.subr.mxu0 0.0
        %4204 = vmatpush1.msra.mxu0 0.0
        %4205 = vmatprep.subr.mxu0 0.0
        %4206 = vmatpush1.msra.mxu0 0.0
        %4207 = vmatprep.subr.mxu0 0.0
        %4208 = vmatpush1.msra.mxu0 0.0
        %4209 = vmatprep.subr.mxu0 0.0
        %4210 = vmatpush1.msra.mxu0 0.0
        %4211 = vmatprep.subr.mxu0 0.0
        %4212 = vmatpush1.msra.mxu0 0.0
        %4213 = vmatprep.subr.mxu0 0.0
        %4214 = vmatpush1.msra.mxu0 0.0
        %4215 = vmatprep.subr.mxu0 0.0
        %4216 = vmatpush1.msra.mxu0 0.0
        %4217 = vmatprep.subr.mxu0 0.0
        %4218 = vmatpush1.msra.mxu0 0.0
        %4219 = vmatprep.subr.mxu0 0.0
        %4220 = vmatpush1.msra.mxu0 0.0
        %4221 = vmatprep.subr.mxu0 0.0
        %4222 = vmatpush1.msra.mxu0 0.0
        %4223 = vmatprep.subr.mxu0 0.0
        %4224 = vmatpush1.msra.mxu0 0.0
        %4225 = vmatprep.subr.mxu0 0.0
        %4226 = vmatpush1.msra.mxu0 0.0
        %4227 = vmatprep.subr.mxu0 0.0
        %4228 = vmatpush1.msra.mxu0 0.0
        %4229 = vmatprep.subr.mxu0 0.0
        %4230 = vmatpush1.msra.mxu0 0.0
        %4231 = vmatprep.subr.mxu0 0.0
        %4232 = vmatpush1.msra.mxu0 0.0
        %4233 = vmatprep.subr.mxu0 0.0
        %4234 = vmatpush1.msra.mxu0 0.0
        %4235 = vmatprep.subr.mxu0 0.0
        %4236 = vmatpush1.msra.mxu0 0.0
        %4237 = vmatprep.subr.mxu0 0.0
        %4238 = vmatpush1.msra.mxu0 0.0
        %4239 = vmatprep.subr.mxu0 0.0
        %4240 = vmatpush1.msra.mxu0 0.0
        %4241 = vmatprep.subr.mxu0 0.0
        %4242 = vmatpush1.msra.mxu0 0.0
        %4243 = vmatprep.subr.mxu0 0.0
        %4244 = vmatpush1.msra.mxu0 0.0
        %4245 = vmatprep.mubr.f32.mxu0 0.0
        %4246 = vmatmul.mubr.f32.gmra.mrb[0].mxu0 %v4173
        %v4247 = vpop.f32.mrb[0].mxu0
        %v4248 = vadd.f32 %v4168, %v4247
        %v4249 = vpop.f32.mrb[0].mxu0
        %v4250 = vadd.f32 %v4170, %v4249
        %4251 = vdwg.mxu0
        %4252 = vrot.lane.b32.xlu0 %v3633, 126
        %v4253 = vpop.permute.xlu0 %4252
        %4254 = vrot.lane.b32.xlu0 %v3634, 126
        %v4255 = vpop.permute.xlu0 %4254
        %4256 = vrot.lane.b32.xlu0 %v3636, 126
        %v4257 = vpop.permute.xlu0 %4256
        %4258 = vrot.lane.b32.xlu0 %v3637, 126
        %v4259 = vpop.permute.xlu0 %4258
        %4260 = vrot.lane.b32.xlu0 %v3639, 126
        %v4261 = vpop.permute.xlu0 %4260
        %4262 = vrot.lane.b32.xlu0 %v3640, 126
        %v4263 = vpop.permute.xlu0 %4262
        %4264 = vrot.lane.b32.xlu0 %v3642, 126
        %v4265 = vpop.permute.xlu0 %4264
        %4266 = vrot.lane.b32.xlu0 %v3643, 126
        %v4267 = vpop.permute.xlu0 %4266
        %v4276 = vcombine.low %v4253, %v4261
        %v4277 = vcombine.high %v4253, %v4261
        %v4279 = vunpack.c.l.s4 1983009808
        %v4280 = vunpack.c.0.s8 %v4279
        %v4281 = vlaneseq
        %v4282 = vshrl.u32 %v4281, 7
        %v4283 = vsub.s32 %v4280, %v4282
        %v4284 = vrot.slane %v4276, %v4283
        %v4286 = vunpack.c.l.s4 1983009808
        %v4287 = vunpack.c.0.s8 %v4286
        %v4288 = vlaneseq
        %v4289 = vshrl.u32 %v4288, 7
        %v4290 = vsub.s32 %v4287, %v4289
        %v4291 = vrot.slane %v4277, %v4290
        %v4292 = vcombine.low %v4257, %v4265
        %v4293 = vcombine.high %v4257, %v4265
        %v4295 = vunpack.c.l.s4 1983009808
        %v4296 = vunpack.c.0.s8 %v4295
        %v4297 = vlaneseq
        %v4298 = vshrl.u32 %v4297, 7
        %v4299 = vsub.s32 %v4296, %v4298
        %v4300 = vrot.slane %v4292, %v4299
        %v4302 = vunpack.c.l.s4 1983009808
        %v4303 = vunpack.c.0.s8 %v4302
        %v4304 = vlaneseq
        %v4305 = vshrl.u32 %v4304, 7
        %v4306 = vsub.s32 %v4303, %v4305
        %v4307 = vrot.slane %v4293, %v4306
        %v4308 = vcombine.low %v4284, %v4300
        %v4309 = vcombine.high %v4284, %v4300
        %v4311 = vunpack.c.l.s4 1934713408
        %v4312 = vunpack.c.0.s8 %v4311
        %v4313 = vlaneseq
        %v4314 = vshrl.u32 %v4313, 7
        %v4315 = vsub.s32 %v4312, %v4314
        %v4316 = vrot.slane %v4308, %v4315
        %v4318 = vunpack.c.l.s4 1934713408
        %v4319 = vunpack.c.0.s8 %v4318
        %v4320 = vlaneseq
        %v4321 = vshrl.u32 %v4320, 7
        %v4322 = vsub.s32 %v4319, %v4321
        %v4323 = vrot.slane %v4309, %v4322
        %v4324 = vcombine.low %v4291, %v4307
        %v4325 = vcombine.high %v4291, %v4307
        %v4327 = vunpack.c.l.s4 1934713408
        %v4328 = vunpack.c.0.s8 %v4327
        %v4329 = vlaneseq
        %v4330 = vshrl.u32 %v4329, 7
        %v4331 = vsub.s32 %v4328, %v4330
        %v4332 = vrot.slane %v4324, %v4331
        %v4334 = vunpack.c.l.s4 1934713408
        %v4335 = vunpack.c.0.s8 %v4334
        %v4336 = vlaneseq
        %v4337 = vshrl.u32 %v4336, 7
        %v4338 = vsub.s32 %v4335, %v4337
        %v4339 = vrot.slane %v4325, %v4338
        %v4340 = vcombine.high %v4316, 0.0
        %v4341 = vcombine.high %v4323, 0.0
        %v4342 = vcombine.high %v4332, 0.0
        %v4343 = vcombine.high %v4339, 0.0
        %v4344 = vcombine.low %v4255, %v4263
        %v4345 = vcombine.high %v4255, %v4263
        %v4347 = vunpack.c.l.s4 1983009808
        %v4348 = vunpack.c.0.s8 %v4347
        %v4349 = vlaneseq
        %v4350 = vshrl.u32 %v4349, 7
        %v4351 = vsub.s32 %v4348, %v4350
        %v4352 = vrot.slane %v4344, %v4351
        %v4354 = vunpack.c.l.s4 1983009808
        %v4355 = vunpack.c.0.s8 %v4354
        %v4356 = vlaneseq
        %v4357 = vshrl.u32 %v4356, 7
        %v4358 = vsub.s32 %v4355, %v4357
        %v4359 = vrot.slane %v4345, %v4358
        %v4360 = vcombine.low %v4259, %v4267
        %v4361 = vcombine.high %v4259, %v4267
        %v4363 = vunpack.c.l.s4 1983009808
        %v4364 = vunpack.c.0.s8 %v4363
        %v4365 = vlaneseq
        %v4366 = vshrl.u32 %v4365, 7
        %v4367 = vsub.s32 %v4364, %v4366
        %v4368 = vrot.slane %v4360, %v4367
        %v4370 = vunpack.c.l.s4 1983009808
        %v4371 = vunpack.c.0.s8 %v4370
        %v4372 = vlaneseq
        %v4373 = vshrl.u32 %v4372, 7
        %v4374 = vsub.s32 %v4371, %v4373
        %v4375 = vrot.slane %v4361, %v4374
        %v4376 = vcombine.low %v4352, %v4368
        %v4377 = vcombine.high %v4352, %v4368
        %v4379 = vunpack.c.l.s4 1934713408
        %v4380 = vunpack.c.0.s8 %v4379
        %v4381 = vlaneseq
        %v4382 = vshrl.u32 %v4381, 7
        %v4383 = vsub.s32 %v4380, %v4382
        %v4384 = vrot.slane %v4376, %v4383
        %v4386 = vunpack.c.l.s4 1934713408
        %v4387 = vunpack.c.0.s8 %v4386
        %v4388 = vlaneseq
        %v4389 = vshrl.u32 %v4388, 7
        %v4390 = vsub.s32 %v4387, %v4389
        %v4391 = vrot.slane %v4377, %v4390
        %v4392 = vcombine.low %v4359, %v4375
        %v4393 = vcombine.high %v4359, %v4375
        %v4395 = vunpack.c.l.s4 1934713408
        %v4396 = vunpack.c.0.s8 %v4395
        %v4397 = vlaneseq
        %v4398 = vshrl.u32 %v4397, 7
        %v4399 = vsub.s32 %v4396, %v4398
        %v4400 = vrot.slane %v4392, %v4399
        %v4402 = vunpack.c.l.s4 1934713408
        %v4403 = vunpack.c.0.s8 %v4402
        %v4404 = vlaneseq
        %v4405 = vshrl.u32 %v4404, 7
        %v4406 = vsub.s32 %v4403, %v4405
        %v4407 = vrot.slane %v4393, %v4406
        %v4408 = vcombine.high %v4384, 0.0
        %v4409 = vcombine.high %v4391, 0.0
        %v4410 = vcombine.high %v4400, 0.0
        %v4411 = vcombine.high %v4407, 0.0
        %4413 = vrot.lane.b32.xlu0 %v4340, 16
        %v4414 = vpop.permute.xlu0 %4413
        %4417 = vrot.lane.b32.xlu0 %v4323, 32
        %v4418 = vpop.permute.xlu0 %4417
        %4421 = vrot.lane.b32.xlu0 %v4341, 48
        %v4422 = vpop.permute.xlu0 %4421
        %4425 = vrot.lane.b32.xlu0 %v4332, 64
        %v4426 = vpop.permute.xlu0 %4425
        %4429 = vrot.lane.b32.xlu0 %v4342, 80
        %v4430 = vpop.permute.xlu0 %4429
        %4433 = vrot.lane.b32.xlu0 %v4339, 96
        %v4434 = vpop.permute.xlu0 %4433
        %4437 = vrot.lane.b32.xlu0 %v4343, 112
        %v4438 = vpop.permute.xlu0 %4437
        %4441 = vrot.lane.b32.xlu0 %v4408, 16
        %v4442 = vpop.permute.xlu0 %4441
        %4445 = vrot.lane.b32.xlu0 %v4391, 32
        %v4446 = vpop.permute.xlu0 %4445
        %4449 = vrot.lane.b32.xlu0 %v4409, 48
        %v4450 = vpop.permute.xlu0 %4449
        %4453 = vrot.lane.b32.xlu0 %v4400, 64
        %v4454 = vpop.permute.xlu0 %4453
        %4457 = vrot.lane.b32.xlu0 %v4410, 80
        %v4458 = vpop.permute.xlu0 %4457
        %4461 = vrot.lane.b32.xlu0 %v4407, 96
        %v4462 = vpop.permute.xlu0 %4461
        %4465 = vrot.lane.b32.xlu0 %v4411, 112
        %v4466 = vpop.permute.xlu0 %4465
        %v4468 = vsel %vm615, %v4316, %v4414
        %v4469 = vsel %vm617, %v4468, %v4418
        %v4470 = vsel %vm619, %v4469, %v4422
        %v4471 = vsel %vm621, %v4470, %v4426
        %v4472 = vsel %vm623, %v4471, %v4430
        %v4473 = vsel %vm625, %v4472, %v4434
        %v4474 = vsel %vm627, %v4473, %v4438
        %v4475 = vsel %vm615, %v4384, %v4442
        %v4476 = vsel %vm617, %v4475, %v4446
        %v4477 = vsel %vm619, %v4476, %v4450
        %v4478 = vsel %vm621, %v4477, %v4454
        %v4479 = vsel %vm623, %v4478, %v4458
        %v4480 = vsel %vm625, %v4479, %v4462
        %v4481 = vsel %vm627, %v4480, %v4466
        %s4482 = scalar_lea.vmem [#allocation6], 8
        %v4483 = vld [vmem:[%s4482] sm:$0xf]
        %v4485 = vsel %vm877, %v4483, 0
        %v4488 = vsel %vm881, %v4474, 0
        %v4491 = vsel %vm881, %v4481, 0
        %4493 = vmatprep.subr.mxu0 %v4491
        %4494 = vmatpush1.msra.mxu0 %v4488
        %4495 = vmatprep.subr.mxu0 0.0
        %4496 = vmatpush1.msra.mxu0 0.0
        %4497 = vmatprep.subr.mxu0 0.0
        %4498 = vmatpush1.msra.mxu0 0.0
        %4499 = vmatprep.subr.mxu0 0.0
        %4500 = vmatpush1.msra.mxu0 0.0
        %4501 = vmatprep.subr.mxu0 0.0
        %4502 = vmatpush1.msra.mxu0 0.0
        %4503 = vmatprep.subr.mxu0 0.0
        %4504 = vmatpush1.msra.mxu0 0.0
        %4505 = vmatprep.subr.mxu0 0.0
        %4506 = vmatpush1.msra.mxu0 0.0
        %4507 = vmatprep.subr.mxu0 0.0
        %4508 = vmatpush1.msra.mxu0 0.0
        %4509 = vmatprep.subr.mxu0 0.0
        %4510 = vmatpush1.msra.mxu0 0.0
        %4511 = vmatprep.subr.mxu0 0.0
        %4512 = vmatpush1.msra.mxu0 0.0
        %4513 = vmatprep.subr.mxu0 0.0
        %4514 = vmatpush1.msra.mxu0 0.0
        %4515 = vmatprep.subr.mxu0 0.0
        %4516 = vmatpush1.msra.mxu0 0.0
        %4517 = vmatprep.subr.mxu0 0.0
        %4518 = vmatpush1.msra.mxu0 0.0
        %4519 = vmatprep.subr.mxu0 0.0
        %4520 = vmatpush1.msra.mxu0 0.0
        %4521 = vmatprep.subr.mxu0 0.0
        %4522 = vmatpush1.msra.mxu0 0.0
        %4523 = vmatprep.subr.mxu0 0.0
        %4524 = vmatpush1.msra.mxu0 0.0
        %4525 = vmatprep.subr.mxu0 0.0
        %4526 = vmatpush1.msra.mxu0 0.0
        %4527 = vmatprep.subr.mxu0 0.0
        %4528 = vmatpush1.msra.mxu0 0.0
        %4529 = vmatprep.subr.mxu0 0.0
        %4530 = vmatpush1.msra.mxu0 0.0
        %4531 = vmatprep.subr.mxu0 0.0
        %4532 = vmatpush1.msra.mxu0 0.0
        %4533 = vmatprep.subr.mxu0 0.0
        %4534 = vmatpush1.msra.mxu0 0.0
        %4535 = vmatprep.subr.mxu0 0.0
        %4536 = vmatpush1.msra.mxu0 0.0
        %4537 = vmatprep.subr.mxu0 0.0
        %4538 = vmatpush1.msra.mxu0 0.0
        %4539 = vmatprep.subr.mxu0 0.0
        %4540 = vmatpush1.msra.mxu0 0.0
        %4541 = vmatprep.subr.mxu0 0.0
        %4542 = vmatpush1.msra.mxu0 0.0
        %4543 = vmatprep.subr.mxu0 0.0
        %4544 = vmatpush1.msra.mxu0 0.0
        %4545 = vmatprep.subr.mxu0 0.0
        %4546 = vmatpush1.msra.mxu0 0.0
        %4547 = vmatprep.subr.mxu0 0.0
        %4548 = vmatpush1.msra.mxu0 0.0
        %4549 = vmatprep.subr.mxu0 0.0
        %4550 = vmatpush1.msra.mxu0 0.0
        %4551 = vmatprep.subr.mxu0 0.0
        %4552 = vmatpush1.msra.mxu0 0.0
        %4553 = vmatprep.subr.mxu0 0.0
        %4554 = vmatpush1.msra.mxu0 0.0
        %4555 = vmatprep.subr.mxu0 0.0
        %4556 = vmatpush1.msra.mxu0 0.0
        %4557 = vmatprep.mubr.f32.mxu0 0.0
        %4558 = vmatmul.mubr.f32.gmra.mrb[0].mxu0 %v4485
        %v4559 = vpop.f32.mrb[0].mxu0
        %v4560 = vadd.f32 0.0, %v4559
        %v4561 = vpop.f32.mrb[0].mxu0
        %v4562 = vadd.f32 0.0, %v4561
        %4563 = vdwg.mxu0
        %v4564 = vadd.f32 %v4248, %v4560
        %v4565 = vadd.f32 %v4250, %v4562
        %v4570 = vrot.slane %v3633, 1
        %v4571 = vrot.slane %v3634, 1
        %v4572 = vsel %vm1357, %v4570, %v4571
        %v4573 = vrot.slane %v3635, 1
        %v4574 = vsel %vm1357, %v4571, %v4573
        %v4575 = vrot.slane %v3636, 1
        %v4576 = vrot.slane %v3637, 1
        %v4577 = vsel %vm1357, %v4575, %v4576
        %v4578 = vrot.slane %v3638, 1
        %v4579 = vsel %vm1357, %v4576, %v4578
        %v4580 = vrot.slane %v3639, 1
        %v4581 = vrot.slane %v3640, 1
        %v4582 = vsel %vm1357, %v4580, %v4581
        %v4583 = vrot.slane %v3641, 1
        %v4584 = vsel %vm1357, %v4581, %v4583
        %v4585 = vrot.slane %v3642, 1
        %v4586 = vrot.slane %v3643, 1
        %v4587 = vsel %vm1357, %v4585, %v4586
        %v4588 = vrot.slane %v3644, 1
        %v4589 = vsel %vm1357, %v4586, %v4588
        %v4598 = vcombine.low %v4572, %v4582
        %v4599 = vcombine.high %v4572, %v4582
        %v4601 = vunpack.c.l.s4 1983009808
        %v4602 = vunpack.c.0.s8 %v4601
        %v4603 = vlaneseq
        %v4604 = vshrl.u32 %v4603, 7
        %v4605 = vsub.s32 %v4602, %v4604
        %v4606 = vrot.slane %v4598, %v4605
        %v4608 = vunpack.c.l.s4 1983009808
        %v4609 = vunpack.c.0.s8 %v4608
        %v4610 = vlaneseq
        %v4611 = vshrl.u32 %v4610, 7
        %v4612 = vsub.s32 %v4609, %v4611
        %v4613 = vrot.slane %v4599, %v4612
        %v4614 = vcombine.low %v4577, %v4587
        %v4615 = vcombine.high %v4577, %v4587
        %v4617 = vunpack.c.l.s4 1983009808
        %v4618 = vunpack.c.0.s8 %v4617
        %v4619 = vlaneseq
        %v4620 = vshrl.u32 %v4619, 7
        %v4621 = vsub.s32 %v4618, %v4620
        %v4622 = vrot.slane %v4614, %v4621
        %v4624 = vunpack.c.l.s4 1983009808
        %v4625 = vunpack.c.0.s8 %v4624
        %v4626 = vlaneseq
        %v4627 = vshrl.u32 %v4626, 7
        %v4628 = vsub.s32 %v4625, %v4627
        %v4629 = vrot.slane %v4615, %v4628
        %v4630 = vcombine.low %v4606, %v4622
        %v4631 = vcombine.high %v4606, %v4622
        %v4633 = vunpack.c.l.s4 1934713408
        %v4634 = vunpack.c.0.s8 %v4633
        %v4635 = vlaneseq
        %v4636 = vshrl.u32 %v4635, 7
        %v4637 = vsub.s32 %v4634, %v4636
        %v4638 = vrot.slane %v4630, %v4637
        %v4640 = vunpack.c.l.s4 1934713408
        %v4641 = vunpack.c.0.s8 %v4640
        %v4642 = vlaneseq
        %v4643 = vshrl.u32 %v4642, 7
        %v4644 = vsub.s32 %v4641, %v4643
        %v4645 = vrot.slane %v4631, %v4644
        %v4646 = vcombine.low %v4613, %v4629
        %v4647 = vcombine.high %v4613, %v4629
        %v4649 = vunpack.c.l.s4 1934713408
        %v4650 = vunpack.c.0.s8 %v4649
        %v4651 = vlaneseq
        %v4652 = vshrl.u32 %v4651, 7
        %v4653 = vsub.s32 %v4650, %v4652
        %v4654 = vrot.slane %v4646, %v4653
        %v4656 = vunpack.c.l.s4 1934713408
        %v4657 = vunpack.c.0.s8 %v4656
        %v4658 = vlaneseq
        %v4659 = vshrl.u32 %v4658, 7
        %v4660 = vsub.s32 %v4657, %v4659
        %v4661 = vrot.slane %v4647, %v4660
        %v4662 = vcombine.high %v4638, 0.0
        %v4663 = vcombine.high %v4645, 0.0
        %v4664 = vcombine.high %v4654, 0.0
        %v4665 = vcombine.high %v4661, 0.0
        %v4666 = vcombine.low %v4574, %v4584
        %v4667 = vcombine.high %v4574, %v4584
        %v4669 = vunpack.c.l.s4 1983009808
        %v4670 = vunpack.c.0.s8 %v4669
        %v4671 = vlaneseq
        %v4672 = vshrl.u32 %v4671, 7
        %v4673 = vsub.s32 %v4670, %v4672
        %v4674 = vrot.slane %v4666, %v4673
        %v4676 = vunpack.c.l.s4 1983009808
        %v4677 = vunpack.c.0.s8 %v4676
        %v4678 = vlaneseq
        %v4679 = vshrl.u32 %v4678, 7
        %v4680 = vsub.s32 %v4677, %v4679
        %v4681 = vrot.slane %v4667, %v4680
        %v4682 = vcombine.low %v4579, %v4589
        %v4683 = vcombine.high %v4579, %v4589
        %v4685 = vunpack.c.l.s4 1983009808
        %v4686 = vunpack.c.0.s8 %v4685
        %v4687 = vlaneseq
        %v4688 = vshrl.u32 %v4687, 7
        %v4689 = vsub.s32 %v4686, %v4688
        %v4690 = vrot.slane %v4682, %v4689
        %v4692 = vunpack.c.l.s4 1983009808
        %v4693 = vunpack.c.0.s8 %v4692
        %v4694 = vlaneseq
        %v4695 = vshrl.u32 %v4694, 7
        %v4696 = vsub.s32 %v4693, %v4695
        %v4697 = vrot.slane %v4683, %v4696
        %v4698 = vcombine.low %v4674, %v4690
        %v4699 = vcombine.high %v4674, %v4690
        %v4701 = vunpack.c.l.s4 1934713408
        %v4702 = vunpack.c.0.s8 %v4701
        %v4703 = vlaneseq
        %v4704 = vshrl.u32 %v4703, 7
        %v4705 = vsub.s32 %v4702, %v4704
        %v4706 = vrot.slane %v4698, %v4705
        %v4708 = vunpack.c.l.s4 1934713408
        %v4709 = vunpack.c.0.s8 %v4708
        %v4710 = vlaneseq
        %v4711 = vshrl.u32 %v4710, 7
        %v4712 = vsub.s32 %v4709, %v4711
        %v4713 = vrot.slane %v4699, %v4712
        %v4714 = vcombine.low %v4681, %v4697
        %v4715 = vcombine.high %v4681, %v4697
        %v4717 = vunpack.c.l.s4 1934713408
        %v4718 = vunpack.c.0.s8 %v4717
        %v4719 = vlaneseq
        %v4720 = vshrl.u32 %v4719, 7
        %v4721 = vsub.s32 %v4718, %v4720
        %v4722 = vrot.slane %v4714, %v4721
        %v4724 = vunpack.c.l.s4 1934713408
        %v4725 = vunpack.c.0.s8 %v4724
        %v4726 = vlaneseq
        %v4727 = vshrl.u32 %v4726, 7
        %v4728 = vsub.s32 %v4725, %v4727
        %v4729 = vrot.slane %v4715, %v4728
        %v4730 = vcombine.high %v4706, 0.0
        %v4731 = vcombine.high %v4713, 0.0
        %v4732 = vcombine.high %v4722, 0.0
        %v4733 = vcombine.high %v4729, 0.0
        %4735 = vrot.lane.b32.xlu0 %v4662, 16
        %v4736 = vpop.permute.xlu0 %4735
        %4739 = vrot.lane.b32.xlu0 %v4645, 32
        %v4740 = vpop.permute.xlu0 %4739
        %4743 = vrot.lane.b32.xlu0 %v4663, 48
        %v4744 = vpop.permute.xlu0 %4743
        %4747 = vrot.lane.b32.xlu0 %v4654, 64
        %v4748 = vpop.permute.xlu0 %4747
        %4751 = vrot.lane.b32.xlu0 %v4664, 80
        %v4752 = vpop.permute.xlu0 %4751
        %4755 = vrot.lane.b32.xlu0 %v4661, 96
        %v4756 = vpop.permute.xlu0 %4755
        %4759 = vrot.lane.b32.xlu0 %v4665, 112
        %v4760 = vpop.permute.xlu0 %4759
        %4763 = vrot.lane.b32.xlu0 %v4730, 16
        %v4764 = vpop.permute.xlu0 %4763
        %4767 = vrot.lane.b32.xlu0 %v4713, 32
        %v4768 = vpop.permute.xlu0 %4767
        %4771 = vrot.lane.b32.xlu0 %v4731, 48
        %v4772 = vpop.permute.xlu0 %4771
        %4775 = vrot.lane.b32.xlu0 %v4722, 64
        %v4776 = vpop.permute.xlu0 %4775
        %4779 = vrot.lane.b32.xlu0 %v4732, 80
        %v4780 = vpop.permute.xlu0 %4779
        %4783 = vrot.lane.b32.xlu0 %v4729, 96
        %v4784 = vpop.permute.xlu0 %4783
        %4787 = vrot.lane.b32.xlu0 %v4733, 112
        %v4788 = vpop.permute.xlu0 %4787
        %v4790 = vsel %vm615, %v4638, %v4736
        %v4791 = vsel %vm617, %v4790, %v4740
        %v4792 = vsel %vm619, %v4791, %v4744
        %v4793 = vsel %vm621, %v4792, %v4748
        %v4794 = vsel %vm623, %v4793, %v4752
        %v4795 = vsel %vm625, %v4794, %v4756
        %v4796 = vsel %vm627, %v4795, %v4760
        %v4797 = vsel %vm615, %v4706, %v4764
        %v4798 = vsel %vm617, %v4797, %v4768
        %v4799 = vsel %vm619, %v4798, %v4772
        %v4800 = vsel %vm621, %v4799, %v4776
        %v4801 = vsel %vm623, %v4800, %v4780
        %v4802 = vsel %vm625, %v4801, %v4784
        %v4803 = vsel %vm627, %v4802, %v4788
        %s4804 = scalar_lea.vmem [#allocation6], 12
        %v4805 = vld [vmem:[%s4804] sm:$0xf]
        %v4807 = vsel %vm877, %v4805, 0
        %v4810 = vsel %vm881, %v4796, 0
        %v4813 = vsel %vm881, %v4803, 0
        %4815 = vmatprep.subr.mxu0 %v4813
        %4816 = vmatpush1.msra.mxu0 %v4810
        %4817 = vmatprep.subr.mxu0 0.0
        %4818 = vmatpush1.msra.mxu0 0.0
        %4819 = vmatprep.subr.mxu0 0.0
        %4820 = vmatpush1.msra.mxu0 0.0
        %4821 = vmatprep.subr.mxu0 0.0
        %4822 = vmatpush1.msra.mxu0 0.0
        %4823 = vmatprep.subr.mxu0 0.0
        %4824 = vmatpush1.msra.mxu0 0.0
        %4825 = vmatprep.subr.mxu0 0.0
        %4826 = vmatpush1.msra.mxu0 0.0
        %4827 = vmatprep.subr.mxu0 0.0
        %4828 = vmatpush1.msra.mxu0 0.0
        %4829 = vmatprep.subr.mxu0 0.0
        %4830 = vmatpush1.msra.mxu0 0.0
        %4831 = vmatprep.subr.mxu0 0.0
        %4832 = vmatpush1.msra.mxu0 0.0
        %4833 = vmatprep.subr.mxu0 0.0
        %4834 = vmatpush1.msra.mxu0 0.0
        %4835 = vmatprep.subr.mxu0 0.0
        %4836 = vmatpush1.msra.mxu0 0.0
        %4837 = vmatprep.subr.mxu0 0.0
        %4838 = vmatpush1.msra.mxu0 0.0
        %4839 = vmatprep.subr.mxu0 0.0
        %4840 = vmatpush1.msra.mxu0 0.0
        %4841 = vmatprep.subr.mxu0 0.0
        %4842 = vmatpush1.msra.mxu0 0.0
        %4843 = vmatprep.subr.mxu0 0.0
        %4844 = vmatpush1.msra.mxu0 0.0
        %4845 = vmatprep.subr.mxu0 0.0
        %4846 = vmatpush1.msra.mxu0 0.0
        %4847 = vmatprep.subr.mxu0 0.0
        %4848 = vmatpush1.msra.mxu0 0.0
        %4849 = vmatprep.subr.mxu0 0.0
        %4850 = vmatpush1.msra.mxu0 0.0
        %4851 = vmatprep.subr.mxu0 0.0
        %4852 = vmatpush1.msra.mxu0 0.0
        %4853 = vmatprep.subr.mxu0 0.0
        %4854 = vmatpush1.msra.mxu0 0.0
        %4855 = vmatprep.subr.mxu0 0.0
        %4856 = vmatpush1.msra.mxu0 0.0
        %4857 = vmatprep.subr.mxu0 0.0
        %4858 = vmatpush1.msra.mxu0 0.0
        %4859 = vmatprep.subr.mxu0 0.0
        %4860 = vmatpush1.msra.mxu0 0.0
        %4861 = vmatprep.subr.mxu0 0.0
        %4862 = vmatpush1.msra.mxu0 0.0
        %4863 = vmatprep.subr.mxu0 0.0
        %4864 = vmatpush1.msra.mxu0 0.0
        %4865 = vmatprep.subr.mxu0 0.0
        %4866 = vmatpush1.msra.mxu0 0.0
        %4867 = vmatprep.subr.mxu0 0.0
        %4868 = vmatpush1.msra.mxu0 0.0
        %4869 = vmatprep.subr.mxu0 0.0
        %4870 = vmatpush1.msra.mxu0 0.0
        %4871 = vmatprep.subr.mxu0 0.0
        %4872 = vmatpush1.msra.mxu0 0.0
        %4873 = vmatprep.subr.mxu0 0.0
        %4874 = vmatpush1.msra.mxu0 0.0
        %4875 = vmatprep.subr.mxu0 0.0
        %4876 = vmatpush1.msra.mxu0 0.0
        %4877 = vmatprep.subr.mxu0 0.0
        %4878 = vmatpush1.msra.mxu0 0.0
        %4879 = vmatprep.mubr.f32.mxu0 0.0
        %4880 = vmatmul.mubr.f32.gmra.mrb[0].mxu0 %v4807
        %v4881 = vpop.f32.mrb[0].mxu0
        %v4882 = vadd.f32 0.0, %v4881
        %v4883 = vpop.f32.mrb[0].mxu0
        %v4884 = vadd.f32 0.0, %v4883
        %4885 = vdwg.mxu0
        %v4886 = vadd.f32 %v4564, %v4882
        %v4887 = vadd.f32 %v4565, %v4884
        %4888 = vrot.lane.b32.xlu0 %v4572, 127
        %v4889 = vpop.permute.xlu0 %4888
        %4890 = vrot.lane.b32.xlu0 %v4574, 127
        %v4891 = vpop.permute.xlu0 %4890
        %4892 = vrot.lane.b32.xlu0 %v4577, 127
        %v4893 = vpop.permute.xlu0 %4892
        %4894 = vrot.lane.b32.xlu0 %v4579, 127
        %v4895 = vpop.permute.xlu0 %4894
        %4896 = vrot.lane.b32.xlu0 %v4582, 127
        %v4897 = vpop.permute.xlu0 %4896
        %4898 = vrot.lane.b32.xlu0 %v4584, 127
        %v4899 = vpop.permute.xlu0 %4898
        %4900 = vrot.lane.b32.xlu0 %v4587, 127
        %v4901 = vpop.permute.xlu0 %4900
        %4902 = vrot.lane.b32.xlu0 %v4589, 127
        %v4903 = vpop.permute.xlu0 %4902
        %v4912 = vcombine.low %v4889, %v4897
        %v4913 = vcombine.high %v4889, %v4897
        %v4915 = vunpack.c.l.s4 1983009808
        %v4916 = vunpack.c.0.s8 %v4915
        %v4917 = vlaneseq
        %v4918 = vshrl.u32 %v4917, 7
        %v4919 = vsub.s32 %v4916, %v4918
        %v4920 = vrot.slane %v4912, %v4919
        %v4922 = vunpack.c.l.s4 1983009808
        %v4923 = vunpack.c.0.s8 %v4922
        %v4924 = vlaneseq
        %v4925 = vshrl.u32 %v4924, 7
        %v4926 = vsub.s32 %v4923, %v4925
        %v4927 = vrot.slane %v4913, %v4926
        %v4928 = vcombine.low %v4893, %v4901
        %v4929 = vcombine.high %v4893, %v4901
        %v4931 = vunpack.c.l.s4 1983009808
        %v4932 = vunpack.c.0.s8 %v4931
        %v4933 = vlaneseq
        %v4934 = vshrl.u32 %v4933, 7
        %v4935 = vsub.s32 %v4932, %v4934
        %v4936 = vrot.slane %v4928, %v4935
        %v4938 = vunpack.c.l.s4 1983009808
        %v4939 = vunpack.c.0.s8 %v4938
        %v4940 = vlaneseq
        %v4941 = vshrl.u32 %v4940, 7
        %v4942 = vsub.s32 %v4939, %v4941
        %v4943 = vrot.slane %v4929, %v4942
        %v4944 = vcombine.low %v4920, %v4936
        %v4945 = vcombine.high %v4920, %v4936
        %v4947 = vunpack.c.l.s4 1934713408
        %v4948 = vunpack.c.0.s8 %v4947
        %v4949 = vlaneseq
        %v4950 = vshrl.u32 %v4949, 7
        %v4951 = vsub.s32 %v4948, %v4950
        %v4952 = vrot.slane %v4944, %v4951
        %v4954 = vunpack.c.l.s4 1934713408
        %v4955 = vunpack.c.0.s8 %v4954
        %v4956 = vlaneseq
        %v4957 = vshrl.u32 %v4956, 7
        %v4958 = vsub.s32 %v4955, %v4957
        %v4959 = vrot.slane %v4945, %v4958
        %v4960 = vcombine.low %v4927, %v4943
        %v4961 = vcombine.high %v4927, %v4943
        %v4963 = vunpack.c.l.s4 1934713408
        %v4964 = vunpack.c.0.s8 %v4963
        %v4965 = vlaneseq
        %v4966 = vshrl.u32 %v4965, 7
        %v4967 = vsub.s32 %v4964, %v4966
        %v4968 = vrot.slane %v4960, %v4967
        %v4970 = vunpack.c.l.s4 1934713408
        %v4971 = vunpack.c.0.s8 %v4970
        %v4972 = vlaneseq
        %v4973 = vshrl.u32 %v4972, 7
        %v4974 = vsub.s32 %v4971, %v4973
        %v4975 = vrot.slane %v4961, %v4974
        %v4976 = vcombine.high %v4952, 0.0
        %v4977 = vcombine.high %v4959, 0.0
        %v4978 = vcombine.high %v4968, 0.0
        %v4979 = vcombine.high %v4975, 0.0
        %v4980 = vcombine.low %v4891, %v4899
        %v4981 = vcombine.high %v4891, %v4899
        %v4983 = vunpack.c.l.s4 1983009808
        %v4984 = vunpack.c.0.s8 %v4983
        %v4985 = vlaneseq
        %v4986 = vshrl.u32 %v4985, 7
        %v4987 = vsub.s32 %v4984, %v4986
        %v4988 = vrot.slane %v4980, %v4987
        %v4990 = vunpack.c.l.s4 1983009808
        %v4991 = vunpack.c.0.s8 %v4990
        %v4992 = vlaneseq
        %v4993 = vshrl.u32 %v4992, 7
        %v4994 = vsub.s32 %v4991, %v4993
        %v4995 = vrot.slane %v4981, %v4994
        %v4996 = vcombine.low %v4895, %v4903
        %v4997 = vcombine.high %v4895, %v4903
        %v4999 = vunpack.c.l.s4 1983009808
        %v5000 = vunpack.c.0.s8 %v4999
        %v5001 = vlaneseq
        %v5002 = vshrl.u32 %v5001, 7
        %v5003 = vsub.s32 %v5000, %v5002
        %v5004 = vrot.slane %v4996, %v5003
        %v5006 = vunpack.c.l.s4 1983009808
        %v5007 = vunpack.c.0.s8 %v5006
        %v5008 = vlaneseq
        %v5009 = vshrl.u32 %v5008, 7
        %v5010 = vsub.s32 %v5007, %v5009
        %v5011 = vrot.slane %v4997, %v5010
        %v5012 = vcombine.low %v4988, %v5004
        %v5013 = vcombine.high %v4988, %v5004
        %v5015 = vunpack.c.l.s4 1934713408
        %v5016 = vunpack.c.0.s8 %v5015
        %v5017 = vlaneseq
        %v5018 = vshrl.u32 %v5017, 7
        %v5019 = vsub.s32 %v5016, %v5018
        %v5020 = vrot.slane %v5012, %v5019
        %v5022 = vunpack.c.l.s4 1934713408
        %v5023 = vunpack.c.0.s8 %v5022
        %v5024 = vlaneseq
        %v5025 = vshrl.u32 %v5024, 7
        %v5026 = vsub.s32 %v5023, %v5025
        %v5027 = vrot.slane %v5013, %v5026
        %v5028 = vcombine.low %v4995, %v5011
        %v5029 = vcombine.high %v4995, %v5011
        %v5031 = vunpack.c.l.s4 1934713408
        %v5032 = vunpack.c.0.s8 %v5031
        %v5033 = vlaneseq
        %v5034 = vshrl.u32 %v5033, 7
        %v5035 = vsub.s32 %v5032, %v5034
        %v5036 = vrot.slane %v5028, %v5035
        %v5038 = vunpack.c.l.s4 1934713408
        %v5039 = vunpack.c.0.s8 %v5038
        %v5040 = vlaneseq
        %v5041 = vshrl.u32 %v5040, 7
        %v5042 = vsub.s32 %v5039, %v5041
        %v5043 = vrot.slane %v5029, %v5042
        %v5044 = vcombine.high %v5020, 0.0
        %v5045 = vcombine.high %v5027, 0.0
        %v5046 = vcombine.high %v5036, 0.0
        %v5047 = vcombine.high %v5043, 0.0
        %5049 = vrot.lane.b32.xlu0 %v4976, 16
        %v5050 = vpop.permute.xlu0 %5049
        %5053 = vrot.lane.b32.xlu0 %v4959, 32
        %v5054 = vpop.permute.xlu0 %5053
        %5057 = vrot.lane.b32.xlu0 %v4977, 48
        %v5058 = vpop.permute.xlu0 %5057
        %5061 = vrot.lane.b32.xlu0 %v4968, 64
        %v5062 = vpop.permute.xlu0 %5061
        %5065 = vrot.lane.b32.xlu0 %v4978, 80
        %v5066 = vpop.permute.xlu0 %5065
        %5069 = vrot.lane.b32.xlu0 %v4975, 96
        %v5070 = vpop.permute.xlu0 %5069
        %5073 = vrot.lane.b32.xlu0 %v4979, 112
        %v5074 = vpop.permute.xlu0 %5073
        %5077 = vrot.lane.b32.xlu0 %v5044, 16
        %v5078 = vpop.permute.xlu0 %5077
        %5081 = vrot.lane.b32.xlu0 %v5027, 32
        %v5082 = vpop.permute.xlu0 %5081
        %5085 = vrot.lane.b32.xlu0 %v5045, 48
        %v5086 = vpop.permute.xlu0 %5085
        %5089 = vrot.lane.b32.xlu0 %v5036, 64
        %v5090 = vpop.permute.xlu0 %5089
        %5093 = vrot.lane.b32.xlu0 %v5046, 80
        %v5094 = vpop.permute.xlu0 %5093
        %5097 = vrot.lane.b32.xlu0 %v5043, 96
        %v5098 = vpop.permute.xlu0 %5097
        %5101 = vrot.lane.b32.xlu0 %v5047, 112
        %v5102 = vpop.permute.xlu0 %5101
        %v5104 = vsel %vm615, %v4952, %v5050
        %v5105 = vsel %vm617, %v5104, %v5054
        %v5106 = vsel %vm619, %v5105, %v5058
        %v5107 = vsel %vm621, %v5106, %v5062
        %v5108 = vsel %vm623, %v5107, %v5066
        %v5109 = vsel %vm625, %v5108, %v5070
        %v5110 = vsel %vm627, %v5109, %v5074
        %v5111 = vsel %vm615, %v5020, %v5078
        %v5112 = vsel %vm617, %v5111, %v5082
        %v5113 = vsel %vm619, %v5112, %v5086
        %v5114 = vsel %vm621, %v5113, %v5090
        %v5115 = vsel %vm623, %v5114, %v5094
        %v5116 = vsel %vm625, %v5115, %v5098
        %v5117 = vsel %vm627, %v5116, %v5102
        %s5118 = scalar_lea.vmem [#allocation6], 16
        %v5119 = vld [vmem:[%s5118] sm:$0xf]
        %v5121 = vsel %vm877, %v5119, 0
        %v5124 = vsel %vm881, %v5110, 0
        %v5127 = vsel %vm881, %v5117, 0
        %5129 = vmatprep.subr.mxu0 %v5127
        %5130 = vmatpush1.msra.mxu0 %v5124
        %5131 = vmatprep.subr.mxu0 0.0
        %5132 = vmatpush1.msra.mxu0 0.0
        %5133 = vmatprep.subr.mxu0 0.0
        %5134 = vmatpush1.msra.mxu0 0.0
        %5135 = vmatprep.subr.mxu0 0.0
        %5136 = vmatpush1.msra.mxu0 0.0
        %5137 = vmatprep.subr.mxu0 0.0
        %5138 = vmatpush1.msra.mxu0 0.0
        %5139 = vmatprep.subr.mxu0 0.0
        %5140 = vmatpush1.msra.mxu0 0.0
        %5141 = vmatprep.subr.mxu0 0.0
        %5142 = vmatpush1.msra.mxu0 0.0
        %5143 = vmatprep.subr.mxu0 0.0
        %5144 = vmatpush1.msra.mxu0 0.0
        %5145 = vmatprep.subr.mxu0 0.0
        %5146 = vmatpush1.msra.mxu0 0.0
        %5147 = vmatprep.subr.mxu0 0.0
        %5148 = vmatpush1.msra.mxu0 0.0
        %5149 = vmatprep.subr.mxu0 0.0
        %5150 = vmatpush1.msra.mxu0 0.0
        %5151 = vmatprep.subr.mxu0 0.0
        %5152 = vmatpush1.msra.mxu0 0.0
        %5153 = vmatprep.subr.mxu0 0.0
        %5154 = vmatpush1.msra.mxu0 0.0
        %5155 = vmatprep.subr.mxu0 0.0
        %5156 = vmatpush1.msra.mxu0 0.0
        %5157 = vmatprep.subr.mxu0 0.0
        %5158 = vmatpush1.msra.mxu0 0.0
        %5159 = vmatprep.subr.mxu0 0.0
        %5160 = vmatpush1.msra.mxu0 0.0
        %5161 = vmatprep.subr.mxu0 0.0
        %5162 = vmatpush1.msra.mxu0 0.0
        %5163 = vmatprep.subr.mxu0 0.0
        %5164 = vmatpush1.msra.mxu0 0.0
        %5165 = vmatprep.subr.mxu0 0.0
        %5166 = vmatpush1.msra.mxu0 0.0
        %5167 = vmatprep.subr.mxu0 0.0
        %5168 = vmatpush1.msra.mxu0 0.0
        %5169 = vmatprep.subr.mxu0 0.0
        %5170 = vmatpush1.msra.mxu0 0.0
        %5171 = vmatprep.subr.mxu0 0.0
        %5172 = vmatpush1.msra.mxu0 0.0
        %5173 = vmatprep.subr.mxu0 0.0
        %5174 = vmatpush1.msra.mxu0 0.0
        %5175 = vmatprep.subr.mxu0 0.0
        %5176 = vmatpush1.msra.mxu0 0.0
        %5177 = vmatprep.subr.mxu0 0.0
        %5178 = vmatpush1.msra.mxu0 0.0
        %5179 = vmatprep.subr.mxu0 0.0
        %5180 = vmatpush1.msra.mxu0 0.0
        %5181 = vmatprep.subr.mxu0 0.0
        %5182 = vmatpush1.msra.mxu0 0.0
        %5183 = vmatprep.subr.mxu0 0.0
        %5184 = vmatpush1.msra.mxu0 0.0
        %5185 = vmatprep.subr.mxu0 0.0
        %5186 = vmatpush1.msra.mxu0 0.0
        %5187 = vmatprep.subr.mxu0 0.0
        %5188 = vmatpush1.msra.mxu0 0.0
        %5189 = vmatprep.subr.mxu0 0.0
        %5190 = vmatpush1.msra.mxu0 0.0
        %5191 = vmatprep.subr.mxu0 0.0
        %5192 = vmatpush1.msra.mxu0 0.0
        %5193 = vmatprep.mubr.f32.mxu0 0.0
        %5194 = vmatmul.mubr.f32.gmra.mrb[0].mxu0 %v5121
        %v5195 = vpop.f32.mrb[0].mxu0
        %v5196 = vadd.f32 0.0, %v5195
        %v5197 = vpop.f32.mrb[0].mxu0
        %v5198 = vadd.f32 0.0, %v5197
        %5199 = vdwg.mxu0
        %v5200 = vadd.f32 %v4886, %v5196
        %v5201 = vadd.f32 %v4887, %v5198
        %5202 = vrot.lane.b32.xlu0 %v4572, 126
        %v5203 = vpop.permute.xlu0 %5202
        %5204 = vrot.lane.b32.xlu0 %v4574, 126
        %v5205 = vpop.permute.xlu0 %5204
        %5206 = vrot.lane.b32.xlu0 %v4577, 126
        %v5207 = vpop.permute.xlu0 %5206
        %5208 = vrot.lane.b32.xlu0 %v4579, 126
        %v5209 = vpop.permute.xlu0 %5208
        %5210 = vrot.lane.b32.xlu0 %v4582, 126
        %v5211 = vpop.permute.xlu0 %5210
        %5212 = vrot.lane.b32.xlu0 %v4584, 126
        %v5213 = vpop.permute.xlu0 %5212
        %5214 = vrot.lane.b32.xlu0 %v4587, 126
        %v5215 = vpop.permute.xlu0 %5214
        %5216 = vrot.lane.b32.xlu0 %v4589, 126
        %v5217 = vpop.permute.xlu0 %5216
        %v5226 = vcombine.low %v5203, %v5211
        %v5227 = vcombine.high %v5203, %v5211
        %v5229 = vunpack.c.l.s4 1983009808
        %v5230 = vunpack.c.0.s8 %v5229
        %v5231 = vlaneseq
        %v5232 = vshrl.u32 %v5231, 7
        %v5233 = vsub.s32 %v5230, %v5232
        %v5234 = vrot.slane %v5226, %v5233
        %v5236 = vunpack.c.l.s4 1983009808
        %v5237 = vunpack.c.0.s8 %v5236
        %v5238 = vlaneseq
        %v5239 = vshrl.u32 %v5238, 7
        %v5240 = vsub.s32 %v5237, %v5239
        %v5241 = vrot.slane %v5227, %v5240
        %v5242 = vcombine.low %v5207, %v5215
        %v5243 = vcombine.high %v5207, %v5215
        %v5245 = vunpack.c.l.s4 1983009808
        %v5246 = vunpack.c.0.s8 %v5245
        %v5247 = vlaneseq
        %v5248 = vshrl.u32 %v5247, 7
        %v5249 = vsub.s32 %v5246, %v5248
        %v5250 = vrot.slane %v5242, %v5249
        %v5252 = vunpack.c.l.s4 1983009808
        %v5253 = vunpack.c.0.s8 %v5252
        %v5254 = vlaneseq
        %v5255 = vshrl.u32 %v5254, 7
        %v5256 = vsub.s32 %v5253, %v5255
        %v5257 = vrot.slane %v5243, %v5256
        %v5258 = vcombine.low %v5234, %v5250
        %v5259 = vcombine.high %v5234, %v5250
        %v5261 = vunpack.c.l.s4 1934713408
        %v5262 = vunpack.c.0.s8 %v5261
        %v5263 = vlaneseq
        %v5264 = vshrl.u32 %v5263, 7
        %v5265 = vsub.s32 %v5262, %v5264
        %v5266 = vrot.slane %v5258, %v5265
        %v5268 = vunpack.c.l.s4 1934713408
        %v5269 = vunpack.c.0.s8 %v5268
        %v5270 = vlaneseq
        %v5271 = vshrl.u32 %v5270, 7
        %v5272 = vsub.s32 %v5269, %v5271
        %v5273 = vrot.slane %v5259, %v5272
        %v5274 = vcombine.low %v5241, %v5257
        %v5275 = vcombine.high %v5241, %v5257
        %v5277 = vunpack.c.l.s4 1934713408
        %v5278 = vunpack.c.0.s8 %v5277
        %v5279 = vlaneseq
        %v5280 = vshrl.u32 %v5279, 7
        %v5281 = vsub.s32 %v5278, %v5280
        %v5282 = vrot.slane %v5274, %v5281
        %v5284 = vunpack.c.l.s4 1934713408
        %v5285 = vunpack.c.0.s8 %v5284
        %v5286 = vlaneseq
        %v5287 = vshrl.u32 %v5286, 7
        %v5288 = vsub.s32 %v5285, %v5287
        %v5289 = vrot.slane %v5275, %v5288
        %v5290 = vcombine.high %v5266, 0.0
        %v5291 = vcombine.high %v5273, 0.0
        %v5292 = vcombine.high %v5282, 0.0
        %v5293 = vcombine.high %v5289, 0.0
        %v5294 = vcombine.low %v5205, %v5213
        %v5295 = vcombine.high %v5205, %v5213
        %v5297 = vunpack.c.l.s4 1983009808
        %v5298 = vunpack.c.0.s8 %v5297
        %v5299 = vlaneseq
        %v5300 = vshrl.u32 %v5299, 7
        %v5301 = vsub.s32 %v5298, %v5300
        %v5302 = vrot.slane %v5294, %v5301
        %v5304 = vunpack.c.l.s4 1983009808
        %v5305 = vunpack.c.0.s8 %v5304
        %v5306 = vlaneseq
        %v5307 = vshrl.u32 %v5306, 7
        %v5308 = vsub.s32 %v5305, %v5307
        %v5309 = vrot.slane %v5295, %v5308
        %v5310 = vcombine.low %v5209, %v5217
        %v5311 = vcombine.high %v5209, %v5217
        %v5313 = vunpack.c.l.s4 1983009808
        %v5314 = vunpack.c.0.s8 %v5313
        %v5315 = vlaneseq
        %v5316 = vshrl.u32 %v5315, 7
        %v5317 = vsub.s32 %v5314, %v5316
        %v5318 = vrot.slane %v5310, %v5317
        %v5320 = vunpack.c.l.s4 1983009808
        %v5321 = vunpack.c.0.s8 %v5320
        %v5322 = vlaneseq
        %v5323 = vshrl.u32 %v5322, 7
        %v5324 = vsub.s32 %v5321, %v5323
        %v5325 = vrot.slane %v5311, %v5324
        %v5326 = vcombine.low %v5302, %v5318
        %v5327 = vcombine.high %v5302, %v5318
        %v5329 = vunpack.c.l.s4 1934713408
        %v5330 = vunpack.c.0.s8 %v5329
        %v5331 = vlaneseq
        %v5332 = vshrl.u32 %v5331, 7
        %v5333 = vsub.s32 %v5330, %v5332
        %v5334 = vrot.slane %v5326, %v5333
        %v5336 = vunpack.c.l.s4 1934713408
        %v5337 = vunpack.c.0.s8 %v5336
        %v5338 = vlaneseq
        %v5339 = vshrl.u32 %v5338, 7
        %v5340 = vsub.s32 %v5337, %v5339
        %v5341 = vrot.slane %v5327, %v5340
        %v5342 = vcombine.low %v5309, %v5325
        %v5343 = vcombine.high %v5309, %v5325
        %v5345 = vunpack.c.l.s4 1934713408
        %v5346 = vunpack.c.0.s8 %v5345
        %v5347 = vlaneseq
        %v5348 = vshrl.u32 %v5347, 7
        %v5349 = vsub.s32 %v5346, %v5348
        %v5350 = vrot.slane %v5342, %v5349
        %v5352 = vunpack.c.l.s4 1934713408
        %v5353 = vunpack.c.0.s8 %v5352
        %v5354 = vlaneseq
        %v5355 = vshrl.u32 %v5354, 7
        %v5356 = vsub.s32 %v5353, %v5355
        %v5357 = vrot.slane %v5343, %v5356
        %v5358 = vcombine.high %v5334, 0.0
        %v5359 = vcombine.high %v5341, 0.0
        %v5360 = vcombine.high %v5350, 0.0
        %v5361 = vcombine.high %v5357, 0.0
        %5363 = vrot.lane.b32.xlu0 %v5290, 16
        %v5364 = vpop.permute.xlu0 %5363
        %5367 = vrot.lane.b32.xlu0 %v5273, 32
        %v5368 = vpop.permute.xlu0 %5367
        %5371 = vrot.lane.b32.xlu0 %v5291, 48
        %v5372 = vpop.permute.xlu0 %5371
        %5375 = vrot.lane.b32.xlu0 %v5282, 64
        %v5376 = vpop.permute.xlu0 %5375
        %5379 = vrot.lane.b32.xlu0 %v5292, 80
        %v5380 = vpop.permute.xlu0 %5379
        %5383 = vrot.lane.b32.xlu0 %v5289, 96
        %v5384 = vpop.permute.xlu0 %5383
        %5387 = vrot.lane.b32.xlu0 %v5293, 112
        %v5388 = vpop.permute.xlu0 %5387
        %5391 = vrot.lane.b32.xlu0 %v5358, 16
        %v5392 = vpop.permute.xlu0 %5391
        %5395 = vrot.lane.b32.xlu0 %v5341, 32
        %v5396 = vpop.permute.xlu0 %5395
        %5399 = vrot.lane.b32.xlu0 %v5359, 48
        %v5400 = vpop.permute.xlu0 %5399
        %5403 = vrot.lane.b32.xlu0 %v5350, 64
        %v5404 = vpop.permute.xlu0 %5403
        %5407 = vrot.lane.b32.xlu0 %v5360, 80
        %v5408 = vpop.permute.xlu0 %5407
        %5411 = vrot.lane.b32.xlu0 %v5357, 96
        %v5412 = vpop.permute.xlu0 %5411
        %5415 = vrot.lane.b32.xlu0 %v5361, 112
        %v5416 = vpop.permute.xlu0 %5415
        %v5418 = vsel %vm615, %v5266, %v5364
        %v5419 = vsel %vm617, %v5418, %v5368
        %v5420 = vsel %vm619, %v5419, %v5372
        %v5421 = vsel %vm621, %v5420, %v5376
        %v5422 = vsel %vm623, %v5421, %v5380
        %v5423 = vsel %vm625, %v5422, %v5384
        %v5424 = vsel %vm627, %v5423, %v5388
        %v5425 = vsel %vm615, %v5334, %v5392
        %v5426 = vsel %vm617, %v5425, %v5396
        %v5427 = vsel %vm619, %v5426, %v5400
        %v5428 = vsel %vm621, %v5427, %v5404
        %v5429 = vsel %vm623, %v5428, %v5408
        %v5430 = vsel %vm625, %v5429, %v5412
        %v5431 = vsel %vm627, %v5430, %v5416
        %s5432 = scalar_lea.vmem [#allocation6], 20
        %v5433 = vld [vmem:[%s5432] sm:$0xf]
        %v5435 = vsel %vm877, %v5433, 0
        %v5438 = vsel %vm881, %v5424, 0
        %v5441 = vsel %vm881, %v5431, 0
        %5443 = vmatprep.subr.mxu0 %v5441
        %5444 = vmatpush1.msra.mxu0 %v5438
        %5445 = vmatprep.subr.mxu0 0.0
        %5446 = vmatpush1.msra.mxu0 0.0
        %5447 = vmatprep.subr.mxu0 0.0
        %5448 = vmatpush1.msra.mxu0 0.0
        %5449 = vmatprep.subr.mxu0 0.0
        %5450 = vmatpush1.msra.mxu0 0.0
        %5451 = vmatprep.subr.mxu0 0.0
        %5452 = vmatpush1.msra.mxu0 0.0
        %5453 = vmatprep.subr.mxu0 0.0
        %5454 = vmatpush1.msra.mxu0 0.0
        %5455 = vmatprep.subr.mxu0 0.0
        %5456 = vmatpush1.msra.mxu0 0.0
        %5457 = vmatprep.subr.mxu0 0.0
        %5458 = vmatpush1.msra.mxu0 0.0
        %5459 = vmatprep.subr.mxu0 0.0
        %5460 = vmatpush1.msra.mxu0 0.0
        %5461 = vmatprep.subr.mxu0 0.0
        %5462 = vmatpush1.msra.mxu0 0.0
        %5463 = vmatprep.subr.mxu0 0.0
        %5464 = vmatpush1.msra.mxu0 0.0
        %5465 = vmatprep.subr.mxu0 0.0
        %5466 = vmatpush1.msra.mxu0 0.0
        %5467 = vmatprep.subr.mxu0 0.0
        %5468 = vmatpush1.msra.mxu0 0.0
        %5469 = vmatprep.subr.mxu0 0.0
        %5470 = vmatpush1.msra.mxu0 0.0
        %5471 = vmatprep.subr.mxu0 0.0
        %5472 = vmatpush1.msra.mxu0 0.0
        %5473 = vmatprep.subr.mxu0 0.0
        %5474 = vmatpush1.msra.mxu0 0.0
        %5475 = vmatprep.subr.mxu0 0.0
        %5476 = vmatpush1.msra.mxu0 0.0
        %5477 = vmatprep.subr.mxu0 0.0
        %5478 = vmatpush1.msra.mxu0 0.0
        %5479 = vmatprep.subr.mxu0 0.0
        %5480 = vmatpush1.msra.mxu0 0.0
        %5481 = vmatprep.subr.mxu0 0.0
        %5482 = vmatpush1.msra.mxu0 0.0
        %5483 = vmatprep.subr.mxu0 0.0
        %5484 = vmatpush1.msra.mxu0 0.0
        %5485 = vmatprep.subr.mxu0 0.0
        %5486 = vmatpush1.msra.mxu0 0.0
        %5487 = vmatprep.subr.mxu0 0.0
        %5488 = vmatpush1.msra.mxu0 0.0
        %5489 = vmatprep.subr.mxu0 0.0
        %5490 = vmatpush1.msra.mxu0 0.0
        %5491 = vmatprep.subr.mxu0 0.0
        %5492 = vmatpush1.msra.mxu0 0.0
        %5493 = vmatprep.subr.mxu0 0.0
        %5494 = vmatpush1.msra.mxu0 0.0
        %5495 = vmatprep.subr.mxu0 0.0
        %5496 = vmatpush1.msra.mxu0 0.0
        %5497 = vmatprep.subr.mxu0 0.0
        %5498 = vmatpush1.msra.mxu0 0.0
        %5499 = vmatprep.subr.mxu0 0.0
        %5500 = vmatpush1.msra.mxu0 0.0
        %5501 = vmatprep.subr.mxu0 0.0
        %5502 = vmatpush1.msra.mxu0 0.0
        %5503 = vmatprep.subr.mxu0 0.0
        %5504 = vmatpush1.msra.mxu0 0.0
        %5505 = vmatprep.subr.mxu0 0.0
        %5506 = vmatpush1.msra.mxu0 0.0
        %5507 = vmatprep.mubr.f32.mxu0 0.0
        %5508 = vmatmul.mubr.f32.gmra.mrb[0].mxu0 %v5435
        %v5509 = vpop.f32.mrb[0].mxu0
        %v5510 = vadd.f32 0.0, %v5509
        %v5511 = vpop.f32.mrb[0].mxu0
        %v5512 = vadd.f32 0.0, %v5511
        %5513 = vdwg.mxu0
        %v5514 = vadd.f32 %v5200, %v5510
        %v5515 = vadd.f32 %v5201, %v5512
        %v5516 = vrot.slane %v3633, 2
        %v5517 = vrot.slane %v3634, 2
        %v5518 = vsel %vm2304, %v5516, %v5517
        %v5519 = vrot.slane %v3635, 2
        %v5520 = vsel %vm2304, %v5517, %v5519
        %v5521 = vrot.slane %v3636, 2
        %v5522 = vrot.slane %v3637, 2
        %v5523 = vsel %vm2304, %v5521, %v5522
        %v5524 = vrot.slane %v3638, 2
        %v5525 = vsel %vm2304, %v5522, %v5524
        %v5526 = vrot.slane %v3639, 2
        %v5527 = vrot.slane %v3640, 2
        %v5528 = vsel %vm2304, %v5526, %v5527
        %v5529 = vrot.slane %v3641, 2
        %v5530 = vsel %vm2304, %v5527, %v5529
        %v5531 = vrot.slane %v3642, 2
        %v5532 = vrot.slane %v3643, 2
        %v5533 = vsel %vm2304, %v5531, %v5532
        %v5534 = vrot.slane %v3644, 2
        %v5535 = vsel %vm2304, %v5532, %v5534
        %v5544 = vcombine.low %v5518, %v5528
        %v5545 = vcombine.high %v5518, %v5528
        %v5547 = vunpack.c.l.s4 1983009808
        %v5548 = vunpack.c.0.s8 %v5547
        %v5549 = vlaneseq
        %v5550 = vshrl.u32 %v5549, 7
        %v5551 = vsub.s32 %v5548, %v5550
        %v5552 = vrot.slane %v5544, %v5551
        %v5554 = vunpack.c.l.s4 1983009808
        %v5555 = vunpack.c.0.s8 %v5554
        %v5556 = vlaneseq
        %v5557 = vshrl.u32 %v5556, 7
        %v5558 = vsub.s32 %v5555, %v5557
        %v5559 = vrot.slane %v5545, %v5558
        %v5560 = vcombine.low %v5523, %v5533
        %v5561 = vcombine.high %v5523, %v5533
        %v5563 = vunpack.c.l.s4 1983009808
        %v5564 = vunpack.c.0.s8 %v5563
        %v5565 = vlaneseq
        %v5566 = vshrl.u32 %v5565, 7
        %v5567 = vsub.s32 %v5564, %v5566
        %v5568 = vrot.slane %v5560, %v5567
        %v5570 = vunpack.c.l.s4 1983009808
        %v5571 = vunpack.c.0.s8 %v5570
        %v5572 = vlaneseq
        %v5573 = vshrl.u32 %v5572, 7
        %v5574 = vsub.s32 %v5571, %v5573
        %v5575 = vrot.slane %v5561, %v5574
        %v5576 = vcombine.low %v5552, %v5568
        %v5577 = vcombine.high %v5552, %v5568
        %v5579 = vunpack.c.l.s4 1934713408
        %v5580 = vunpack.c.0.s8 %v5579
        %v5581 = vlaneseq
        %v5582 = vshrl.u32 %v5581, 7
        %v5583 = vsub.s32 %v5580, %v5582
        %v5584 = vrot.slane %v5576, %v5583
        %v5586 = vunpack.c.l.s4 1934713408
        %v5587 = vunpack.c.0.s8 %v5586
        %v5588 = vlaneseq
        %v5589 = vshrl.u32 %v5588, 7
        %v5590 = vsub.s32 %v5587, %v5589
        %v5591 = vrot.slane %v5577, %v5590
        %v5592 = vcombine.low %v5559, %v5575
        %v5593 = vcombine.high %v5559, %v5575
        %v5595 = vunpack.c.l.s4 1934713408
        %v5596 = vunpack.c.0.s8 %v5595
        %v5597 = vlaneseq
        %v5598 = vshrl.u32 %v5597, 7
        %v5599 = vsub.s32 %v5596, %v5598
        %v5600 = vrot.slane %v5592, %v5599
        %v5602 = vunpack.c.l.s4 1934713408
        %v5603 = vunpack.c.0.s8 %v5602
        %v5604 = vlaneseq
        %v5605 = vshrl.u32 %v5604, 7
        %v5606 = vsub.s32 %v5603, %v5605
        %v5607 = vrot.slane %v5593, %v5606
        %v5608 = vcombine.high %v5584, 0.0
        %v5609 = vcombine.high %v5591, 0.0
        %v5610 = vcombine.high %v5600, 0.0
        %v5611 = vcombine.high %v5607, 0.0
        %v5612 = vcombine.low %v5520, %v5530
        %v5613 = vcombine.high %v5520, %v5530
        %v5615 = vunpack.c.l.s4 1983009808
        %v5616 = vunpack.c.0.s8 %v5615
        %v5617 = vlaneseq
        %v5618 = vshrl.u32 %v5617, 7
        %v5619 = vsub.s32 %v5616, %v5618
        %v5620 = vrot.slane %v5612, %v5619
        %v5622 = vunpack.c.l.s4 1983009808
        %v5623 = vunpack.c.0.s8 %v5622
        %v5624 = vlaneseq
        %v5625 = vshrl.u32 %v5624, 7
        %v5626 = vsub.s32 %v5623, %v5625
        %v5627 = vrot.slane %v5613, %v5626
        %v5628 = vcombine.low %v5525, %v5535
        %v5629 = vcombine.high %v5525, %v5535
        %v5631 = vunpack.c.l.s4 1983009808
        %v5632 = vunpack.c.0.s8 %v5631
        %v5633 = vlaneseq
        %v5634 = vshrl.u32 %v5633, 7
        %v5635 = vsub.s32 %v5632, %v5634
        %v5636 = vrot.slane %v5628, %v5635
        %v5638 = vunpack.c.l.s4 1983009808
        %v5639 = vunpack.c.0.s8 %v5638
        %v5640 = vlaneseq
        %v5641 = vshrl.u32 %v5640, 7
        %v5642 = vsub.s32 %v5639, %v5641
        %v5643 = vrot.slane %v5629, %v5642
        %v5644 = vcombine.low %v5620, %v5636
        %v5645 = vcombine.high %v5620, %v5636
        %v5647 = vunpack.c.l.s4 1934713408
        %v5648 = vunpack.c.0.s8 %v5647
        %v5649 = vlaneseq
        %v5650 = vshrl.u32 %v5649, 7
        %v5651 = vsub.s32 %v5648, %v5650
        %v5652 = vrot.slane %v5644, %v5651
        %v5654 = vunpack.c.l.s4 1934713408
        %v5655 = vunpack.c.0.s8 %v5654
        %v5656 = vlaneseq
        %v5657 = vshrl.u32 %v5656, 7
        %v5658 = vsub.s32 %v5655, %v5657
        %v5659 = vrot.slane %v5645, %v5658
        %v5660 = vcombine.low %v5627, %v5643
        %v5661 = vcombine.high %v5627, %v5643
        %v5663 = vunpack.c.l.s4 1934713408
        %v5664 = vunpack.c.0.s8 %v5663
        %v5665 = vlaneseq
        %v5666 = vshrl.u32 %v5665, 7
        %v5667 = vsub.s32 %v5664, %v5666
        %v5668 = vrot.slane %v5660, %v5667
        %v5670 = vunpack.c.l.s4 1934713408
        %v5671 = vunpack.c.0.s8 %v5670
        %v5672 = vlaneseq
        %v5673 = vshrl.u32 %v5672, 7
        %v5674 = vsub.s32 %v5671, %v5673
        %v5675 = vrot.slane %v5661, %v5674
        %v5676 = vcombine.high %v5652, 0.0
        %v5677 = vcombine.high %v5659, 0.0
        %v5678 = vcombine.high %v5668, 0.0
        %v5679 = vcombine.high %v5675, 0.0
        %5681 = vrot.lane.b32.xlu0 %v5608, 16
        %v5682 = vpop.permute.xlu0 %5681
        %5685 = vrot.lane.b32.xlu0 %v5591, 32
        %v5686 = vpop.permute.xlu0 %5685
        %5689 = vrot.lane.b32.xlu0 %v5609, 48
        %v5690 = vpop.permute.xlu0 %5689
        %5693 = vrot.lane.b32.xlu0 %v5600, 64
        %v5694 = vpop.permute.xlu0 %5693
        %5697 = vrot.lane.b32.xlu0 %v5610, 80
        %v5698 = vpop.permute.xlu0 %5697
        %5701 = vrot.lane.b32.xlu0 %v5607, 96
        %v5702 = vpop.permute.xlu0 %5701
        %5705 = vrot.lane.b32.xlu0 %v5611, 112
        %v5706 = vpop.permute.xlu0 %5705
        %5709 = vrot.lane.b32.xlu0 %v5676, 16
        %v5710 = vpop.permute.xlu0 %5709
        %5713 = vrot.lane.b32.xlu0 %v5659, 32
        %v5714 = vpop.permute.xlu0 %5713
        %5717 = vrot.lane.b32.xlu0 %v5677, 48
        %v5718 = vpop.permute.xlu0 %5717
        %5721 = vrot.lane.b32.xlu0 %v5668, 64
        %v5722 = vpop.permute.xlu0 %5721
        %5725 = vrot.lane.b32.xlu0 %v5678, 80
        %v5726 = vpop.permute.xlu0 %5725
        %5729 = vrot.lane.b32.xlu0 %v5675, 96
        %v5730 = vpop.permute.xlu0 %5729
        %5733 = vrot.lane.b32.xlu0 %v5679, 112
        %v5734 = vpop.permute.xlu0 %5733
        %v5736 = vsel %vm615, %v5584, %v5682
        %v5737 = vsel %vm617, %v5736, %v5686
        %v5738 = vsel %vm619, %v5737, %v5690
        %v5739 = vsel %vm621, %v5738, %v5694
        %v5740 = vsel %vm623, %v5739, %v5698
        %v5741 = vsel %vm625, %v5740, %v5702
        %v5742 = vsel %vm627, %v5741, %v5706
        %v5743 = vsel %vm615, %v5652, %v5710
        %v5744 = vsel %vm617, %v5743, %v5714
        %v5745 = vsel %vm619, %v5744, %v5718
        %v5746 = vsel %vm621, %v5745, %v5722
        %v5747 = vsel %vm623, %v5746, %v5726
        %v5748 = vsel %vm625, %v5747, %v5730
        %v5749 = vsel %vm627, %v5748, %v5734
        %s5750 = scalar_lea.vmem [#allocation6], 24
        %v5751 = vld [vmem:[%s5750] sm:$0xf]
        %v5753 = vsel %vm877, %v5751, 0
        %v5756 = vsel %vm881, %v5742, 0
        %v5759 = vsel %vm881, %v5749, 0
        %5761 = vmatprep.subr.mxu0 %v5759
        %5762 = vmatpush1.msra.mxu0 %v5756
        %5763 = vmatprep.subr.mxu0 0.0
        %5764 = vmatpush1.msra.mxu0 0.0
        %5765 = vmatprep.subr.mxu0 0.0
        %5766 = vmatpush1.msra.mxu0 0.0
        %5767 = vmatprep.subr.mxu0 0.0
        %5768 = vmatpush1.msra.mxu0 0.0
        %5769 = vmatprep.subr.mxu0 0.0
        %5770 = vmatpush1.msra.mxu0 0.0
        %5771 = vmatprep.subr.mxu0 0.0
        %5772 = vmatpush1.msra.mxu0 0.0
        %5773 = vmatprep.subr.mxu0 0.0
        %5774 = vmatpush1.msra.mxu0 0.0
        %5775 = vmatprep.subr.mxu0 0.0
        %5776 = vmatpush1.msra.mxu0 0.0
        %5777 = vmatprep.subr.mxu0 0.0
        %5778 = vmatpush1.msra.mxu0 0.0
        %5779 = vmatprep.subr.mxu0 0.0
        %5780 = vmatpush1.msra.mxu0 0.0
        %5781 = vmatprep.subr.mxu0 0.0
        %5782 = vmatpush1.msra.mxu0 0.0
        %5783 = vmatprep.subr.mxu0 0.0
        %5784 = vmatpush1.msra.mxu0 0.0
        %5785 = vmatprep.subr.mxu0 0.0
        %5786 = vmatpush1.msra.mxu0 0.0
        %5787 = vmatprep.subr.mxu0 0.0
        %5788 = vmatpush1.msra.mxu0 0.0
        %5789 = vmatprep.subr.mxu0 0.0
        %5790 = vmatpush1.msra.mxu0 0.0
        %5791 = vmatprep.subr.mxu0 0.0
        %5792 = vmatpush1.msra.mxu0 0.0
        %5793 = vmatprep.subr.mxu0 0.0
        %5794 = vmatpush1.msra.mxu0 0.0
        %5795 = vmatprep.subr.mxu0 0.0
        %5796 = vmatpush1.msra.mxu0 0.0
        %5797 = vmatprep.subr.mxu0 0.0
        %5798 = vmatpush1.msra.mxu0 0.0
        %5799 = vmatprep.subr.mxu0 0.0
        %5800 = vmatpush1.msra.mxu0 0.0
        %5801 = vmatprep.subr.mxu0 0.0
        %5802 = vmatpush1.msra.mxu0 0.0
        %5803 = vmatprep.subr.mxu0 0.0
        %5804 = vmatpush1.msra.mxu0 0.0
        %5805 = vmatprep.subr.mxu0 0.0
        %5806 = vmatpush1.msra.mxu0 0.0
        %5807 = vmatprep.subr.mxu0 0.0
        %5808 = vmatpush1.msra.mxu0 0.0
        %5809 = vmatprep.subr.mxu0 0.0
        %5810 = vmatpush1.msra.mxu0 0.0
        %5811 = vmatprep.subr.mxu0 0.0
        %5812 = vmatpush1.msra.mxu0 0.0
        %5813 = vmatprep.subr.mxu0 0.0
        %5814 = vmatpush1.msra.mxu0 0.0
        %5815 = vmatprep.subr.mxu0 0.0
        %5816 = vmatpush1.msra.mxu0 0.0
        %5817 = vmatprep.subr.mxu0 0.0
        %5818 = vmatpush1.msra.mxu0 0.0
        %5819 = vmatprep.subr.mxu0 0.0
        %5820 = vmatpush1.msra.mxu0 0.0
        %5821 = vmatprep.subr.mxu0 0.0
        %5822 = vmatpush1.msra.mxu0 0.0
        %5823 = vmatprep.subr.mxu0 0.0
        %5824 = vmatpush1.msra.mxu0 0.0
        %5825 = vmatprep.mubr.f32.mxu0 0.0
        %5826 = vmatmul.mubr.f32.gmra.mrb[0].mxu0 %v5753
        %v5827 = vpop.f32.mrb[0].mxu0
        %v5828 = vadd.f32 0.0, %v5827
        %v5829 = vpop.f32.mrb[0].mxu0
        %v5830 = vadd.f32 0.0, %v5829
        %5831 = vdwg.mxu0
        %v5832 = vadd.f32 %v5514, %v5828
        %v5833 = vadd.f32 %v5515, %v5830
        %5834 = vrot.lane.b32.xlu0 %v5518, 127
        %v5835 = vpop.permute.xlu0 %5834
        %5836 = vrot.lane.b32.xlu0 %v5520, 127
        %v5837 = vpop.permute.xlu0 %5836
        %5838 = vrot.lane.b32.xlu0 %v5523, 127
        %v5839 = vpop.permute.xlu0 %5838
        %5840 = vrot.lane.b32.xlu0 %v5525, 127
        %v5841 = vpop.permute.xlu0 %5840
        %5842 = vrot.lane.b32.xlu0 %v5528, 127
        %v5843 = vpop.permute.xlu0 %5842
        %5844 = vrot.lane.b32.xlu0 %v5530, 127
        %v5845 = vpop.permute.xlu0 %5844
        %5846 = vrot.lane.b32.xlu0 %v5533, 127
        %v5847 = vpop.permute.xlu0 %5846
        %5848 = vrot.lane.b32.xlu0 %v5535, 127
        %v5849 = vpop.permute.xlu0 %5848
        %v5858 = vcombine.low %v5835, %v5843
        %v5859 = vcombine.high %v5835, %v5843
        %v5861 = vunpack.c.l.s4 1983009808
        %v5862 = vunpack.c.0.s8 %v5861
        %v5863 = vlaneseq
        %v5864 = vshrl.u32 %v5863, 7
        %v5865 = vsub.s32 %v5862, %v5864
        %v5866 = vrot.slane %v5858, %v5865
        %v5868 = vunpack.c.l.s4 1983009808
        %v5869 = vunpack.c.0.s8 %v5868
        %v5870 = vlaneseq
        %v5871 = vshrl.u32 %v5870, 7
        %v5872 = vsub.s32 %v5869, %v5871
        %v5873 = vrot.slane %v5859, %v5872
        %v5874 = vcombine.low %v5839, %v5847
        %v5875 = vcombine.high %v5839, %v5847
        %v5877 = vunpack.c.l.s4 1983009808
        %v5878 = vunpack.c.0.s8 %v5877
        %v5879 = vlaneseq
        %v5880 = vshrl.u32 %v5879, 7
        %v5881 = vsub.s32 %v5878, %v5880
        %v5882 = vrot.slane %v5874, %v5881
        %v5884 = vunpack.c.l.s4 1983009808
        %v5885 = vunpack.c.0.s8 %v5884
        %v5886 = vlaneseq
        %v5887 = vshrl.u32 %v5886, 7
        %v5888 = vsub.s32 %v5885, %v5887
        %v5889 = vrot.slane %v5875, %v5888
        %v5890 = vcombine.low %v5866, %v5882
        %v5891 = vcombine.high %v5866, %v5882
        %v5893 = vunpack.c.l.s4 1934713408
        %v5894 = vunpack.c.0.s8 %v5893
        %v5895 = vlaneseq
        %v5896 = vshrl.u32 %v5895, 7
        %v5897 = vsub.s32 %v5894, %v5896
        %v5898 = vrot.slane %v5890, %v5897
        %v5900 = vunpack.c.l.s4 1934713408
        %v5901 = vunpack.c.0.s8 %v5900
        %v5902 = vlaneseq
        %v5903 = vshrl.u32 %v5902, 7
        %v5904 = vsub.s32 %v5901, %v5903
        %v5905 = vrot.slane %v5891, %v5904
        %v5906 = vcombine.low %v5873, %v5889
        %v5907 = vcombine.high %v5873, %v5889
        %v5909 = vunpack.c.l.s4 1934713408
        %v5910 = vunpack.c.0.s8 %v5909
        %v5911 = vlaneseq
        %v5912 = vshrl.u32 %v5911, 7
        %v5913 = vsub.s32 %v5910, %v5912
        %v5914 = vrot.slane %v5906, %v5913
        %v5916 = vunpack.c.l.s4 1934713408
        %v5917 = vunpack.c.0.s8 %v5916
        %v5918 = vlaneseq
        %v5919 = vshrl.u32 %v5918, 7
        %v5920 = vsub.s32 %v5917, %v5919
        %v5921 = vrot.slane %v5907, %v5920
        %v5922 = vcombine.high %v5898, 0.0
        %v5923 = vcombine.high %v5905, 0.0
        %v5924 = vcombine.high %v5914, 0.0
        %v5925 = vcombine.high %v5921, 0.0
        %v5926 = vcombine.low %v5837, %v5845
        %v5927 = vcombine.high %v5837, %v5845
        %v5929 = vunpack.c.l.s4 1983009808
        %v5930 = vunpack.c.0.s8 %v5929
        %v5931 = vlaneseq
        %v5932 = vshrl.u32 %v5931, 7
        %v5933 = vsub.s32 %v5930, %v5932
        %v5934 = vrot.slane %v5926, %v5933
        %v5936 = vunpack.c.l.s4 1983009808
        %v5937 = vunpack.c.0.s8 %v5936
        %v5938 = vlaneseq
        %v5939 = vshrl.u32 %v5938, 7
        %v5940 = vsub.s32 %v5937, %v5939
        %v5941 = vrot.slane %v5927, %v5940
        %v5942 = vcombine.low %v5841, %v5849
        %v5943 = vcombine.high %v5841, %v5849
        %v5945 = vunpack.c.l.s4 1983009808
        %v5946 = vunpack.c.0.s8 %v5945
        %v5947 = vlaneseq
        %v5948 = vshrl.u32 %v5947, 7
        %v5949 = vsub.s32 %v5946, %v5948
        %v5950 = vrot.slane %v5942, %v5949
        %v5952 = vunpack.c.l.s4 1983009808
        %v5953 = vunpack.c.0.s8 %v5952
        %v5954 = vlaneseq
        %v5955 = vshrl.u32 %v5954, 7
        %v5956 = vsub.s32 %v5953, %v5955
        %v5957 = vrot.slane %v5943, %v5956
        %v5958 = vcombine.low %v5934, %v5950
        %v5959 = vcombine.high %v5934, %v5950
        %v5961 = vunpack.c.l.s4 1934713408
        %v5962 = vunpack.c.0.s8 %v5961
        %v5963 = vlaneseq
        %v5964 = vshrl.u32 %v5963, 7
        %v5965 = vsub.s32 %v5962, %v5964
        %v5966 = vrot.slane %v5958, %v5965
        %v5968 = vunpack.c.l.s4 1934713408
        %v5969 = vunpack.c.0.s8 %v5968
        %v5970 = vlaneseq
        %v5971 = vshrl.u32 %v5970, 7
        %v5972 = vsub.s32 %v5969, %v5971
        %v5973 = vrot.slane %v5959, %v5972
        %v5974 = vcombine.low %v5941, %v5957
        %v5975 = vcombine.high %v5941, %v5957
        %v5977 = vunpack.c.l.s4 1934713408
        %v5978 = vunpack.c.0.s8 %v5977
        %v5979 = vlaneseq
        %v5980 = vshrl.u32 %v5979, 7
        %v5981 = vsub.s32 %v5978, %v5980
        %v5982 = vrot.slane %v5974, %v5981
        %v5984 = vunpack.c.l.s4 1934713408
        %v5985 = vunpack.c.0.s8 %v5984
        %v5986 = vlaneseq
        %v5987 = vshrl.u32 %v5986, 7
        %v5988 = vsub.s32 %v5985, %v5987
        %v5989 = vrot.slane %v5975, %v5988
        %v5990 = vcombine.high %v5966, 0.0
        %v5991 = vcombine.high %v5973, 0.0
        %v5992 = vcombine.high %v5982, 0.0
        %v5993 = vcombine.high %v5989, 0.0
        %5995 = vrot.lane.b32.xlu0 %v5922, 16
        %v5996 = vpop.permute.xlu0 %5995
        %5999 = vrot.lane.b32.xlu0 %v5905, 32
        %v6000 = vpop.permute.xlu0 %5999
        %6003 = vrot.lane.b32.xlu0 %v5923, 48
        %v6004 = vpop.permute.xlu0 %6003
        %6007 = vrot.lane.b32.xlu0 %v5914, 64
        %v6008 = vpop.permute.xlu0 %6007
        %6011 = vrot.lane.b32.xlu0 %v5924, 80
        %v6012 = vpop.permute.xlu0 %6011
        %6015 = vrot.lane.b32.xlu0 %v5921, 96
        %v6016 = vpop.permute.xlu0 %6015
        %6019 = vrot.lane.b32.xlu0 %v5925, 112
        %v6020 = vpop.permute.xlu0 %6019
        %6023 = vrot.lane.b32.xlu0 %v5990, 16
        %v6024 = vpop.permute.xlu0 %6023
        %6027 = vrot.lane.b32.xlu0 %v5973, 32
        %v6028 = vpop.permute.xlu0 %6027
        %6031 = vrot.lane.b32.xlu0 %v5991, 48
        %v6032 = vpop.permute.xlu0 %6031
        %6035 = vrot.lane.b32.xlu0 %v5982, 64
        %v6036 = vpop.permute.xlu0 %6035
        %6039 = vrot.lane.b32.xlu0 %v5992, 80
        %v6040 = vpop.permute.xlu0 %6039
        %6043 = vrot.lane.b32.xlu0 %v5989, 96
        %v6044 = vpop.permute.xlu0 %6043
        %6047 = vrot.lane.b32.xlu0 %v5993, 112
        %v6048 = vpop.permute.xlu0 %6047
        %v6050 = vsel %vm615, %v5898, %v5996
        %v6051 = vsel %vm617, %v6050, %v6000
        %v6052 = vsel %vm619, %v6051, %v6004
        %v6053 = vsel %vm621, %v6052, %v6008
        %v6054 = vsel %vm623, %v6053, %v6012
        %v6055 = vsel %vm625, %v6054, %v6016
        %v6056 = vsel %vm627, %v6055, %v6020
        %v6057 = vsel %vm615, %v5966, %v6024
        %v6058 = vsel %vm617, %v6057, %v6028
        %v6059 = vsel %vm619, %v6058, %v6032
        %v6060 = vsel %vm621, %v6059, %v6036
        %v6061 = vsel %vm623, %v6060, %v6040
        %v6062 = vsel %vm625, %v6061, %v6044
        %v6063 = vsel %vm627, %v6062, %v6048
        %s6064 = scalar_lea.vmem [#allocation6], 28
        %v6065 = vld [vmem:[%s6064] sm:$0xf]
        %v6067 = vsel %vm877, %v6065, 0
        %v6070 = vsel %vm881, %v6056, 0
        %v6073 = vsel %vm881, %v6063, 0
        %6075 = vmatprep.subr.mxu0 %v6073
        %6076 = vmatpush1.msra.mxu0 %v6070
        %6077 = vmatprep.subr.mxu0 0.0
        %6078 = vmatpush1.msra.mxu0 0.0
        %6079 = vmatprep.subr.mxu0 0.0
        %6080 = vmatpush1.msra.mxu0 0.0
        %6081 = vmatprep.subr.mxu0 0.0
        %6082 = vmatpush1.msra.mxu0 0.0
        %6083 = vmatprep.subr.mxu0 0.0
        %6084 = vmatpush1.msra.mxu0 0.0
        %6085 = vmatprep.subr.mxu0 0.0
        %6086 = vmatpush1.msra.mxu0 0.0
        %6087 = vmatprep.subr.mxu0 0.0
        %6088 = vmatpush1.msra.mxu0 0.0
        %6089 = vmatprep.subr.mxu0 0.0
        %6090 = vmatpush1.msra.mxu0 0.0
        %6091 = vmatprep.subr.mxu0 0.0
        %6092 = vmatpush1.msra.mxu0 0.0
        %6093 = vmatprep.subr.mxu0 0.0
        %6094 = vmatpush1.msra.mxu0 0.0
        %6095 = vmatprep.subr.mxu0 0.0
        %6096 = vmatpush1.msra.mxu0 0.0
        %6097 = vmatprep.subr.mxu0 0.0
        %6098 = vmatpush1.msra.mxu0 0.0
        %6099 = vmatprep.subr.mxu0 0.0
        %6100 = vmatpush1.msra.mxu0 0.0
        %6101 = vmatprep.subr.mxu0 0.0
        %6102 = vmatpush1.msra.mxu0 0.0
        %6103 = vmatprep.subr.mxu0 0.0
        %6104 = vmatpush1.msra.mxu0 0.0
        %6105 = vmatprep.subr.mxu0 0.0
        %6106 = vmatpush1.msra.mxu0 0.0
        %6107 = vmatprep.subr.mxu0 0.0
        %6108 = vmatpush1.msra.mxu0 0.0
        %6109 = vmatprep.subr.mxu0 0.0
        %6110 = vmatpush1.msra.mxu0 0.0
        %6111 = vmatprep.subr.mxu0 0.0
        %6112 = vmatpush1.msra.mxu0 0.0
        %6113 = vmatprep.subr.mxu0 0.0
        %6114 = vmatpush1.msra.mxu0 0.0
        %6115 = vmatprep.subr.mxu0 0.0
        %6116 = vmatpush1.msra.mxu0 0.0
        %6117 = vmatprep.subr.mxu0 0.0
        %6118 = vmatpush1.msra.mxu0 0.0
        %6119 = vmatprep.subr.mxu0 0.0
        %6120 = vmatpush1.msra.mxu0 0.0
        %6121 = vmatprep.subr.mxu0 0.0
        %6122 = vmatpush1.msra.mxu0 0.0
        %6123 = vmatprep.subr.mxu0 0.0
        %6124 = vmatpush1.msra.mxu0 0.0
        %6125 = vmatprep.subr.mxu0 0.0
        %6126 = vmatpush1.msra.mxu0 0.0
        %6127 = vmatprep.subr.mxu0 0.0
        %6128 = vmatpush1.msra.mxu0 0.0
        %6129 = vmatprep.subr.mxu0 0.0
        %6130 = vmatpush1.msra.mxu0 0.0
        %6131 = vmatprep.subr.mxu0 0.0
        %6132 = vmatpush1.msra.mxu0 0.0
        %6133 = vmatprep.subr.mxu0 0.0
        %6134 = vmatpush1.msra.mxu0 0.0
        %6135 = vmatprep.subr.mxu0 0.0
        %6136 = vmatpush1.msra.mxu0 0.0
        %6137 = vmatprep.subr.mxu0 0.0
        %6138 = vmatpush1.msra.mxu0 0.0
        %6139 = vmatprep.mubr.f32.mxu0 0.0
        %6140 = vmatmul.mubr.f32.gmra.mrb[0].mxu0 %v6067
        %v6141 = vpop.f32.mrb[0].mxu0
        %v6142 = vadd.f32 0.0, %v6141
        %v6143 = vpop.f32.mrb[0].mxu0
        %v6144 = vadd.f32 0.0, %v6143
        %6145 = vdwg.mxu0
        %v6146 = vadd.f32 %v5832, %v6142
        %v6147 = vadd.f32 %v5833, %v6144
        %6148 = vrot.lane.b32.xlu0 %v5518, 126
        %v6149 = vpop.permute.xlu0 %6148
        %6150 = vrot.lane.b32.xlu0 %v5520, 126
        %v6151 = vpop.permute.xlu0 %6150
        %6152 = vrot.lane.b32.xlu0 %v5523, 126
        %v6153 = vpop.permute.xlu0 %6152
        %6154 = vrot.lane.b32.xlu0 %v5525, 126
        %v6155 = vpop.permute.xlu0 %6154
        %6156 = vrot.lane.b32.xlu0 %v5528, 126
        %v6157 = vpop.permute.xlu0 %6156
        %6158 = vrot.lane.b32.xlu0 %v5530, 126
        %v6159 = vpop.permute.xlu0 %6158
        %6160 = vrot.lane.b32.xlu0 %v5533, 126
        %v6161 = vpop.permute.xlu0 %6160
        %6162 = vrot.lane.b32.xlu0 %v5535, 126
        %v6163 = vpop.permute.xlu0 %6162
        %v6172 = vcombine.low %v6149, %v6157
        %v6173 = vcombine.high %v6149, %v6157
        %v6175 = vunpack.c.l.s4 1983009808
        %v6176 = vunpack.c.0.s8 %v6175
        %v6177 = vlaneseq
        %v6178 = vshrl.u32 %v6177, 7
        %v6179 = vsub.s32 %v6176, %v6178
        %v6180 = vrot.slane %v6172, %v6179
        %v6182 = vunpack.c.l.s4 1983009808
        %v6183 = vunpack.c.0.s8 %v6182
        %v6184 = vlaneseq
        %v6185 = vshrl.u32 %v6184, 7
        %v6186 = vsub.s32 %v6183, %v6185
        %v6187 = vrot.slane %v6173, %v6186
        %v6188 = vcombine.low %v6153, %v6161
        %v6189 = vcombine.high %v6153, %v6161
        %v6191 = vunpack.c.l.s4 1983009808
        %v6192 = vunpack.c.0.s8 %v6191
        %v6193 = vlaneseq
        %v6194 = vshrl.u32 %v6193, 7
        %v6195 = vsub.s32 %v6192, %v6194
        %v6196 = vrot.slane %v6188, %v6195
        %v6198 = vunpack.c.l.s4 1983009808
        %v6199 = vunpack.c.0.s8 %v6198
        %v6200 = vlaneseq
        %v6201 = vshrl.u32 %v6200, 7
        %v6202 = vsub.s32 %v6199, %v6201
        %v6203 = vrot.slane %v6189, %v6202
        %v6204 = vcombine.low %v6180, %v6196
        %v6205 = vcombine.high %v6180, %v6196
        %v6207 = vunpack.c.l.s4 1934713408
        %v6208 = vunpack.c.0.s8 %v6207
        %v6209 = vlaneseq
        %v6210 = vshrl.u32 %v6209, 7
        %v6211 = vsub.s32 %v6208, %v6210
        %v6212 = vrot.slane %v6204, %v6211
        %v6214 = vunpack.c.l.s4 1934713408
        %v6215 = vunpack.c.0.s8 %v6214
        %v6216 = vlaneseq
        %v6217 = vshrl.u32 %v6216, 7
        %v6218 = vsub.s32 %v6215, %v6217
        %v6219 = vrot.slane %v6205, %v6218
        %v6220 = vcombine.low %v6187, %v6203
        %v6221 = vcombine.high %v6187, %v6203
        %v6223 = vunpack.c.l.s4 1934713408
        %v6224 = vunpack.c.0.s8 %v6223
        %v6225 = vlaneseq
        %v6226 = vshrl.u32 %v6225, 7
        %v6227 = vsub.s32 %v6224, %v6226
        %v6228 = vrot.slane %v6220, %v6227
        %v6230 = vunpack.c.l.s4 1934713408
        %v6231 = vunpack.c.0.s8 %v6230
        %v6232 = vlaneseq
        %v6233 = vshrl.u32 %v6232, 7
        %v6234 = vsub.s32 %v6231, %v6233
        %v6235 = vrot.slane %v6221, %v6234
        %v6236 = vcombine.high %v6212, 0.0
        %v6237 = vcombine.high %v6219, 0.0
        %v6238 = vcombine.high %v6228, 0.0
        %v6239 = vcombine.high %v6235, 0.0
        %v6240 = vcombine.low %v6151, %v6159
        %v6241 = vcombine.high %v6151, %v6159
        %v6243 = vunpack.c.l.s4 1983009808
        %v6244 = vunpack.c.0.s8 %v6243
        %v6245 = vlaneseq
        %v6246 = vshrl.u32 %v6245, 7
        %v6247 = vsub.s32 %v6244, %v6246
        %v6248 = vrot.slane %v6240, %v6247
        %v6250 = vunpack.c.l.s4 1983009808
        %v6251 = vunpack.c.0.s8 %v6250
        %v6252 = vlaneseq
        %v6253 = vshrl.u32 %v6252, 7
        %v6254 = vsub.s32 %v6251, %v6253
        %v6255 = vrot.slane %v6241, %v6254
        %v6256 = vcombine.low %v6155, %v6163
        %v6257 = vcombine.high %v6155, %v6163
        %v6259 = vunpack.c.l.s4 1983009808
        %v6260 = vunpack.c.0.s8 %v6259
        %v6261 = vlaneseq
        %v6262 = vshrl.u32 %v6261, 7
        %v6263 = vsub.s32 %v6260, %v6262
        %v6264 = vrot.slane %v6256, %v6263
        %v6266 = vunpack.c.l.s4 1983009808
        %v6267 = vunpack.c.0.s8 %v6266
        %v6268 = vlaneseq
        %v6269 = vshrl.u32 %v6268, 7
        %v6270 = vsub.s32 %v6267, %v6269
        %v6271 = vrot.slane %v6257, %v6270
        %v6272 = vcombine.low %v6248, %v6264
        %v6273 = vcombine.high %v6248, %v6264
        %v6275 = vunpack.c.l.s4 1934713408
        %v6276 = vunpack.c.0.s8 %v6275
        %v6277 = vlaneseq
        %v6278 = vshrl.u32 %v6277, 7
        %v6279 = vsub.s32 %v6276, %v6278
        %v6280 = vrot.slane %v6272, %v6279
        %v6282 = vunpack.c.l.s4 1934713408
        %v6283 = vunpack.c.0.s8 %v6282
        %v6284 = vlaneseq
        %v6285 = vshrl.u32 %v6284, 7
        %v6286 = vsub.s32 %v6283, %v6285
        %v6287 = vrot.slane %v6273, %v6286
        %v6288 = vcombine.low %v6255, %v6271
        %v6289 = vcombine.high %v6255, %v6271
        %v6291 = vunpack.c.l.s4 1934713408
        %v6292 = vunpack.c.0.s8 %v6291
        %v6293 = vlaneseq
        %v6294 = vshrl.u32 %v6293, 7
        %v6295 = vsub.s32 %v6292, %v6294
        %v6296 = vrot.slane %v6288, %v6295
        %v6298 = vunpack.c.l.s4 1934713408
        %v6299 = vunpack.c.0.s8 %v6298
        %v6300 = vlaneseq
        %v6301 = vshrl.u32 %v6300, 7
        %v6302 = vsub.s32 %v6299, %v6301
        %v6303 = vrot.slane %v6289, %v6302
        %v6304 = vcombine.high %v6280, 0.0
        %v6305 = vcombine.high %v6287, 0.0
        %v6306 = vcombine.high %v6296, 0.0
        %v6307 = vcombine.high %v6303, 0.0
        %6309 = vrot.lane.b32.xlu0 %v6236, 16
        %v6310 = vpop.permute.xlu0 %6309
        %6313 = vrot.lane.b32.xlu0 %v6219, 32
        %v6314 = vpop.permute.xlu0 %6313
        %6317 = vrot.lane.b32.xlu0 %v6237, 48
        %v6318 = vpop.permute.xlu0 %6317
        %6321 = vrot.lane.b32.xlu0 %v6228, 64
        %v6322 = vpop.permute.xlu0 %6321
        %6325 = vrot.lane.b32.xlu0 %v6238, 80
        %v6326 = vpop.permute.xlu0 %6325
        %6329 = vrot.lane.b32.xlu0 %v6235, 96
        %v6330 = vpop.permute.xlu0 %6329
        %6333 = vrot.lane.b32.xlu0 %v6239, 112
        %v6334 = vpop.permute.xlu0 %6333
        %6337 = vrot.lane.b32.xlu0 %v6304, 16
        %v6338 = vpop.permute.xlu0 %6337
        %6341 = vrot.lane.b32.xlu0 %v6287, 32
        %v6342 = vpop.permute.xlu0 %6341
        %6345 = vrot.lane.b32.xlu0 %v6305, 48
        %v6346 = vpop.permute.xlu0 %6345
        %6349 = vrot.lane.b32.xlu0 %v6296, 64
        %v6350 = vpop.permute.xlu0 %6349
        %6353 = vrot.lane.b32.xlu0 %v6306, 80
        %v6354 = vpop.permute.xlu0 %6353
        %6357 = vrot.lane.b32.xlu0 %v6303, 96
        %v6358 = vpop.permute.xlu0 %6357
        %6361 = vrot.lane.b32.xlu0 %v6307, 112
        %v6362 = vpop.permute.xlu0 %6361
        %v6364 = vsel %vm615, %v6212, %v6310
        %v6365 = vsel %vm617, %v6364, %v6314
        %v6366 = vsel %vm619, %v6365, %v6318
        %v6367 = vsel %vm621, %v6366, %v6322
        %v6368 = vsel %vm623, %v6367, %v6326
        %v6369 = vsel %vm625, %v6368, %v6330
        %v6370 = vsel %vm627, %v6369, %v6334
        %v6371 = vsel %vm615, %v6280, %v6338
        %v6372 = vsel %vm617, %v6371, %v6342
        %v6373 = vsel %vm619, %v6372, %v6346
        %v6374 = vsel %vm621, %v6373, %v6350
        %v6375 = vsel %vm623, %v6374, %v6354
        %v6376 = vsel %vm625, %v6375, %v6358
        %v6377 = vsel %vm627, %v6376, %v6362
        %s6378 = scalar_lea.vmem [#allocation6], 32
        %v6379 = vld [vmem:[%s6378] sm:$0xf]
        %v6381 = vsel %vm877, %v6379, 0
        %v6384 = vsel %vm881, %v6370, 0
        %v6387 = vsel %vm881, %v6377, 0
        %6389 = vmatprep.subr.mxu0 %v6387
        %6390 = vmatpush1.msra.mxu0 %v6384
        %6391 = vmatprep.subr.mxu0 0.0
        %6392 = vmatpush1.msra.mxu0 0.0
        %6393 = vmatprep.subr.mxu0 0.0
        %6394 = vmatpush1.msra.mxu0 0.0
        %6395 = vmatprep.subr.mxu0 0.0
        %6396 = vmatpush1.msra.mxu0 0.0
        %6397 = vmatprep.subr.mxu0 0.0
        %6398 = vmatpush1.msra.mxu0 0.0
        %6399 = vmatprep.subr.mxu0 0.0
        %6400 = vmatpush1.msra.mxu0 0.0
        %6401 = vmatprep.subr.mxu0 0.0
        %6402 = vmatpush1.msra.mxu0 0.0
        %6403 = vmatprep.subr.mxu0 0.0
        %6404 = vmatpush1.msra.mxu0 0.0
        %6405 = vmatprep.subr.mxu0 0.0
        %6406 = vmatpush1.msra.mxu0 0.0
        %6407 = vmatprep.subr.mxu0 0.0
        %6408 = vmatpush1.msra.mxu0 0.0
        %6409 = vmatprep.subr.mxu0 0.0
        %6410 = vmatpush1.msra.mxu0 0.0
        %6411 = vmatprep.subr.mxu0 0.0
        %6412 = vmatpush1.msra.mxu0 0.0
        %6413 = vmatprep.subr.mxu0 0.0
        %6414 = vmatpush1.msra.mxu0 0.0
        %6415 = vmatprep.subr.mxu0 0.0
        %6416 = vmatpush1.msra.mxu0 0.0
        %6417 = vmatprep.subr.mxu0 0.0
        %6418 = vmatpush1.msra.mxu0 0.0
        %6419 = vmatprep.subr.mxu0 0.0
        %6420 = vmatpush1.msra.mxu0 0.0
        %6421 = vmatprep.subr.mxu0 0.0
        %6422 = vmatpush1.msra.mxu0 0.0
        %6423 = vmatprep.subr.mxu0 0.0
        %6424 = vmatpush1.msra.mxu0 0.0
        %6425 = vmatprep.subr.mxu0 0.0
        %6426 = vmatpush1.msra.mxu0 0.0
        %6427 = vmatprep.subr.mxu0 0.0
        %6428 = vmatpush1.msra.mxu0 0.0
        %6429 = vmatprep.subr.mxu0 0.0
        %6430 = vmatpush1.msra.mxu0 0.0
        %6431 = vmatprep.subr.mxu0 0.0
        %6432 = vmatpush1.msra.mxu0 0.0
        %6433 = vmatprep.subr.mxu0 0.0
        %6434 = vmatpush1.msra.mxu0 0.0
        %6435 = vmatprep.subr.mxu0 0.0
        %6436 = vmatpush1.msra.mxu0 0.0
        %6437 = vmatprep.subr.mxu0 0.0
        %6438 = vmatpush1.msra.mxu0 0.0
        %6439 = vmatprep.subr.mxu0 0.0
        %6440 = vmatpush1.msra.mxu0 0.0
        %6441 = vmatprep.subr.mxu0 0.0
        %6442 = vmatpush1.msra.mxu0 0.0
        %6443 = vmatprep.subr.mxu0 0.0
        %6444 = vmatpush1.msra.mxu0 0.0
        %6445 = vmatprep.subr.mxu0 0.0
        %6446 = vmatpush1.msra.mxu0 0.0
        %6447 = vmatprep.subr.mxu0 0.0
        %6448 = vmatpush1.msra.mxu0 0.0
        %6449 = vmatprep.subr.mxu0 0.0
        %6450 = vmatpush1.msra.mxu0 0.0
        %6451 = vmatprep.subr.mxu0 0.0
        %6452 = vmatpush1.msra.mxu0 0.0
        %6453 = vmatprep.mubr.f32.mxu0 0.0
        %6454 = vmatmul.mubr.f32.gmra.mrb[0].mxu0 %v6381
        %v6455 = vpop.f32.mrb[0].mxu0
        %v6456 = vadd.f32 0.0, %v6455
        %v6457 = vpop.f32.mrb[0].mxu0
        %v6458 = vadd.f32 0.0, %v6457
        %6459 = vdwg.mxu0
        %v6460 = vadd.f32 %v6146, %v6456
        %v6461 = vadd.f32 %v6147, %v6458
        %v6462 = vsel %vm881, %v6460, 0.0
        %v6463 = vsel %vm881, %v6461, 0.0
        %v6464 = vadd.f32 %v6462, %v6463
        %6465 = vadd.xlane.f32.xlu0 %v6464
        %v6466 = vpop.xlane.xlu0 %6465
        %v6467 = vmul.f32 %v6466, 0.00390625
        %v6468 = vsub.f32 %v6460, %v6467
        %v6469 = vsub.f32 %v6461, %v6467
        %v6470 = vmul.f32 %v6468, %v6468
        %v6471 = vmul.f32 %v6469, %v6469
        %v6472 = vsel %vm881, %v6470, 0.0
        %v6473 = vsel %vm881, %v6471, 0.0
        %v6474 = vadd.f32 %v6472, %v6473
        %6475 = vadd.xlane.f32.xlu0 %v6474
        %v6476 = vpop.xlane.xlu0 %6475
        %v6477 = vmul.f32 %v6476, 0.00390625
        %v6478 = vadd.f32 %v6477, 1e-05
        %v6479 = vrsqrt.pop %v6478
        %v6480 = vmul.f32 %v6468, %v6479
        %v6481 = vmul.f32 %v6469, %v6479
        %v6482 = vcombine.low %v220, %v224
        %v6483 = vcombine.high %v220, %v224
        %v6485 = vunpack.c.l.s4 1983009808
        %v6486 = vunpack.c.0.s8 %v6485
        %v6487 = vlaneseq
        %v6488 = vshrl.u32 %v6487, 7
        %v6489 = vsub.s32 %v6486, %v6488
        %v6490 = vrot.slane %v6482, %v6489
        %v6492 = vunpack.c.l.s4 1983009808
        %v6493 = vunpack.c.0.s8 %v6492
        %v6494 = vlaneseq
        %v6495 = vshrl.u32 %v6494, 7
        %v6496 = vsub.s32 %v6493, %v6495
        %v6497 = vrot.slane %v6483, %v6496
        %v6498 = vcombine.low %v222, %v226
        %v6499 = vcombine.high %v222, %v226
        %v6501 = vunpack.c.l.s4 1983009808
        %v6502 = vunpack.c.0.s8 %v6501
        %v6503 = vlaneseq
        %v6504 = vshrl.u32 %v6503, 7
        %v6505 = vsub.s32 %v6502, %v6504
        %v6506 = vrot.slane %v6498, %v6505
        %v6508 = vunpack.c.l.s4 1983009808
        %v6509 = vunpack.c.0.s8 %v6508
        %v6510 = vlaneseq
        %v6511 = vshrl.u32 %v6510, 7
        %v6512 = vsub.s32 %v6509, %v6511
        %v6513 = vrot.slane %v6499, %v6512
        %v6514 = vcombine.low %v6490, %v6506
        %v6515 = vcombine.high %v6490, %v6506
        %v6517 = vunpack.c.l.s4 1934713408
        %v6518 = vunpack.c.0.s8 %v6517
        %v6519 = vlaneseq
        %v6520 = vshrl.u32 %v6519, 7
        %v6521 = vsub.s32 %v6518, %v6520
        %v6522 = vrot.slane %v6514, %v6521
        %v6524 = vunpack.c.l.s4 1934713408
        %v6525 = vunpack.c.0.s8 %v6524
        %v6526 = vlaneseq
        %v6527 = vshrl.u32 %v6526, 7
        %v6528 = vsub.s32 %v6525, %v6527
        %v6529 = vrot.slane %v6515, %v6528
        %v6530 = vcombine.low %v6497, %v6513
        %v6531 = vcombine.high %v6497, %v6513
        %v6533 = vunpack.c.l.s4 1934713408
        %v6534 = vunpack.c.0.s8 %v6533
        %v6535 = vlaneseq
        %v6536 = vshrl.u32 %v6535, 7
        %v6537 = vsub.s32 %v6534, %v6536
        %v6538 = vrot.slane %v6530, %v6537
        %v6540 = vunpack.c.l.s4 1934713408
        %v6541 = vunpack.c.0.s8 %v6540
        %v6542 = vlaneseq
        %v6543 = vshrl.u32 %v6542, 7
        %v6544 = vsub.s32 %v6541, %v6543
        %v6545 = vrot.slane %v6531, %v6544
        %v6546 = vcombine.high %v6522, 0.0
        %v6547 = vcombine.high %v6529, 0.0
        %v6548 = vcombine.high %v6538, 0.0
        %v6549 = vcombine.high %v6545, 0.0
        %v6550 = vcombine.low %v221, %v225
        %v6551 = vcombine.high %v221, %v225
        %v6553 = vunpack.c.l.s4 1983009808
        %v6554 = vunpack.c.0.s8 %v6553
        %v6555 = vlaneseq
        %v6556 = vshrl.u32 %v6555, 7
        %v6557 = vsub.s32 %v6554, %v6556
        %v6558 = vrot.slane %v6550, %v6557
        %v6560 = vunpack.c.l.s4 1983009808
        %v6561 = vunpack.c.0.s8 %v6560
        %v6562 = vlaneseq
        %v6563 = vshrl.u32 %v6562, 7
        %v6564 = vsub.s32 %v6561, %v6563
        %v6565 = vrot.slane %v6551, %v6564
        %v6566 = vcombine.low %v223, %v227
        %v6567 = vcombine.high %v223, %v227
        %v6569 = vunpack.c.l.s4 1983009808
        %v6570 = vunpack.c.0.s8 %v6569
        %v6571 = vlaneseq
        %v6572 = vshrl.u32 %v6571, 7
        %v6573 = vsub.s32 %v6570, %v6572
        %v6574 = vrot.slane %v6566, %v6573
        %v6576 = vunpack.c.l.s4 1983009808
        %v6577 = vunpack.c.0.s8 %v6576
        %v6578 = vlaneseq
        %v6579 = vshrl.u32 %v6578, 7
        %v6580 = vsub.s32 %v6577, %v6579
        %v6581 = vrot.slane %v6567, %v6580
        %v6582 = vcombine.low %v6558, %v6574
        %v6583 = vcombine.high %v6558, %v6574
        %v6585 = vunpack.c.l.s4 1934713408
        %v6586 = vunpack.c.0.s8 %v6585
        %v6587 = vlaneseq
        %v6588 = vshrl.u32 %v6587, 7
        %v6589 = vsub.s32 %v6586, %v6588
        %v6590 = vrot.slane %v6582, %v6589
        %v6592 = vunpack.c.l.s4 1934713408
        %v6593 = vunpack.c.0.s8 %v6592
        %v6594 = vlaneseq
        %v6595 = vshrl.u32 %v6594, 7
        %v6596 = vsub.s32 %v6593, %v6595
        %v6597 = vrot.slane %v6583, %v6596
        %v6598 = vcombine.low %v6565, %v6581
        %v6599 = vcombine.high %v6565, %v6581
        %v6601 = vunpack.c.l.s4 1934713408
        %v6602 = vunpack.c.0.s8 %v6601
        %v6603 = vlaneseq
        %v6604 = vshrl.u32 %v6603, 7
        %v6605 = vsub.s32 %v6602, %v6604
        %v6606 = vrot.slane %v6598, %v6605
        %v6608 = vunpack.c.l.s4 1934713408
        %v6609 = vunpack.c.0.s8 %v6608
        %v6610 = vlaneseq
        %v6611 = vshrl.u32 %v6610, 7
        %v6612 = vsub.s32 %v6609, %v6611
        %v6613 = vrot.slane %v6599, %v6612
        %v6614 = vcombine.high %v6590, 0.0
        %v6615 = vcombine.high %v6597, 0.0
        %v6616 = vcombine.high %v6606, 0.0
        %v6617 = vcombine.high %v6613, 0.0
        %6619 = vrot.lane.b32.xlu0 %v6546, 16
        %v6620 = vpop.permute.xlu0 %6619
        %6623 = vrot.lane.b32.xlu0 %v6529, 32
        %v6624 = vpop.permute.xlu0 %6623
        %6627 = vrot.lane.b32.xlu0 %v6547, 48
        %v6628 = vpop.permute.xlu0 %6627
        %6631 = vrot.lane.b32.xlu0 %v6538, 64
        %v6632 = vpop.permute.xlu0 %6631
        %6635 = vrot.lane.b32.xlu0 %v6548, 80
        %v6636 = vpop.permute.xlu0 %6635
        %6639 = vrot.lane.b32.xlu0 %v6545, 96
        %v6640 = vpop.permute.xlu0 %6639
        %6643 = vrot.lane.b32.xlu0 %v6549, 112
        %v6644 = vpop.permute.xlu0 %6643
        %6647 = vrot.lane.b32.xlu0 %v6614, 16
        %v6648 = vpop.permute.xlu0 %6647
        %6651 = vrot.lane.b32.xlu0 %v6597, 32
        %v6652 = vpop.permute.xlu0 %6651
        %6655 = vrot.lane.b32.xlu0 %v6615, 48
        %v6656 = vpop.permute.xlu0 %6655
        %6659 = vrot.lane.b32.xlu0 %v6606, 64
        %v6660 = vpop.permute.xlu0 %6659
        %6663 = vrot.lane.b32.xlu0 %v6616, 80
        %v6664 = vpop.permute.xlu0 %6663
        %6667 = vrot.lane.b32.xlu0 %v6613, 96
        %v6668 = vpop.permute.xlu0 %6667
        %6671 = vrot.lane.b32.xlu0 %v6617, 112
        %v6672 = vpop.permute.xlu0 %6671
        %v6674 = vsel %vm615, %v6522, %v6620
        %v6675 = vsel %vm617, %v6674, %v6624
        %v6676 = vsel %vm619, %v6675, %v6628
        %v6677 = vsel %vm621, %v6676, %v6632
        %v6678 = vsel %vm623, %v6677, %v6636
        %v6679 = vsel %vm625, %v6678, %v6640
        %v6680 = vsel %vm627, %v6679, %v6644
        %v6681 = vsel %vm615, %v6590, %v6648
        %v6682 = vsel %vm617, %v6681, %v6652
        %v6683 = vsel %vm619, %v6682, %v6656
        %v6684 = vsel %vm621, %v6683, %v6660
        %v6685 = vsel %vm623, %v6684, %v6664
        %v6686 = vsel %vm625, %v6685, %v6668
        %v6687 = vsel %vm627, %v6686, %v6672
        %v6688 = vadd.f32 %v6680, %v6480
        %v6689 = vadd.f32 %v6687, %v6481
        %v6692 = vcombine.low %v6688, %v6689
        %6694 = vst [vmem:[%s219] sm:$0xff] %v6692
        %p6695 = scmp.lt.s32.totalorder %s18, 1
        %s6696 = scalar_select %p6695, %s18, 1
        %s6697 = smul.addr %s6696, 2
        %s6698 = smul.addr %s6697, 4
        %s6699 = scalar_lea.vmem %s3, %s6698
        // Predicated region
        $region45: #{resnet_block.1} parent=31 // pred_check
          %p6700 = pneg %p104
        $region46: #{resnet_block.1} parent=31 // pred_check_branch
          %6702 = sbr.rel (%p6700) target = $region48
        $region47: #{resnet_block.1} parent=31 // pred_region
          _
        $region48: #{resnet_block.1} parent=31 // pred_fallthru
          _
      $region32: #{resnet_block.1} parent=5 // pred_fallthru
        _
      %p6703 = scmp.le.s32.totalorder 2, %s13
      // Predicated region
      $region49: #{resnet_block.1} parent=5 // pred_check
        %p6704 = pneg %p6703
      $region50: #{resnet_block.1} parent=5 // pred_check_branch
        %6706 = sbr.rel (%p6704) target = $region52
      $region51: #{resnet_block.1} parent=5 // pred_region
        %s6707 = ssub.s32 %s13, 2
        // Predicated region
        $region53: #{resnet_block.1} parent=51 // pred_check
          %p6708 = pneg %p110
        $region54: #{resnet_block.1} parent=51 // pred_check_branch
          %6710 = sbr.rel (%p6708) target = $region56
        $region55: #{resnet_block.1} parent=51 // pred_region
          %p6711 = scmp.lt.s32.totalorder %s19, 1
          %s6712 = scalar_select %p6711, %s19, 1
          %s6713 = smul.addr %s6712, 2
          %s6714 = smul.addr %s6713, 4
          %s6715 = scalar_lea.vmem %s3, %s6714
        $region56: #{resnet_block.1} parent=51 // pred_fallthru
          _
      $region52: #{resnet_block.1} parent=5 // pred_fallthru
        _
    $region6: #{resnet_block.1} parent=1 // loop_footer
      %s17 = sadd.s32 1, %s13
    $region7: #{resnet_block.1} parent=1 // loop_footer_branch
      %12 = sbr.rel target = $region3
    $region8: #{resnet_block.1} parent=1 // loop_exit
      _
    %6716 = vsyncpa [#allocation3], 1
    %s6717 = scalar_lea.sflag [#allocation3], 1
    %6718 = vsyncpa %s6717, 1
    %6719 = vsyncpa [#allocation5], 1

</llo_original>
